<compile_context>
chip_gen: v6e
topology: v6e:2x2x1
jax: 0.10.0
libtpu: 0.0.40
codegen_flags: <defaults>
</compile_context>

<pallas_src>
import math
from dataclasses import dataclass

import numpy as np
import jax
import jax.numpy as jnp
from jax import lax
from jax.experimental import pallas as pl
from jax.experimental.pallas import tpu as pltpu


# ----------------------------------------------------------------------------
# Config (small, consistent with the module's __init__)
# ----------------------------------------------------------------------------
@dataclass(frozen=True)
class Config:
    n_channels: int = 4      # enc_in == c_out
    seq_len: int = 16
    pred_len: int = 8        # forecast_horizon
    d_model: int = 64        # GPT2Config.n_embd (768 at full scale)
    d_ff: int = 32
    n_heads: int = 4
    gpt_layers: int = 2


# ----------------------------------------------------------------------------
# Fused forward kernel (one grid step == one batch element)
# ----------------------------------------------------------------------------
def _make_kernel(cfg: Config):
    C, L, P = cfg.n_channels, cfg.seq_len, cfg.pred_len
    D, H, NL, DFF = cfg.d_model, cfg.n_heads, cfg.gpt_layers, cfg.d_ff
    T = L + P
    Dh = D // H
    scale = 1.0 / math.sqrt(Dh)

    def _ln(x, g, b):
        # LayerNorm over the feature (lane) axis, eps=1e-5 (GPT-2 default).
        mu = jnp.mean(x, axis=-1, keepdims=True)
        var = jnp.mean(jnp.square(x - mu), axis=-1, keepdims=True)
        return (x - mu) * lax.rsqrt(var + 1e-5) * g + b

    def kernel(x_ref, a_ref, tokw_ref, embc_ref,
               ln1g_ref, ln1b_ref, wqkv_ref, bqkv_ref, wproj_ref, bproj_ref,
               ln2g_ref, ln2b_ref, wfc_ref, bfc_ref, wfc2_ref, bfc2_ref,
               lnfg_ref, lnfb_ref, outw_ref, outb_ref,
               dec_ref, xn_ref):
        f32 = jnp.float32

        # ---- RevIN: mean/std over the time axis (unbiased=False) ----
        x = x_ref[0]                                        # [L, C]
        mu = jnp.mean(x, axis=0, keepdims=True)             # [1, C]
        var = jnp.mean(jnp.square(x - mu), axis=0, keepdims=True)
        std = jnp.sqrt(var + 1e-5)
        xn = (x - mu) / std                                 # [L, C]
        xn_ref[0] = xn.astype(xn_ref.dtype)

        # ---- fused TokenEmbedding(conv1d k=3, circular, no bias) + sinusoidal
        #      PE + predict_linear(L -> T) + GPT-2 wpe:
        #      h = sum_k A_k @ xn @ W_k + emb_const          (A_k, emb_const are
        #      precomputed weight-only constants; see wrapper) ----
        A = a_ref[...]                                      # [3, T, L]
        Wk = tokw_ref[...]                                  # [3, C, D]
        h = embc_ref[...]                                   # [T, D]
        for k in range(3):
            z = jnp.dot(A[k], xn, preferred_element_type=f32)      # [T, C]
            h = h + jnp.dot(z, Wk[k], preferred_element_type=f32)  # [T, D]

        # ---- additive causal mask (f32-safe constant; diagonal never masked) ----
        rows = lax.broadcasted_iota(jnp.int32, (T, T), 0)
        cols = lax.broadcasted_iota(jnp.int32, (T, T), 1)
        mask_add = jnp.where(cols <= rows, 0.0, -1e30).astype(f32)

        # ---- GPT-2 blocks (ln1 -> causal MHA -> +res -> ln2 -> MLP -> +res) ----
        for l in range(NL):
            a1 = _ln(h, ln1g_ref[l], ln1b_ref[l])                                # [T, D]
            qkv = jnp.dot(a1, wqkv_ref[l], preferred_element_type=f32) + bqkv_ref[l]  # [T, 3D]
            wproj = wproj_ref[l]                                                 # [D, D]
            attn = None
            for hh in range(H):
                q = qkv[:, hh * Dh:(hh + 1) * Dh]                                # [T, Dh]
                kk = qkv[:, D + hh * Dh: D + (hh + 1) * Dh]
                v = qkv[:, 2 * D + hh * Dh: 2 * D + (hh + 1) * Dh]
                s = lax.dot_general(q, kk, (((1,), (1,)), ((), ())),
                                    preferred_element_type=f32) * scale + mask_add   # [T, T]
                m = jnp.max(s, axis=-1, keepdims=True)
                p = jnp.exp(s - m)
                p = p * pl.reciprocal(jnp.sum(p, axis=-1, keepdims=True), approx=True)
                o = jnp.dot(p, v, preferred_element_type=f32)                    # [T, Dh]
                # merge-heads + c_proj, decomposed per head (no concat needed)
                c = jnp.dot(o, wproj[hh * Dh:(hh + 1) * Dh, :],
                            preferred_element_type=f32)                          # [T, D]
                attn = c if attn is None else attn + c
            h = h + attn + bproj_ref[l]

            a2 = _ln(h, ln2g_ref[l], ln2b_ref[l])
            ff = jnp.dot(a2, wfc_ref[l], preferred_element_type=f32) + bfc_ref[l]    # [T, 4D]
            ff = jax.nn.gelu(ff, approximate=True)            # GPT-2 "gelu_new"
            h = h + jnp.dot(ff, wfc2_ref[l], preferred_element_type=f32) + bfc2_ref[l]

        # ---- ln_f + out_layer on first d_ff features + RevIN de-normalization ----
        hf = _ln(h, lnfg_ref[...], lnfb_ref[...])                                # [T, D]
        dec = jnp.dot(hf[:, :DFF], outw_ref[...],
                      preferred_element_type=f32) + outb_ref[...]                # [T, C]
        dec_ref[0] = (dec * std + mu).astype(dec_ref.dtype)

    return kernel


# ----------------------------------------------------------------------------
# Deterministic parameter initialization (synthetic; no checkpoint load)
# ----------------------------------------------------------------------------
def _sinusoidal_pe(max_len, d_model):
    pe = np.zeros((max_len, d_model), dtype=np.float32)
    position = np.arange(max_len, dtype=np.float32)[:, None]
    div = np.exp(np.arange(0, d_model, 2, dtype=np.float32)
                 * -(math.log(10000.0) / d_model))
    pe[:, 0::2] = np.sin(position * div)
    pe[:, 1::2] = np.cos(position * div)
    return jnp.asarray(pe)


def init_params(key, cfg: Config):
    D, C, L, P, NL = cfg.d_model, cfg.n_channels, cfg.seq_len, cfg.pred_len, cfg.gpt_layers
    T = L + P

    def nrm(k, shape, s=0.02):
        return jax.random.normal(k, shape, jnp.float32) * s

    keys = iter(jax.random.split(key, 16))
    p = {}
    # DataEmbedding: TokenEmbedding conv1d(C -> D, k=3, circular, bias=False) as [3C, D]
    # (rows ordered [W_{t-1}; W_t; W_{t+1}]) plus fixed sinusoidal PE.
    p["tok_w"] = nrm(next(keys), (3 * C, D))
    p["pos_pe"] = _sinusoidal_pe(1024, D)
    # predict_linear: Linear(seq_len -> seq_len + pred_len)
    p["pred_w"] = nrm(next(keys), (L, T))
    p["pred_b"] = jnp.zeros((T,), jnp.float32)
    # GPT-2 learned positional embedding
    p["wpe"] = nrm(next(keys), (128, D))
    # GPT-2 blocks (stacked over layers)
    p["ln1_g"] = jnp.ones((NL, D), jnp.float32)
    p["ln1_b"] = jnp.zeros((NL, D), jnp.float32)
    p["w_qkv"] = nrm(next(keys), (NL, D, 3 * D))
    p["b_qkv"] = jnp.zeros((NL, 3 * D), jnp.float32)
    p["w_proj"] = nrm(next(keys), (NL, D, D))
    p["b_proj"] = jnp.zeros((NL, D), jnp.float32)
    p["ln2_g"] = jnp.ones((NL, D), jnp.float32)
    p["ln2_b"] = jnp.zeros((NL, D), jnp.float32)
    p["w_fc"] = nrm(next(keys), (NL, D, 4 * D))
    p["b_fc"] = jnp.zeros((NL, 4 * D), jnp.float32)
    p["w_fc2"] = nrm(next(keys), (NL, 4 * D, D))
    p["b_fc2"] = jnp.zeros((NL, D), jnp.float32)
    p["lnf_g"] = jnp.ones((D,), jnp.float32)
    p["lnf_b"] = jnp.zeros((D,), jnp.float32)
    # out_layer: Linear(d_ff -> c_out)
    p["out_w"] = nrm(next(keys), (cfg.d_ff, C))
    p["out_b"] = jnp.zeros((C,), jnp.float32)
    return p


# ----------------------------------------------------------------------------
# Forward (forecast path of GPT4TS) — one fused pallas_call
# ----------------------------------------------------------------------------
def gpt4ts_forecast(params, x_enc, cfg: Config):
    B, C, L = x_enc.shape
    D, P = cfg.d_model, cfg.pred_len
    T = L + P
    f32 = jnp.float32

    # --- parameter-only preprocessing (tiny, weights only; folds the circular
    #     conv time-shifts and the PE / bias / wpe additions into constants) ---
    pred_w, pred_b = params["pred_w"], params["pred_b"]          # [L, T], [T]
    pe_L = params["pos_pe"][:L]                                  # [L, D]
    wpe_T = params["wpe"][:T]                                    # [T, D]
    A_all = jnp.stack([jnp.roll(pred_w, -1, axis=0).T,           # pairs with W0 (x_{t-1})
                       pred_w.T,                                 # W1 (x_t)
                       jnp.roll(pred_w, 1, axis=0).T]).astype(f32)   # W2 (x_{t+1}) -> [3, T, L]
    emb_const = (jnp.dot(pred_w.T, pe_L) + pred_b[:, None] + wpe_T).astype(f32)  # [T, D]
    tok_w3 = params["tok_w"].reshape(3, C, D)                    # [W0; W1; W2]

    def v2(a):      # [NL, N] -> [NL, 1, N] so per-layer reads stay 2-D in-kernel
        return a[:, None, :]

    # enc_embedding feature-padding to n_embd is a no-op here (d_model == n_embd).
    x_in = jnp.transpose(x_enc, (0, 2, 1)).astype(f32)           # [B, L, C]

    args = [
        x_in, A_all, tok_w3, emb_const,
        v2(params["ln1_g"]), v2(params["ln1_b"]),
        params["w_qkv"], v2(params["b_qkv"]),
        params["w_proj"], v2(params["b_proj"]),
        v2(params["ln2_g"]), v2(params["ln2_b"]),
        params["w_fc"], v2(params["b_fc"]),
        params["w_fc2"], v2(params["b_fc2"]),
        params["lnf_g"][None, :], params["lnf_b"][None, :],
        params["out_w"], params["out_b"][None, :],
    ]

    def batch_spec(shape):
        nd = len(shape)
        return pl.BlockSpec((1,) + tuple(shape[1:]),
                            lambda b, _nd=nd: (b,) + (0,) * (_nd - 1))

    def whole_spec(shape):
        nd = len(shape)
        return pl.BlockSpec(tuple(shape), lambda b, _nd=nd: (0,) * _nd)

    in_specs = [batch_spec(x_in.shape)] + [whole_spec(a.shape) for a in args[1:]]
    out_specs = (
        pl.BlockSpec((1, T, C), lambda b: (b, 0, 0)),   # dec   [B, T, C]
        pl.BlockSpec((1, L, C), lambda b: (b, 0, 0)),   # xn    [B, L, C]
    )
    out_shape = (
        jax.ShapeDtypeStruct((B, T, C), f32),
        jax.ShapeDtypeStruct((B, L, C), f32),
    )

    dec, xn = pl.pallas_call(
        _make_kernel(cfg),
        out_shape=out_shape,
        grid=(B,),
        in_specs=in_specs,
        out_specs=out_specs,
        compiler_params=pltpu.CompilerParams(
            dimension_semantics=("parallel",),   # batch elems -> TCs (v7x megacore)
        ),
    )(*args)

    dec = jnp.transpose(dec, (0, 2, 1))                 # [B, C, T]
    xn = jnp.transpose(xn, (0, 2, 1))                   # [B, C, L]
    return {
        "backcast": dec[:, :, :L],
        "forecast": dec[:, :, L:],
        "timeseries": xn,
    }


# ----------------------------------------------------------------------------
if __name__ == "__main__":
    cfg = Config()
    key = jax.random.PRNGKey(0)
    k_param, k_data = jax.random.split(key)
    params = init_params(k_param, cfg)
    x_enc = jax.random.normal(k_data, (2, cfg.n_channels, cfg.seq_len), jnp.float32)

    fwd = jax.jit(lambda p, x: gpt4ts_forecast(p, x, cfg))
    out = fwd(params, x_enc)
    jax.block_until_ready(out)

    assert out["forecast"].shape == (2, cfg.n_channels, cfg.pred_len)
    assert out["backcast"].shape == (2, cfg.n_channels, cfg.seq_len)
    assert out["timeseries"].shape == (2, cfg.n_channels, cfg.seq_len)
    assert bool(jnp.all(jnp.isfinite(out["forecast"])))
    assert bool(jnp.all(jnp.isfinite(out["backcast"])))
    print("KERNEL_OK")
</pallas_src>

<mosaic_0001>
module attributes {stable_mosaic.version = 11 : i64} {
  func.func @kernel(%arg0: i32, %arg1: memref<1x16x4xf32, #tpu.memory_space<vmem>>, %arg2: memref<3x24x16xf32, #tpu.memory_space<vmem>>, %arg3: memref<3x4x64xf32, #tpu.memory_space<vmem>>, %arg4: memref<24x64xf32, #tpu.memory_space<vmem>>, %arg5: memref<2x1x64xf32, #tpu.memory_space<vmem>>, %arg6: memref<2x1x64xf32, #tpu.memory_space<vmem>>, %arg7: memref<2x64x192xf32, #tpu.memory_space<vmem>>, %arg8: memref<2x1x192xf32, #tpu.memory_space<vmem>>, %arg9: memref<2x64x64xf32, #tpu.memory_space<vmem>>, %arg10: memref<2x1x64xf32, #tpu.memory_space<vmem>>, %arg11: memref<2x1x64xf32, #tpu.memory_space<vmem>>, %arg12: memref<2x1x64xf32, #tpu.memory_space<vmem>>, %arg13: memref<2x64x256xf32, #tpu.memory_space<vmem>>, %arg14: memref<2x1x256xf32, #tpu.memory_space<vmem>>, %arg15: memref<2x256x64xf32, #tpu.memory_space<vmem>>, %arg16: memref<2x1x64xf32, #tpu.memory_space<vmem>>, %arg17: memref<1x64xf32, #tpu.memory_space<vmem>>, %arg18: memref<1x64xf32, #tpu.memory_space<vmem>>, %arg19: memref<32x4xf32, #tpu.memory_space<vmem>>, %arg20: memref<1x4xf32, #tpu.memory_space<vmem>>, %arg21: memref<1x24x4xf32, #tpu.memory_space<vmem>>, %arg22: memref<1x16x4xf32, #tpu.memory_space<vmem>>) attributes {dimension_semantics = [#tpu.dimension_semantics<parallel>], iteration_bounds = array<i64: 2>, scalar_prefetch = 0 : i64, scratch_operands = 0 : i64, tpu.core_type = #tpu.core_type<tc>, window_params = [{transform_indices = @transform_0, window_bounds = array<i64: 1, 16, 4>}, {pipeline_mode = #tpu.pipeline_mode<synchronous>, transform_indices = @transform_1, window_bounds = array<i64: 3, 24, 16>}, {pipeline_mode = #tpu.pipeline_mode<synchronous>, transform_indices = @transform_2, window_bounds = array<i64: 3, 4, 64>}, {pipeline_mode = #tpu.pipeline_mode<synchronous>, transform_indices = @transform_3, window_bounds = array<i64: 24, 64>}, {pipeline_mode = #tpu.pipeline_mode<synchronous>, transform_indices = @transform_4, window_bounds = array<i64: 2, 1, 64>}, {pipeline_mode = #tpu.pipeline_mode<synchronous>, transform_indices = @transform_5, window_bounds = array<i64: 2, 1, 64>}, {pipeline_mode = #tpu.pipeline_mode<synchronous>, transform_indices = @transform_6, window_bounds = array<i64: 2, 64, 192>}, {pipeline_mode = #tpu.pipeline_mode<synchronous>, transform_indices = @transform_7, window_bounds = array<i64: 2, 1, 192>}, {pipeline_mode = #tpu.pipeline_mode<synchronous>, transform_indices = @transform_8, window_bounds = array<i64: 2, 64, 64>}, {pipeline_mode = #tpu.pipeline_mode<synchronous>, transform_indices = @transform_9, window_bounds = array<i64: 2, 1, 64>}, {pipeline_mode = #tpu.pipeline_mode<synchronous>, transform_indices = @transform_10, window_bounds = array<i64: 2, 1, 64>}, {pipeline_mode = #tpu.pipeline_mode<synchronous>, transform_indices = @transform_11, window_bounds = array<i64: 2, 1, 64>}, {pipeline_mode = #tpu.pipeline_mode<synchronous>, transform_indices = @transform_12, window_bounds = array<i64: 2, 64, 256>}, {pipeline_mode = #tpu.pipeline_mode<synchronous>, transform_indices = @transform_13, window_bounds = array<i64: 2, 1, 256>}, {pipeline_mode = #tpu.pipeline_mode<synchronous>, transform_indices = @transform_14, window_bounds = array<i64: 2, 256, 64>}, {pipeline_mode = #tpu.pipeline_mode<synchronous>, transform_indices = @transform_15, window_bounds = array<i64: 2, 1, 64>}, {pipeline_mode = #tpu.pipeline_mode<synchronous>, transform_indices = @transform_16, window_bounds = array<i64: 1, 64>}, {pipeline_mode = #tpu.pipeline_mode<synchronous>, transform_indices = @transform_17, window_bounds = array<i64: 1, 64>}, {pipeline_mode = #tpu.pipeline_mode<synchronous>, transform_indices = @transform_18, window_bounds = array<i64: 32, 4>}, {pipeline_mode = #tpu.pipeline_mode<synchronous>, transform_indices = @transform_19, window_bounds = array<i64: 1, 4>}, {transform_indices = @transform_20, window_bounds = array<i64: 1, 24, 4>}, {transform_indices = @transform_21, window_bounds = array<i64: 1, 16, 4>}]} {
    %c0 = arith.constant 0 : index
    %c0_0 = arith.constant 0 : index
    %c0_1 = arith.constant 0 : index
    %0 = vector.load %arg1[%c0, %c0_0, %c0_1] : memref<1x16x4xf32, #tpu.memory_space<vmem>>, vector<1x16x4xf32>
    %1 = vector.shape_cast %0 : vector<1x16x4xf32> to vector<16x4xf32>
    %cst = arith.constant dense<0.000000e+00> : vector<4xf32>
    %2 = vector.multi_reduction <add>, %1, %cst [0] : vector<16x4xf32> to vector<4xf32>
    %3 = vector.shape_cast %2 : vector<4xf32> to vector<1x4xf32>
    %cst_2 = arith.constant 1.600000e+01 : f32
    %4 = vector.broadcast %cst_2 : f32 to vector<1x4xf32>
    %5 = arith.divf %3, %4 : vector<1x4xf32>
    %6 = vector.broadcast %5 : vector<1x4xf32> to vector<16x4xf32>
    %7 = arith.subf %1, %6 : vector<16x4xf32>
    %8 = arith.mulf %7, %7 : vector<16x4xf32>
    %cst_3 = arith.constant dense<0.000000e+00> : vector<4xf32>
    %9 = vector.multi_reduction <add>, %8, %cst_3 [0] : vector<16x4xf32> to vector<4xf32>
    %10 = vector.shape_cast %9 : vector<4xf32> to vector<1x4xf32>
    %cst_4 = arith.constant 1.600000e+01 : f32
    %11 = vector.broadcast %cst_4 : f32 to vector<1x4xf32>
    %12 = arith.divf %10, %11 : vector<1x4xf32>
    %cst_5 = arith.constant 9.99999974E-6 : f32
    %13 = vector.broadcast %cst_5 : f32 to vector<1x4xf32>
    %14 = arith.addf %12, %13 : vector<1x4xf32>
    %15 = math.sqrt %14 : vector<1x4xf32>
    %16 = vector.broadcast %5 : vector<1x4xf32> to vector<16x4xf32>
    %17 = arith.subf %1, %16 : vector<16x4xf32>
    %18 = vector.broadcast %15 : vector<1x4xf32> to vector<16x4xf32>
    %19 = arith.divf %17, %18 : vector<16x4xf32>
    %c0_6 = arith.constant 0 : index
    %c0_7 = arith.constant 0 : index
    %c0_8 = arith.constant 0 : index
    %20 = vector.load %arg22[%c0_6, %c0_7, %c0_8] : memref<1x16x4xf32, #tpu.memory_space<vmem>>, vector<1x16x4xf32>
    %21 = vector.shape_cast %20 : vector<1x16x4xf32> to vector<16x4xf32>
    %22 = vector.shape_cast %19 : vector<16x4xf32> to vector<1x16x4xf32>
    tpu.vector_store %arg22[%c0_6, %c0_7, %c0_8], %22 {strides = array<i32>} : memref<1x16x4xf32, #tpu.memory_space<vmem>>, vector<1x16x4xf32>,
    %c0_9 = arith.constant 0 : index
    %c0_10 = arith.constant 0 : index
    %c0_11 = arith.constant 0 : index
    %23 = vector.load %arg2[%c0_9, %c0_10, %c0_11] : memref<3x24x16xf32, #tpu.memory_space<vmem>>, vector<3x24x16xf32>
    %c0_12 = arith.constant 0 : index
    %c0_13 = arith.constant 0 : index
    %c0_14 = arith.constant 0 : index
    %24 = vector.load %arg3[%c0_12, %c0_13, %c0_14] : memref<3x4x64xf32, #tpu.memory_space<vmem>>, vector<3x4x64xf32>
    %c0_15 = arith.constant 0 : index
    %c0_16 = arith.constant 0 : index
    %25 = vector.load %arg4[%c0_15, %c0_16] : memref<24x64xf32, #tpu.memory_space<vmem>>, vector<24x64xf32>
    %26 = vector.extract_strided_slice %23 {offsets = [0, 0, 0], sizes = [1, 24, 16], strides = [1, 1, 1]} : vector<3x24x16xf32> to vector<1x24x16xf32>
    %27 = vector.shape_cast %26 : vector<1x24x16xf32> to vector<24x16xf32>
    %cst_17 = arith.constant dense<0.000000e+00> : vector<24x4xf32>
    %28 = tpu.matmul %27, %19, %cst_17 {dimension_numbers = #tpu.dot_dimension_numbers<[1], [0], [0], [1], [0, 0, 1, 1], [], []>} : vector<24x16xf32>, vector<16x4xf32>, vector<24x4xf32> -> vector<24x4xf32>
    %29 = vector.extract_strided_slice %24 {offsets = [0, 0, 0], sizes = [1, 4, 64], strides = [1, 1, 1]} : vector<3x4x64xf32> to vector<1x4x64xf32>
    %30 = vector.shape_cast %29 : vector<1x4x64xf32> to vector<4x64xf32>
    %cst_18 = arith.constant dense<0.000000e+00> : vector<24x64xf32>
    %31 = tpu.matmul %28, %30, %cst_18 {dimension_numbers = #tpu.dot_dimension_numbers<[1], [0], [0], [1], [0, 0, 1, 1], [], []>} : vector<24x4xf32>, vector<4x64xf32>, vector<24x64xf32> -> vector<24x64xf32>
    %32 = arith.addf %25, %31 : vector<24x64xf32>
    %33 = vector.extract_strided_slice %23 {offsets = [1, 0, 0], sizes = [1, 24, 16], strides = [1, 1, 1]} : vector<3x24x16xf32> to vector<1x24x16xf32>
    %34 = vector.shape_cast %33 : vector<1x24x16xf32> to vector<24x16xf32>
    %cst_19 = arith.constant dense<0.000000e+00> : vector<24x4xf32>
    %35 = tpu.matmul %34, %19, %cst_19 {dimension_numbers = #tpu.dot_dimension_numbers<[1], [0], [0], [1], [0, 0, 1, 1], [], []>} : vector<24x16xf32>, vector<16x4xf32>, vector<24x4xf32> -> vector<24x4xf32>
    %36 = vector.extract_strided_slice %24 {offsets = [1, 0, 0], sizes = [1, 4, 64], strides = [1, 1, 1]} : vector<3x4x64xf32> to vector<1x4x64xf32>
    %37 = vector.shape_cast %36 : vector<1x4x64xf32> to vector<4x64xf32>
    %cst_20 = arith.constant dense<0.000000e+00> : vector<24x64xf32>
    %38 = tpu.matmul %35, %37, %cst_20 {dimension_numbers = #tpu.dot_dimension_numbers<[1], [0], [0], [1], [0, 0, 1, 1], [], []>} : vector<24x4xf32>, vector<4x64xf32>, vector<24x64xf32> -> vector<24x64xf32>
    %39 = arith.addf %32, %38 : vector<24x64xf32>
    %40 = vector.extract_strided_slice %23 {offsets = [2, 0, 0], sizes = [1, 24, 16], strides = [1, 1, 1]} : vector<3x24x16xf32> to vector<1x24x16xf32>
    %41 = vector.shape_cast %40 : vector<1x24x16xf32> to vector<24x16xf32>
    %cst_21 = arith.constant dense<0.000000e+00> : vector<24x4xf32>
    %42 = tpu.matmul %41, %19, %cst_21 {dimension_numbers = #tpu.dot_dimension_numbers<[1], [0], [0], [1], [0, 0, 1, 1], [], []>} : vector<24x16xf32>, vector<16x4xf32>, vector<24x4xf32> -> vector<24x4xf32>
    %43 = vector.extract_strided_slice %24 {offsets = [2, 0, 0], sizes = [1, 4, 64], strides = [1, 1, 1]} : vector<3x4x64xf32> to vector<1x4x64xf32>
    %44 = vector.shape_cast %43 : vector<1x4x64xf32> to vector<4x64xf32>
    %cst_22 = arith.constant dense<0.000000e+00> : vector<24x64xf32>
    %45 = tpu.matmul %42, %44, %cst_22 {dimension_numbers = #tpu.dot_dimension_numbers<[1], [0], [0], [1], [0, 0, 1, 1], [], []>} : vector<24x4xf32>, vector<4x64xf32>, vector<24x64xf32> -> vector<24x64xf32>
    %46 = arith.addf %39, %45 : vector<24x64xf32>
    %47 = tpu.iota {dimensions = array<i32: 0>} : vector<24x24xi32>
    %48 = tpu.iota {dimensions = array<i32: 1>} : vector<24x24xi32>
    %49 = arith.cmpi sle, %48, %47 : vector<24x24xi32>
    %cst_23 = arith.constant 0.000000e+00 : f32
    %cst_24 = arith.constant -1.000000e+30 : f32
    %50 = vector.broadcast %cst_23 : f32 to vector<24x24xf32>
    %51 = vector.broadcast %cst_24 : f32 to vector<24x24xf32>
    %52 = arith.select %49, %50, %51 : vector<24x24xi1>, vector<24x24xf32>
    %c0_25 = arith.constant 0 : index
    %c0_26 = arith.constant 0 : index
    %c0_27 = arith.constant 0 : index
    %53 = vector.load %arg5[%c0_25, %c0_26, %c0_27] : memref<2x1x64xf32, #tpu.memory_space<vmem>>, vector<1x1x64xf32>
    %54 = vector.shape_cast %53 : vector<1x1x64xf32> to vector<1x64xf32>
    %c0_28 = arith.constant 0 : index
    %c0_29 = arith.constant 0 : index
    %c0_30 = arith.constant 0 : index
    %55 = vector.load %arg6[%c0_28, %c0_29, %c0_30] : memref<2x1x64xf32, #tpu.memory_space<vmem>>, vector<1x1x64xf32>
    %56 = vector.shape_cast %55 : vector<1x1x64xf32> to vector<1x64xf32>
    %cst_31 = arith.constant dense<0.000000e+00> : vector<24xf32>
    %57 = vector.multi_reduction <add>, %46, %cst_31 [1] : vector<24x64xf32> to vector<24xf32>
    %58 = vector.shape_cast %57 : vector<24xf32> to vector<24x1xf32>
    %cst_32 = arith.constant 6.400000e+01 : f32
    %59 = vector.broadcast %cst_32 : f32 to vector<24x1xf32>
    %60 = arith.divf %58, %59 : vector<24x1xf32>
    %61 = vector.broadcast %60 : vector<24x1xf32> to vector<24x64xf32>
    %62 = arith.subf %46, %61 : vector<24x64xf32>
    %63 = arith.mulf %62, %62 : vector<24x64xf32>
    %cst_33 = arith.constant dense<0.000000e+00> : vector<24xf32>
    %64 = vector.multi_reduction <add>, %63, %cst_33 [1] : vector<24x64xf32> to vector<24xf32>
    %65 = vector.shape_cast %64 : vector<24xf32> to vector<24x1xf32>
    %cst_34 = arith.constant 6.400000e+01 : f32
    %66 = vector.broadcast %cst_34 : f32 to vector<24x1xf32>
    %67 = arith.divf %65, %66 : vector<24x1xf32>
    %68 = vector.broadcast %60 : vector<24x1xf32> to vector<24x64xf32>
    %69 = arith.subf %46, %68 : vector<24x64xf32>
    %cst_35 = arith.constant 9.99999974E-6 : f32
    %70 = vector.broadcast %cst_35 : f32 to vector<24x1xf32>
    %71 = arith.addf %67, %70 : vector<24x1xf32>
    %72 = math.rsqrt %71 : vector<24x1xf32>
    %73 = vector.broadcast %72 : vector<24x1xf32> to vector<24x64xf32>
    %74 = arith.mulf %69, %73 : vector<24x64xf32>
    %75 = vector.broadcast %54 : vector<1x64xf32> to vector<24x64xf32>
    %76 = arith.mulf %74, %75 : vector<24x64xf32>
    %77 = vector.broadcast %56 : vector<1x64xf32> to vector<24x64xf32>
    %78 = arith.addf %76, %77 : vector<24x64xf32>
    %c0_36 = arith.constant 0 : index
    %c0_37 = arith.constant 0 : index
    %c0_38 = arith.constant 0 : index
    %79 = vector.load %arg7[%c0_36, %c0_37, %c0_38] : memref<2x64x192xf32, #tpu.memory_space<vmem>>, vector<1x64x192xf32>
    %80 = vector.shape_cast %79 : vector<1x64x192xf32> to vector<64x192xf32>
    %cst_39 = arith.constant dense<0.000000e+00> : vector<24x192xf32>
    %81 = tpu.matmul %78, %80, %cst_39 {dimension_numbers = #tpu.dot_dimension_numbers<[1], [0], [0], [1], [0, 0, 1, 1], [], []>} : vector<24x64xf32>, vector<64x192xf32>, vector<24x192xf32> -> vector<24x192xf32>
    %c0_40 = arith.constant 0 : index
    %c0_41 = arith.constant 0 : index
    %c0_42 = arith.constant 0 : index
    %82 = vector.load %arg8[%c0_40, %c0_41, %c0_42] : memref<2x1x192xf32, #tpu.memory_space<vmem>>, vector<1x1x192xf32>
    %83 = vector.shape_cast %82 : vector<1x1x192xf32> to vector<1x192xf32>
    %84 = vector.broadcast %83 : vector<1x192xf32> to vector<24x192xf32>
    %85 = arith.addf %81, %84 : vector<24x192xf32>
    %c0_43 = arith.constant 0 : index
    %c0_44 = arith.constant 0 : index
    %c0_45 = arith.constant 0 : index
    %86 = vector.load %arg9[%c0_43, %c0_44, %c0_45] : memref<2x64x64xf32, #tpu.memory_space<vmem>>, vector<1x64x64xf32>
    %87 = vector.shape_cast %86 : vector<1x64x64xf32> to vector<64x64xf32>
    %88 = vector.extract_strided_slice %85 {offsets = [0, 0], sizes = [24, 16], strides = [1, 1]} : vector<24x192xf32> to vector<24x16xf32>
    %89 = vector.extract_strided_slice %85 {offsets = [0, 64], sizes = [24, 16], strides = [1, 1]} : vector<24x192xf32> to vector<24x16xf32>
    %90 = vector.extract_strided_slice %85 {offsets = [0, 128], sizes = [24, 16], strides = [1, 1]} : vector<24x192xf32> to vector<24x16xf32>
    %cst_46 = arith.constant dense<0.000000e+00> : vector<24x24xf32>
    %91 = tpu.matmul %88, %89, %cst_46 {dimension_numbers = #tpu.dot_dimension_numbers<[1], [1], [0], [0], [0, 0, 1, 0], [], []>} : vector<24x16xf32>, vector<24x16xf32>, vector<24x24xf32> -> vector<24x24xf32>
    %cst_47 = arith.constant 2.500000e-01 : f32
    %92 = vector.broadcast %cst_47 : f32 to vector<24x24xf32>
    %93 = arith.mulf %91, %92 : vector<24x24xf32>
    %94 = arith.addf %93, %52 : vector<24x24xf32>
    %cst_48 = arith.constant dense<0xFF800000> : vector<24xf32>
    %95 = vector.multi_reduction <maximumf>, %94, %cst_48 [1] : vector<24x24xf32> to vector<24xf32>
    %96 = vector.shape_cast %95 : vector<24xf32> to vector<24x1xf32>
    %97 = vector.broadcast %96 : vector<24x1xf32> to vector<24x24xf32>
    %98 = arith.subf %94, %97 : vector<24x24xf32>
    %99 = math.exp %98 : vector<24x24xf32>
    %cst_49 = arith.constant dense<0.000000e+00> : vector<24xf32>
    %100 = vector.multi_reduction <add>, %99, %cst_49 [1] : vector<24x24xf32> to vector<24xf32>
    %101 = vector.shape_cast %100 : vector<24xf32> to vector<24x1xf32>
    %102 = tpu.reciprocal %101 {approx = true} : vector<24x1xf32> -> vector<24x1xf32>
    %103 = vector.broadcast %102 : vector<24x1xf32> to vector<24x24xf32>
    %104 = arith.mulf %99, %103 : vector<24x24xf32>
    %cst_50 = arith.constant dense<0.000000e+00> : vector<24x16xf32>
    %105 = tpu.matmul %104, %90, %cst_50 {dimension_numbers = #tpu.dot_dimension_numbers<[1], [0], [0], [1], [0, 0, 1, 1], [], []>} : vector<24x24xf32>, vector<24x16xf32>, vector<24x16xf32> -> vector<24x16xf32>
    %106 = vector.extract_strided_slice %87 {offsets = [0, 0], sizes = [16, 64], strides = [1, 1]} : vector<64x64xf32> to vector<16x64xf32>
    %cst_51 = arith.constant dense<0.000000e+00> : vector<24x64xf32>
    %107 = tpu.matmul %105, %106, %cst_51 {dimension_numbers = #tpu.dot_dimension_numbers<[1], [0], [0], [1], [0, 0, 1, 1], [], []>} : vector<24x16xf32>, vector<16x64xf32>, vector<24x64xf32> -> vector<24x64xf32>
    %108 = vector.extract_strided_slice %85 {offsets = [0, 16], sizes = [24, 16], strides = [1, 1]} : vector<24x192xf32> to vector<24x16xf32>
    %109 = vector.extract_strided_slice %85 {offsets = [0, 80], sizes = [24, 16], strides = [1, 1]} : vector<24x192xf32> to vector<24x16xf32>
    %110 = vector.extract_strided_slice %85 {offsets = [0, 144], sizes = [24, 16], strides = [1, 1]} : vector<24x192xf32> to vector<24x16xf32>
    %cst_52 = arith.constant dense<0.000000e+00> : vector<24x24xf32>
    %111 = tpu.matmul %108, %109, %cst_52 {dimension_numbers = #tpu.dot_dimension_numbers<[1], [1], [0], [0], [0, 0, 1, 0], [], []>} : vector<24x16xf32>, vector<24x16xf32>, vector<24x24xf32> -> vector<24x24xf32>
    %cst_53 = arith.constant 2.500000e-01 : f32
    %112 = vector.broadcast %cst_53 : f32 to vector<24x24xf32>
    %113 = arith.mulf %111, %112 : vector<24x24xf32>
    %114 = arith.addf %113, %52 : vector<24x24xf32>
    %cst_54 = arith.constant dense<0xFF800000> : vector<24xf32>
    %115 = vector.multi_reduction <maximumf>, %114, %cst_54 [1] : vector<24x24xf32> to vector<24xf32>
    %116 = vector.shape_cast %115 : vector<24xf32> to vector<24x1xf32>
    %117 = vector.broadcast %116 : vector<24x1xf32> to vector<24x24xf32>
    %118 = arith.subf %114, %117 : vector<24x24xf32>
    %119 = math.exp %118 : vector<24x24xf32>
    %cst_55 = arith.constant dense<0.000000e+00> : vector<24xf32>
    %120 = vector.multi_reduction <add>, %119, %cst_55 [1] : vector<24x24xf32> to vector<24xf32>
    %121 = vector.shape_cast %120 : vector<24xf32> to vector<24x1xf32>
    %122 = tpu.reciprocal %121 {approx = true} : vector<24x1xf32> -> vector<24x1xf32>
    %123 = vector.broadcast %122 : vector<24x1xf32> to vector<24x24xf32>
    %124 = arith.mulf %119, %123 : vector<24x24xf32>
    %cst_56 = arith.constant dense<0.000000e+00> : vector<24x16xf32>
    %125 = tpu.matmul %124, %110, %cst_56 {dimension_numbers = #tpu.dot_dimension_numbers<[1], [0], [0], [1], [0, 0, 1, 1], [], []>} : vector<24x24xf32>, vector<24x16xf32>, vector<24x16xf32> -> vector<24x16xf32>
    %126 = vector.extract_strided_slice %87 {offsets = [16, 0], sizes = [16, 64], strides = [1, 1]} : vector<64x64xf32> to vector<16x64xf32>
    %cst_57 = arith.constant dense<0.000000e+00> : vector<24x64xf32>
    %127 = tpu.matmul %125, %126, %cst_57 {dimension_numbers = #tpu.dot_dimension_numbers<[1], [0], [0], [1], [0, 0, 1, 1], [], []>} : vector<24x16xf32>, vector<16x64xf32>, vector<24x64xf32> -> vector<24x64xf32>
    %128 = arith.addf %107, %127 : vector<24x64xf32>
    %129 = vector.extract_strided_slice %85 {offsets = [0, 32], sizes = [24, 16], strides = [1, 1]} : vector<24x192xf32> to vector<24x16xf32>
    %130 = vector.extract_strided_slice %85 {offsets = [0, 96], sizes = [24, 16], strides = [1, 1]} : vector<24x192xf32> to vector<24x16xf32>
    %131 = vector.extract_strided_slice %85 {offsets = [0, 160], sizes = [24, 16], strides = [1, 1]} : vector<24x192xf32> to vector<24x16xf32>
    %cst_58 = arith.constant dense<0.000000e+00> : vector<24x24xf32>
    %132 = tpu.matmul %129, %130, %cst_58 {dimension_numbers = #tpu.dot_dimension_numbers<[1], [1], [0], [0], [0, 0, 1, 0], [], []>} : vector<24x16xf32>, vector<24x16xf32>, vector<24x24xf32> -> vector<24x24xf32>
    %cst_59 = arith.constant 2.500000e-01 : f32
    %133 = vector.broadcast %cst_59 : f32 to vector<24x24xf32>
    %134 = arith.mulf %132, %133 : vector<24x24xf32>
    %135 = arith.addf %134, %52 : vector<24x24xf32>
    %cst_60 = arith.constant dense<0xFF800000> : vector<24xf32>
    %136 = vector.multi_reduction <maximumf>, %135, %cst_60 [1] : vector<24x24xf32> to vector<24xf32>
    %137 = vector.shape_cast %136 : vector<24xf32> to vector<24x1xf32>
    %138 = vector.broadcast %137 : vector<24x1xf32> to vector<24x24xf32>
    %139 = arith.subf %135, %138 : vector<24x24xf32>
    %140 = math.exp %139 : vector<24x24xf32>
    %cst_61 = arith.constant dense<0.000000e+00> : vector<24xf32>
    %141 = vector.multi_reduction <add>, %140, %cst_61 [1] : vector<24x24xf32> to vector<24xf32>
    %142 = vector.shape_cast %141 : vector<24xf32> to vector<24x1xf32>
    %143 = tpu.reciprocal %142 {approx = true} : vector<24x1xf32> -> vector<24x1xf32>
    %144 = vector.broadcast %143 : vector<24x1xf32> to vector<24x24xf32>
    %145 = arith.mulf %140, %144 : vector<24x24xf32>
    %cst_62 = arith.constant dense<0.000000e+00> : vector<24x16xf32>
    %146 = tpu.matmul %145, %131, %cst_62 {dimension_numbers = #tpu.dot_dimension_numbers<[1], [0], [0], [1], [0, 0, 1, 1], [], []>} : vector<24x24xf32>, vector<24x16xf32>, vector<24x16xf32> -> vector<24x16xf32>
    %147 = vector.extract_strided_slice %87 {offsets = [32, 0], sizes = [16, 64], strides = [1, 1]} : vector<64x64xf32> to vector<16x64xf32>
    %cst_63 = arith.constant dense<0.000000e+00> : vector<24x64xf32>
    %148 = tpu.matmul %146, %147, %cst_63 {dimension_numbers = #tpu.dot_dimension_numbers<[1], [0], [0], [1], [0, 0, 1, 1], [], []>} : vector<24x16xf32>, vector<16x64xf32>, vector<24x64xf32> -> vector<24x64xf32>
    %149 = arith.addf %128, %148 : vector<24x64xf32>
    %150 = vector.extract_strided_slice %85 {offsets = [0, 48], sizes = [24, 16], strides = [1, 1]} : vector<24x192xf32> to vector<24x16xf32>
    %151 = vector.extract_strided_slice %85 {offsets = [0, 112], sizes = [24, 16], strides = [1, 1]} : vector<24x192xf32> to vector<24x16xf32>
    %152 = vector.extract_strided_slice %85 {offsets = [0, 176], sizes = [24, 16], strides = [1, 1]} : vector<24x192xf32> to vector<24x16xf32>
    %cst_64 = arith.constant dense<0.000000e+00> : vector<24x24xf32>
    %153 = tpu.matmul %150, %151, %cst_64 {dimension_numbers = #tpu.dot_dimension_numbers<[1], [1], [0], [0], [0, 0, 1, 0], [], []>} : vector<24x16xf32>, vector<24x16xf32>, vector<24x24xf32> -> vector<24x24xf32>
    %cst_65 = arith.constant 2.500000e-01 : f32
    %154 = vector.broadcast %cst_65 : f32 to vector<24x24xf32>
    %155 = arith.mulf %153, %154 : vector<24x24xf32>
    %156 = arith.addf %155, %52 : vector<24x24xf32>
    %cst_66 = arith.constant dense<0xFF800000> : vector<24xf32>
    %157 = vector.multi_reduction <maximumf>, %156, %cst_66 [1] : vector<24x24xf32> to vector<24xf32>
    %158 = vector.shape_cast %157 : vector<24xf32> to vector<24x1xf32>
    %159 = vector.broadcast %158 : vector<24x1xf32> to vector<24x24xf32>
    %160 = arith.subf %156, %159 : vector<24x24xf32>
    %161 = math.exp %160 : vector<24x24xf32>
    %cst_67 = arith.constant dense<0.000000e+00> : vector<24xf32>
    %162 = vector.multi_reduction <add>, %161, %cst_67 [1] : vector<24x24xf32> to vector<24xf32>
    %163 = vector.shape_cast %162 : vector<24xf32> to vector<24x1xf32>
    %164 = tpu.reciprocal %163 {approx = true} : vector<24x1xf32> -> vector<24x1xf32>
    %165 = vector.broadcast %164 : vector<24x1xf32> to vector<24x24xf32>
    %166 = arith.mulf %161, %165 : vector<24x24xf32>
    %cst_68 = arith.constant dense<0.000000e+00> : vector<24x16xf32>
    %167 = tpu.matmul %166, %152, %cst_68 {dimension_numbers = #tpu.dot_dimension_numbers<[1], [0], [0], [1], [0, 0, 1, 1], [], []>} : vector<24x24xf32>, vector<24x16xf32>, vector<24x16xf32> -> vector<24x16xf32>
    %168 = vector.extract_strided_slice %87 {offsets = [48, 0], sizes = [16, 64], strides = [1, 1]} : vector<64x64xf32> to vector<16x64xf32>
    %cst_69 = arith.constant dense<0.000000e+00> : vector<24x64xf32>
    %169 = tpu.matmul %167, %168, %cst_69 {dimension_numbers = #tpu.dot_dimension_numbers<[1], [0], [0], [1], [0, 0, 1, 1], [], []>} : vector<24x16xf32>, vector<16x64xf32>, vector<24x64xf32> -> vector<24x64xf32>
    %170 = arith.addf %149, %169 : vector<24x64xf32>
    %171 = arith.addf %46, %170 : vector<24x64xf32>
    %c0_70 = arith.constant 0 : index
    %c0_71 = arith.constant 0 : index
    %c0_72 = arith.constant 0 : index
    %172 = vector.load %arg10[%c0_70, %c0_71, %c0_72] : memref<2x1x64xf32, #tpu.memory_space<vmem>>, vector<1x1x64xf32>
    %173 = vector.shape_cast %172 : vector<1x1x64xf32> to vector<1x64xf32>
    %174 = vector.broadcast %173 : vector<1x64xf32> to vector<24x64xf32>
    %175 = arith.addf %171, %174 : vector<24x64xf32>
    %c0_73 = arith.constant 0 : index
    %c0_74 = arith.constant 0 : index
    %c0_75 = arith.constant 0 : index
    %176 = vector.load %arg11[%c0_73, %c0_74, %c0_75] : memref<2x1x64xf32, #tpu.memory_space<vmem>>, vector<1x1x64xf32>
    %177 = vector.shape_cast %176 : vector<1x1x64xf32> to vector<1x64xf32>
    %c0_76 = arith.constant 0 : index
    %c0_77 = arith.constant 0 : index
    %c0_78 = arith.constant 0 : index
    %178 = vector.load %arg12[%c0_76, %c0_77, %c0_78] : memref<2x1x64xf32, #tpu.memory_space<vmem>>, vector<1x1x64xf32>
    %179 = vector.shape_cast %178 : vector<1x1x64xf32> to vector<1x64xf32>
    %cst_79 = arith.constant dense<0.000000e+00> : vector<24xf32>
    %180 = vector.multi_reduction <add>, %175, %cst_79 [1] : vector<24x64xf32> to vector<24xf32>
    %181 = vector.shape_cast %180 : vector<24xf32> to vector<24x1xf32>
    %cst_80 = arith.constant 6.400000e+01 : f32
    %182 = vector.broadcast %cst_80 : f32 to vector<24x1xf32>
    %183 = arith.divf %181, %182 : vector<24x1xf32>
    %184 = vector.broadcast %183 : vector<24x1xf32> to vector<24x64xf32>
    %185 = arith.subf %175, %184 : vector<24x64xf32>
    %186 = arith.mulf %185, %185 : vector<24x64xf32>
    %cst_81 = arith.constant dense<0.000000e+00> : vector<24xf32>
    %187 = vector.multi_reduction <add>, %186, %cst_81 [1] : vector<24x64xf32> to vector<24xf32>
    %188 = vector.shape_cast %187 : vector<24xf32> to vector<24x1xf32>
    %cst_82 = arith.constant 6.400000e+01 : f32
    %189 = vector.broadcast %cst_82 : f32 to vector<24x1xf32>
    %190 = arith.divf %188, %189 : vector<24x1xf32>
    %191 = vector.broadcast %183 : vector<24x1xf32> to vector<24x64xf32>
    %192 = arith.subf %175, %191 : vector<24x64xf32>
    %cst_83 = arith.constant 9.99999974E-6 : f32
    %193 = vector.broadcast %cst_83 : f32 to vector<24x1xf32>
    %194 = arith.addf %190, %193 : vector<24x1xf32>
    %195 = math.rsqrt %194 : vector<24x1xf32>
    %196 = vector.broadcast %195 : vector<24x1xf32> to vector<24x64xf32>
    %197 = arith.mulf %192, %196 : vector<24x64xf32>
    %198 = vector.broadcast %177 : vector<1x64xf32> to vector<24x64xf32>
    %199 = arith.mulf %197, %198 : vector<24x64xf32>
    %200 = vector.broadcast %179 : vector<1x64xf32> to vector<24x64xf32>
    %201 = arith.addf %199, %200 : vector<24x64xf32>
    %c0_84 = arith.constant 0 : index
    %c0_85 = arith.constant 0 : index
    %c0_86 = arith.constant 0 : index
    %202 = vector.load %arg13[%c0_84, %c0_85, %c0_86] : memref<2x64x256xf32, #tpu.memory_space<vmem>>, vector<1x64x256xf32>
    %203 = vector.shape_cast %202 : vector<1x64x256xf32> to vector<64x256xf32>
    %cst_87 = arith.constant dense<0.000000e+00> : vector<24x256xf32>
    %204 = tpu.matmul %201, %203, %cst_87 {dimension_numbers = #tpu.dot_dimension_numbers<[1], [0], [0], [1], [0, 0, 1, 1], [], []>} : vector<24x64xf32>, vector<64x256xf32>, vector<24x256xf32> -> vector<24x256xf32>
    %c0_88 = arith.constant 0 : index
    %c0_89 = arith.constant 0 : index
    %c0_90 = arith.constant 0 : index
    %205 = vector.load %arg14[%c0_88, %c0_89, %c0_90] : memref<2x1x256xf32, #tpu.memory_space<vmem>>, vector<1x1x256xf32>
    %206 = vector.shape_cast %205 : vector<1x1x256xf32> to vector<1x256xf32>
    %207 = vector.broadcast %206 : vector<1x256xf32> to vector<24x256xf32>
    %208 = arith.addf %204, %207 : vector<24x256xf32>
    %209 = arith.mulf %208, %208 : vector<24x256xf32>
    %210 = arith.mulf %208, %209 : vector<24x256xf32>
    %cst_91 = arith.constant 4.471500e-02 : f32
    %211 = vector.broadcast %cst_91 : f32 to vector<24x256xf32>
    %212 = arith.mulf %211, %210 : vector<24x256xf32>
    %213 = arith.addf %208, %212 : vector<24x256xf32>
    %cst_92 = arith.constant 0.797884583 : f32
    %214 = vector.broadcast %cst_92 : f32 to vector<24x256xf32>
    %215 = arith.mulf %214, %213 : vector<24x256xf32>
    %216 = math.tanh %215 : vector<24x256xf32>
    %cst_93 = arith.constant 1.000000e+00 : f32
    %217 = vector.broadcast %cst_93 : f32 to vector<24x256xf32>
    %218 = arith.addf %217, %216 : vector<24x256xf32>
    %cst_94 = arith.constant 5.000000e-01 : f32
    %219 = vector.broadcast %cst_94 : f32 to vector<24x256xf32>
    %220 = arith.mulf %219, %218 : vector<24x256xf32>
    %221 = arith.mulf %208, %220 : vector<24x256xf32>
    %c0_95 = arith.constant 0 : index
    %c0_96 = arith.constant 0 : index
    %c0_97 = arith.constant 0 : index
    %222 = vector.load %arg15[%c0_95, %c0_96, %c0_97] : memref<2x256x64xf32, #tpu.memory_space<vmem>>, vector<1x256x64xf32>
    %223 = vector.shape_cast %222 : vector<1x256x64xf32> to vector<256x64xf32>
    %cst_98 = arith.constant dense<0.000000e+00> : vector<24x64xf32>
    %224 = tpu.matmul %221, %223, %cst_98 {dimension_numbers = #tpu.dot_dimension_numbers<[1], [0], [0], [1], [0, 0, 1, 1], [], []>} : vector<24x256xf32>, vector<256x64xf32>, vector<24x64xf32> -> vector<24x64xf32>
    %225 = arith.addf %175, %224 : vector<24x64xf32>
    %c0_99 = arith.constant 0 : index
    %c0_100 = arith.constant 0 : index
    %c0_101 = arith.constant 0 : index
    %226 = vector.load %arg16[%c0_99, %c0_100, %c0_101] : memref<2x1x64xf32, #tpu.memory_space<vmem>>, vector<1x1x64xf32>
    %227 = vector.shape_cast %226 : vector<1x1x64xf32> to vector<1x64xf32>
    %228 = vector.broadcast %227 : vector<1x64xf32> to vector<24x64xf32>
    %229 = arith.addf %225, %228 : vector<24x64xf32>
    %c1 = arith.constant 1 : index
    %c0_102 = arith.constant 0 : index
    %c0_103 = arith.constant 0 : index
    %230 = vector.load %arg5[%c1, %c0_102, %c0_103] : memref<2x1x64xf32, #tpu.memory_space<vmem>>, vector<1x1x64xf32>
    %231 = vector.shape_cast %230 : vector<1x1x64xf32> to vector<1x64xf32>
    %c1_104 = arith.constant 1 : index
    %c0_105 = arith.constant 0 : index
    %c0_106 = arith.constant 0 : index
    %232 = vector.load %arg6[%c1_104, %c0_105, %c0_106] : memref<2x1x64xf32, #tpu.memory_space<vmem>>, vector<1x1x64xf32>
    %233 = vector.shape_cast %232 : vector<1x1x64xf32> to vector<1x64xf32>
    %cst_107 = arith.constant dense<0.000000e+00> : vector<24xf32>
    %234 = vector.multi_reduction <add>, %229, %cst_107 [1] : vector<24x64xf32> to vector<24xf32>
    %235 = vector.shape_cast %234 : vector<24xf32> to vector<24x1xf32>
    %cst_108 = arith.constant 6.400000e+01 : f32
    %236 = vector.broadcast %cst_108 : f32 to vector<24x1xf32>
    %237 = arith.divf %235, %236 : vector<24x1xf32>
    %238 = vector.broadcast %237 : vector<24x1xf32> to vector<24x64xf32>
    %239 = arith.subf %229, %238 : vector<24x64xf32>
    %240 = arith.mulf %239, %239 : vector<24x64xf32>
    %cst_109 = arith.constant dense<0.000000e+00> : vector<24xf32>
    %241 = vector.multi_reduction <add>, %240, %cst_109 [1] : vector<24x64xf32> to vector<24xf32>
    %242 = vector.shape_cast %241 : vector<24xf32> to vector<24x1xf32>
    %cst_110 = arith.constant 6.400000e+01 : f32
    %243 = vector.broadcast %cst_110 : f32 to vector<24x1xf32>
    %244 = arith.divf %242, %243 : vector<24x1xf32>
    %245 = vector.broadcast %237 : vector<24x1xf32> to vector<24x64xf32>
    %246 = arith.subf %229, %245 : vector<24x64xf32>
    %cst_111 = arith.constant 9.99999974E-6 : f32
    %247 = vector.broadcast %cst_111 : f32 to vector<24x1xf32>
    %248 = arith.addf %244, %247 : vector<24x1xf32>
    %249 = math.rsqrt %248 : vector<24x1xf32>
    %250 = vector.broadcast %249 : vector<24x1xf32> to vector<24x64xf32>
    %251 = arith.mulf %246, %250 : vector<24x64xf32>
    %252 = vector.broadcast %231 : vector<1x64xf32> to vector<24x64xf32>
    %253 = arith.mulf %251, %252 : vector<24x64xf32>
    %254 = vector.broadcast %233 : vector<1x64xf32> to vector<24x64xf32>
    %255 = arith.addf %253, %254 : vector<24x64xf32>
    %c1_112 = arith.constant 1 : index
    %c0_113 = arith.constant 0 : index
    %c0_114 = arith.constant 0 : index
    %256 = vector.load %arg7[%c1_112, %c0_113, %c0_114] : memref<2x64x192xf32, #tpu.memory_space<vmem>>, vector<1x64x192xf32>
    %257 = vector.shape_cast %256 : vector<1x64x192xf32> to vector<64x192xf32>
    %cst_115 = arith.constant dense<0.000000e+00> : vector<24x192xf32>
    %258 = tpu.matmul %255, %257, %cst_115 {dimension_numbers = #tpu.dot_dimension_numbers<[1], [0], [0], [1], [0, 0, 1, 1], [], []>} : vector<24x64xf32>, vector<64x192xf32>, vector<24x192xf32> -> vector<24x192xf32>
    %c1_116 = arith.constant 1 : index
    %c0_117 = arith.constant 0 : index
    %c0_118 = arith.constant 0 : index
    %259 = vector.load %arg8[%c1_116, %c0_117, %c0_118] : memref<2x1x192xf32, #tpu.memory_space<vmem>>, vector<1x1x192xf32>
    %260 = vector.shape_cast %259 : vector<1x1x192xf32> to vector<1x192xf32>
    %261 = vector.broadcast %260 : vector<1x192xf32> to vector<24x192xf32>
    %262 = arith.addf %258, %261 : vector<24x192xf32>
    %c1_119 = arith.constant 1 : index
    %c0_120 = arith.constant 0 : index
    %c0_121 = arith.constant 0 : index
    %263 = vector.load %arg9[%c1_119, %c0_120, %c0_121] : memref<2x64x64xf32, #tpu.memory_space<vmem>>, vector<1x64x64xf32>
    %264 = vector.shape_cast %263 : vector<1x64x64xf32> to vector<64x64xf32>
    %265 = vector.extract_strided_slice %262 {offsets = [0, 0], sizes = [24, 16], strides = [1, 1]} : vector<24x192xf32> to vector<24x16xf32>
    %266 = vector.extract_strided_slice %262 {offsets = [0, 64], sizes = [24, 16], strides = [1, 1]} : vector<24x192xf32> to vector<24x16xf32>
    %267 = vector.extract_strided_slice %262 {offsets = [0, 128], sizes = [24, 16], strides = [1, 1]} : vector<24x192xf32> to vector<24x16xf32>
    %cst_122 = arith.constant dense<0.000000e+00> : vector<24x24xf32>
    %268 = tpu.matmul %265, %266, %cst_122 {dimension_numbers = #tpu.dot_dimension_numbers<[1], [1], [0], [0], [0, 0, 1, 0], [], []>} : vector<24x16xf32>, vector<24x16xf32>, vector<24x24xf32> -> vector<24x24xf32>
    %cst_123 = arith.constant 2.500000e-01 : f32
    %269 = vector.broadcast %cst_123 : f32 to vector<24x24xf32>
    %270 = arith.mulf %268, %269 : vector<24x24xf32>
    %271 = arith.addf %270, %52 : vector<24x24xf32>
    %cst_124 = arith.constant dense<0xFF800000> : vector<24xf32>
    %272 = vector.multi_reduction <maximumf>, %271, %cst_124 [1] : vector<24x24xf32> to vector<24xf32>
    %273 = vector.shape_cast %272 : vector<24xf32> to vector<24x1xf32>
    %274 = vector.broadcast %273 : vector<24x1xf32> to vector<24x24xf32>
    %275 = arith.subf %271, %274 : vector<24x24xf32>
    %276 = math.exp %275 : vector<24x24xf32>
    %cst_125 = arith.constant dense<0.000000e+00> : vector<24xf32>
    %277 = vector.multi_reduction <add>, %276, %cst_125 [1] : vector<24x24xf32> to vector<24xf32>
    %278 = vector.shape_cast %277 : vector<24xf32> to vector<24x1xf32>
    %279 = tpu.reciprocal %278 {approx = true} : vector<24x1xf32> -> vector<24x1xf32>
    %280 = vector.broadcast %279 : vector<24x1xf32> to vector<24x24xf32>
    %281 = arith.mulf %276, %280 : vector<24x24xf32>
    %cst_126 = arith.constant dense<0.000000e+00> : vector<24x16xf32>
    %282 = tpu.matmul %281, %267, %cst_126 {dimension_numbers = #tpu.dot_dimension_numbers<[1], [0], [0], [1], [0, 0, 1, 1], [], []>} : vector<24x24xf32>, vector<24x16xf32>, vector<24x16xf32> -> vector<24x16xf32>
    %283 = vector.extract_strided_slice %264 {offsets = [0, 0], sizes = [16, 64], strides = [1, 1]} : vector<64x64xf32> to vector<16x64xf32>
    %cst_127 = arith.constant dense<0.000000e+00> : vector<24x64xf32>
    %284 = tpu.matmul %282, %283, %cst_127 {dimension_numbers = #tpu.dot_dimension_numbers<[1], [0], [0], [1], [0, 0, 1, 1], [], []>} : vector<24x16xf32>, vector<16x64xf32>, vector<24x64xf32> -> vector<24x64xf32>
    %285 = vector.extract_strided_slice %262 {offsets = [0, 16], sizes = [24, 16], strides = [1, 1]} : vector<24x192xf32> to vector<24x16xf32>
    %286 = vector.extract_strided_slice %262 {offsets = [0, 80], sizes = [24, 16], strides = [1, 1]} : vector<24x192xf32> to vector<24x16xf32>
    %287 = vector.extract_strided_slice %262 {offsets = [0, 144], sizes = [24, 16], strides = [1, 1]} : vector<24x192xf32> to vector<24x16xf32>
    %cst_128 = arith.constant dense<0.000000e+00> : vector<24x24xf32>
    %288 = tpu.matmul %285, %286, %cst_128 {dimension_numbers = #tpu.dot_dimension_numbers<[1], [1], [0], [0], [0, 0, 1, 0], [], []>} : vector<24x16xf32>, vector<24x16xf32>, vector<24x24xf32> -> vector<24x24xf32>
    %cst_129 = arith.constant 2.500000e-01 : f32
    %289 = vector.broadcast %cst_129 : f32 to vector<24x24xf32>
    %290 = arith.mulf %288, %289 : vector<24x24xf32>
    %291 = arith.addf %290, %52 : vector<24x24xf32>
    %cst_130 = arith.constant dense<0xFF800000> : vector<24xf32>
    %292 = vector.multi_reduction <maximumf>, %291, %cst_130 [1] : vector<24x24xf32> to vector<24xf32>
    %293 = vector.shape_cast %292 : vector<24xf32> to vector<24x1xf32>
    %294 = vector.broadcast %293 : vector<24x1xf32> to vector<24x24xf32>
    %295 = arith.subf %291, %294 : vector<24x24xf32>
    %296 = math.exp %295 : vector<24x24xf32>
    %cst_131 = arith.constant dense<0.000000e+00> : vector<24xf32>
    %297 = vector.multi_reduction <add>, %296, %cst_131 [1] : vector<24x24xf32> to vector<24xf32>
    %298 = vector.shape_cast %297 : vector<24xf32> to vector<24x1xf32>
    %299 = tpu.reciprocal %298 {approx = true} : vector<24x1xf32> -> vector<24x1xf32>
    %300 = vector.broadcast %299 : vector<24x1xf32> to vector<24x24xf32>
    %301 = arith.mulf %296, %300 : vector<24x24xf32>
    %cst_132 = arith.constant dense<0.000000e+00> : vector<24x16xf32>
    %302 = tpu.matmul %301, %287, %cst_132 {dimension_numbers = #tpu.dot_dimension_numbers<[1], [0], [0], [1], [0, 0, 1, 1], [], []>} : vector<24x24xf32>, vector<24x16xf32>, vector<24x16xf32> -> vector<24x16xf32>
    %303 = vector.extract_strided_slice %264 {offsets = [16, 0], sizes = [16, 64], strides = [1, 1]} : vector<64x64xf32> to vector<16x64xf32>
    %cst_133 = arith.constant dense<0.000000e+00> : vector<24x64xf32>
    %304 = tpu.matmul %302, %303, %cst_133 {dimension_numbers = #tpu.dot_dimension_numbers<[1], [0], [0], [1], [0, 0, 1, 1], [], []>} : vector<24x16xf32>, vector<16x64xf32>, vector<24x64xf32> -> vector<24x64xf32>
    %305 = arith.addf %284, %304 : vector<24x64xf32>
    %306 = vector.extract_strided_slice %262 {offsets = [0, 32], sizes = [24, 16], strides = [1, 1]} : vector<24x192xf32> to vector<24x16xf32>
    %307 = vector.extract_strided_slice %262 {offsets = [0, 96], sizes = [24, 16], strides = [1, 1]} : vector<24x192xf32> to vector<24x16xf32>
    %308 = vector.extract_strided_slice %262 {offsets = [0, 160], sizes = [24, 16], strides = [1, 1]} : vector<24x192xf32> to vector<24x16xf32>
    %cst_134 = arith.constant dense<0.000000e+00> : vector<24x24xf32>
    %309 = tpu.matmul %306, %307, %cst_134 {dimension_numbers = #tpu.dot_dimension_numbers<[1], [1], [0], [0], [0, 0, 1, 0], [], []>} : vector<24x16xf32>, vector<24x16xf32>, vector<24x24xf32> -> vector<24x24xf32>
    %cst_135 = arith.constant 2.500000e-01 : f32
    %310 = vector.broadcast %cst_135 : f32 to vector<24x24xf32>
    %311 = arith.mulf %309, %310 : vector<24x24xf32>
    %312 = arith.addf %311, %52 : vector<24x24xf32>
    %cst_136 = arith.constant dense<0xFF800000> : vector<24xf32>
    %313 = vector.multi_reduction <maximumf>, %312, %cst_136 [1] : vector<24x24xf32> to vector<24xf32>
    %314 = vector.shape_cast %313 : vector<24xf32> to vector<24x1xf32>
    %315 = vector.broadcast %314 : vector<24x1xf32> to vector<24x24xf32>
    %316 = arith.subf %312, %315 : vector<24x24xf32>
    %317 = math.exp %316 : vector<24x24xf32>
    %cst_137 = arith.constant dense<0.000000e+00> : vector<24xf32>
    %318 = vector.multi_reduction <add>, %317, %cst_137 [1] : vector<24x24xf32> to vector<24xf32>
    %319 = vector.shape_cast %318 : vector<24xf32> to vector<24x1xf32>
    %320 = tpu.reciprocal %319 {approx = true} : vector<24x1xf32> -> vector<24x1xf32>
    %321 = vector.broadcast %320 : vector<24x1xf32> to vector<24x24xf32>
    %322 = arith.mulf %317, %321 : vector<24x24xf32>
    %cst_138 = arith.constant dense<0.000000e+00> : vector<24x16xf32>
    %323 = tpu.matmul %322, %308, %cst_138 {dimension_numbers = #tpu.dot_dimension_numbers<[1], [0], [0], [1], [0, 0, 1, 1], [], []>} : vector<24x24xf32>, vector<24x16xf32>, vector<24x16xf32> -> vector<24x16xf32>
    %324 = vector.extract_strided_slice %264 {offsets = [32, 0], sizes = [16, 64], strides = [1, 1]} : vector<64x64xf32> to vector<16x64xf32>
    %cst_139 = arith.constant dense<0.000000e+00> : vector<24x64xf32>
    %325 = tpu.matmul %323, %324, %cst_139 {dimension_numbers = #tpu.dot_dimension_numbers<[1], [0], [0], [1], [0, 0, 1, 1], [], []>} : vector<24x16xf32>, vector<16x64xf32>, vector<24x64xf32> -> vector<24x64xf32>
    %326 = arith.addf %305, %325 : vector<24x64xf32>
    %327 = vector.extract_strided_slice %262 {offsets = [0, 48], sizes = [24, 16], strides = [1, 1]} : vector<24x192xf32> to vector<24x16xf32>
    %328 = vector.extract_strided_slice %262 {offsets = [0, 112], sizes = [24, 16], strides = [1, 1]} : vector<24x192xf32> to vector<24x16xf32>
    %329 = vector.extract_strided_slice %262 {offsets = [0, 176], sizes = [24, 16], strides = [1, 1]} : vector<24x192xf32> to vector<24x16xf32>
    %cst_140 = arith.constant dense<0.000000e+00> : vector<24x24xf32>
    %330 = tpu.matmul %327, %328, %cst_140 {dimension_numbers = #tpu.dot_dimension_numbers<[1], [1], [0], [0], [0, 0, 1, 0], [], []>} : vector<24x16xf32>, vector<24x16xf32>, vector<24x24xf32> -> vector<24x24xf32>
    %cst_141 = arith.constant 2.500000e-01 : f32
    %331 = vector.broadcast %cst_141 : f32 to vector<24x24xf32>
    %332 = arith.mulf %330, %331 : vector<24x24xf32>
    %333 = arith.addf %332, %52 : vector<24x24xf32>
    %cst_142 = arith.constant dense<0xFF800000> : vector<24xf32>
    %334 = vector.multi_reduction <maximumf>, %333, %cst_142 [1] : vector<24x24xf32> to vector<24xf32>
    %335 = vector.shape_cast %334 : vector<24xf32> to vector<24x1xf32>
    %336 = vector.broadcast %335 : vector<24x1xf32> to vector<24x24xf32>
    %337 = arith.subf %333, %336 : vector<24x24xf32>
    %338 = math.exp %337 : vector<24x24xf32>
    %cst_143 = arith.constant dense<0.000000e+00> : vector<24xf32>
    %339 = vector.multi_reduction <add>, %338, %cst_143 [1] : vector<24x24xf32> to vector<24xf32>
    %340 = vector.shape_cast %339 : vector<24xf32> to vector<24x1xf32>
    %341 = tpu.reciprocal %340 {approx = true} : vector<24x1xf32> -> vector<24x1xf32>
    %342 = vector.broadcast %341 : vector<24x1xf32> to vector<24x24xf32>
    %343 = arith.mulf %338, %342 : vector<24x24xf32>
    %cst_144 = arith.constant dense<0.000000e+00> : vector<24x16xf32>
    %344 = tpu.matmul %343, %329, %cst_144 {dimension_numbers = #tpu.dot_dimension_numbers<[1], [0], [0], [1], [0, 0, 1, 1], [], []>} : vector<24x24xf32>, vector<24x16xf32>, vector<24x16xf32> -> vector<24x16xf32>
    %345 = vector.extract_strided_slice %264 {offsets = [48, 0], sizes = [16, 64], strides = [1, 1]} : vector<64x64xf32> to vector<16x64xf32>
    %cst_145 = arith.constant dense<0.000000e+00> : vector<24x64xf32>
    %346 = tpu.matmul %344, %345, %cst_145 {dimension_numbers = #tpu.dot_dimension_numbers<[1], [0], [0], [1], [0, 0, 1, 1], [], []>} : vector<24x16xf32>, vector<16x64xf32>, vector<24x64xf32> -> vector<24x64xf32>
    %347 = arith.addf %326, %346 : vector<24x64xf32>
    %348 = arith.addf %229, %347 : vector<24x64xf32>
    %c1_146 = arith.constant 1 : index
    %c0_147 = arith.constant 0 : index
    %c0_148 = arith.constant 0 : index
    %349 = vector.load %arg10[%c1_146, %c0_147, %c0_148] : memref<2x1x64xf32, #tpu.memory_space<vmem>>, vector<1x1x64xf32>
    %350 = vector.shape_cast %349 : vector<1x1x64xf32> to vector<1x64xf32>
    %351 = vector.broadcast %350 : vector<1x64xf32> to vector<24x64xf32>
    %352 = arith.addf %348, %351 : vector<24x64xf32>
    %c1_149 = arith.constant 1 : index
    %c0_150 = arith.constant 0 : index
    %c0_151 = arith.constant 0 : index
    %353 = vector.load %arg11[%c1_149, %c0_150, %c0_151] : memref<2x1x64xf32, #tpu.memory_space<vmem>>, vector<1x1x64xf32>
    %354 = vector.shape_cast %353 : vector<1x1x64xf32> to vector<1x64xf32>
    %c1_152 = arith.constant 1 : index
    %c0_153 = arith.constant 0 : index
    %c0_154 = arith.constant 0 : index
    %355 = vector.load %arg12[%c1_152, %c0_153, %c0_154] : memref<2x1x64xf32, #tpu.memory_space<vmem>>, vector<1x1x64xf32>
    %356 = vector.shape_cast %355 : vector<1x1x64xf32> to vector<1x64xf32>
    %cst_155 = arith.constant dense<0.000000e+00> : vector<24xf32>
    %357 = vector.multi_reduction <add>, %352, %cst_155 [1] : vector<24x64xf32> to vector<24xf32>
    %358 = vector.shape_cast %357 : vector<24xf32> to vector<24x1xf32>
    %cst_156 = arith.constant 6.400000e+01 : f32
    %359 = vector.broadcast %cst_156 : f32 to vector<24x1xf32>
    %360 = arith.divf %358, %359 : vector<24x1xf32>
    %361 = vector.broadcast %360 : vector<24x1xf32> to vector<24x64xf32>
    %362 = arith.subf %352, %361 : vector<24x64xf32>
    %363 = arith.mulf %362, %362 : vector<24x64xf32>
    %cst_157 = arith.constant dense<0.000000e+00> : vector<24xf32>
    %364 = vector.multi_reduction <add>, %363, %cst_157 [1] : vector<24x64xf32> to vector<24xf32>
    %365 = vector.shape_cast %364 : vector<24xf32> to vector<24x1xf32>
    %cst_158 = arith.constant 6.400000e+01 : f32
    %366 = vector.broadcast %cst_158 : f32 to vector<24x1xf32>
    %367 = arith.divf %365, %366 : vector<24x1xf32>
    %368 = vector.broadcast %360 : vector<24x1xf32> to vector<24x64xf32>
    %369 = arith.subf %352, %368 : vector<24x64xf32>
    %cst_159 = arith.constant 9.99999974E-6 : f32
    %370 = vector.broadcast %cst_159 : f32 to vector<24x1xf32>
    %371 = arith.addf %367, %370 : vector<24x1xf32>
    %372 = math.rsqrt %371 : vector<24x1xf32>
    %373 = vector.broadcast %372 : vector<24x1xf32> to vector<24x64xf32>
    %374 = arith.mulf %369, %373 : vector<24x64xf32>
    %375 = vector.broadcast %354 : vector<1x64xf32> to vector<24x64xf32>
    %376 = arith.mulf %374, %375 : vector<24x64xf32>
    %377 = vector.broadcast %356 : vector<1x64xf32> to vector<24x64xf32>
    %378 = arith.addf %376, %377 : vector<24x64xf32>
    %c1_160 = arith.constant 1 : index
    %c0_161 = arith.constant 0 : index
    %c0_162 = arith.constant 0 : index
    %379 = vector.load %arg13[%c1_160, %c0_161, %c0_162] : memref<2x64x256xf32, #tpu.memory_space<vmem>>, vector<1x64x256xf32>
    %380 = vector.shape_cast %379 : vector<1x64x256xf32> to vector<64x256xf32>
    %cst_163 = arith.constant dense<0.000000e+00> : vector<24x256xf32>
    %381 = tpu.matmul %378, %380, %cst_163 {dimension_numbers = #tpu.dot_dimension_numbers<[1], [0], [0], [1], [0, 0, 1, 1], [], []>} : vector<24x64xf32>, vector<64x256xf32>, vector<24x256xf32> -> vector<24x256xf32>
    %c1_164 = arith.constant 1 : index
    %c0_165 = arith.constant 0 : index
    %c0_166 = arith.constant 0 : index
    %382 = vector.load %arg14[%c1_164, %c0_165, %c0_166] : memref<2x1x256xf32, #tpu.memory_space<vmem>>, vector<1x1x256xf32>
    %383 = vector.shape_cast %382 : vector<1x1x256xf32> to vector<1x256xf32>
    %384 = vector.broadcast %383 : vector<1x256xf32> to vector<24x256xf32>
    %385 = arith.addf %381, %384 : vector<24x256xf32>
    %386 = arith.mulf %385, %385 : vector<24x256xf32>
    %387 = arith.mulf %385, %386 : vector<24x256xf32>
    %cst_167 = arith.constant 4.471500e-02 : f32
    %388 = vector.broadcast %cst_167 : f32 to vector<24x256xf32>
    %389 = arith.mulf %388, %387 : vector<24x256xf32>
    %390 = arith.addf %385, %389 : vector<24x256xf32>
    %cst_168 = arith.constant 0.797884583 : f32
    %391 = vector.broadcast %cst_168 : f32 to vector<24x256xf32>
    %392 = arith.mulf %391, %390 : vector<24x256xf32>
    %393 = math.tanh %392 : vector<24x256xf32>
    %cst_169 = arith.constant 1.000000e+00 : f32
    %394 = vector.broadcast %cst_169 : f32 to vector<24x256xf32>
    %395 = arith.addf %394, %393 : vector<24x256xf32>
    %cst_170 = arith.constant 5.000000e-01 : f32
    %396 = vector.broadcast %cst_170 : f32 to vector<24x256xf32>
    %397 = arith.mulf %396, %395 : vector<24x256xf32>
    %398 = arith.mulf %385, %397 : vector<24x256xf32>
    %c1_171 = arith.constant 1 : index
    %c0_172 = arith.constant 0 : index
    %c0_173 = arith.constant 0 : index
    %399 = vector.load %arg15[%c1_171, %c0_172, %c0_173] : memref<2x256x64xf32, #tpu.memory_space<vmem>>, vector<1x256x64xf32>
    %400 = vector.shape_cast %399 : vector<1x256x64xf32> to vector<256x64xf32>
    %cst_174 = arith.constant dense<0.000000e+00> : vector<24x64xf32>
    %401 = tpu.matmul %398, %400, %cst_174 {dimension_numbers = #tpu.dot_dimension_numbers<[1], [0], [0], [1], [0, 0, 1, 1], [], []>} : vector<24x256xf32>, vector<256x64xf32>, vector<24x64xf32> -> vector<24x64xf32>
    %402 = arith.addf %352, %401 : vector<24x64xf32>
    %c1_175 = arith.constant 1 : index
    %c0_176 = arith.constant 0 : index
    %c0_177 = arith.constant 0 : index
    %403 = vector.load %arg16[%c1_175, %c0_176, %c0_177] : memref<2x1x64xf32, #tpu.memory_space<vmem>>, vector<1x1x64xf32>
    %404 = vector.shape_cast %403 : vector<1x1x64xf32> to vector<1x64xf32>
    %405 = vector.broadcast %404 : vector<1x64xf32> to vector<24x64xf32>
    %406 = arith.addf %402, %405 : vector<24x64xf32>
    %c0_178 = arith.constant 0 : index
    %c0_179 = arith.constant 0 : index
    %407 = vector.load %arg17[%c0_178, %c0_179] : memref<1x64xf32, #tpu.memory_space<vmem>>, vector<1x64xf32>
    %c0_180 = arith.constant 0 : index
    %c0_181 = arith.constant 0 : index
    %408 = vector.load %arg18[%c0_180, %c0_181] : memref<1x64xf32, #tpu.memory_space<vmem>>, vector<1x64xf32>
    %cst_182 = arith.constant dense<0.000000e+00> : vector<24xf32>
    %409 = vector.multi_reduction <add>, %406, %cst_182 [1] : vector<24x64xf32> to vector<24xf32>
    %410 = vector.shape_cast %409 : vector<24xf32> to vector<24x1xf32>
    %cst_183 = arith.constant 6.400000e+01 : f32
    %411 = vector.broadcast %cst_183 : f32 to vector<24x1xf32>
    %412 = arith.divf %410, %411 : vector<24x1xf32>
    %413 = vector.broadcast %412 : vector<24x1xf32> to vector<24x64xf32>
    %414 = arith.subf %406, %413 : vector<24x64xf32>
    %415 = arith.mulf %414, %414 : vector<24x64xf32>
    %cst_184 = arith.constant dense<0.000000e+00> : vector<24xf32>
    %416 = vector.multi_reduction <add>, %415, %cst_184 [1] : vector<24x64xf32> to vector<24xf32>
    %417 = vector.shape_cast %416 : vector<24xf32> to vector<24x1xf32>
    %cst_185 = arith.constant 6.400000e+01 : f32
    %418 = vector.broadcast %cst_185 : f32 to vector<24x1xf32>
    %419 = arith.divf %417, %418 : vector<24x1xf32>
    %420 = vector.broadcast %412 : vector<24x1xf32> to vector<24x64xf32>
    %421 = arith.subf %406, %420 : vector<24x64xf32>
    %cst_186 = arith.constant 9.99999974E-6 : f32
    %422 = vector.broadcast %cst_186 : f32 to vector<24x1xf32>
    %423 = arith.addf %419, %422 : vector<24x1xf32>
    %424 = math.rsqrt %423 : vector<24x1xf32>
    %425 = vector.broadcast %424 : vector<24x1xf32> to vector<24x64xf32>
    %426 = arith.mulf %421, %425 : vector<24x64xf32>
    %427 = vector.broadcast %407 : vector<1x64xf32> to vector<24x64xf32>
    %428 = arith.mulf %426, %427 : vector<24x64xf32>
    %429 = vector.broadcast %408 : vector<1x64xf32> to vector<24x64xf32>
    %430 = arith.addf %428, %429 : vector<24x64xf32>
    %431 = vector.extract_strided_slice %430 {offsets = [0, 0], sizes = [24, 32], strides = [1, 1]} : vector<24x64xf32> to vector<24x32xf32>
    %c0_187 = arith.constant 0 : index
    %c0_188 = arith.constant 0 : index
    %432 = vector.load %arg19[%c0_187, %c0_188] : memref<32x4xf32, #tpu.memory_space<vmem>>, vector<32x4xf32>
    %cst_189 = arith.constant dense<0.000000e+00> : vector<24x4xf32>
    %433 = tpu.matmul %431, %432, %cst_189 {dimension_numbers = #tpu.dot_dimension_numbers<[1], [0], [0], [1], [0, 0, 1, 1], [], []>} : vector<24x32xf32>, vector<32x4xf32>, vector<24x4xf32> -> vector<24x4xf32>
    %c0_190 = arith.constant 0 : index
    %c0_191 = arith.constant 0 : index
    %434 = vector.load %arg20[%c0_190, %c0_191] : memref<1x4xf32, #tpu.memory_space<vmem>>, vector<1x4xf32>
    %435 = vector.broadcast %434 : vector<1x4xf32> to vector<24x4xf32>
    %436 = arith.addf %433, %435 : vector<24x4xf32>
    %437 = vector.broadcast %15 : vector<1x4xf32> to vector<24x4xf32>
    %438 = arith.mulf %436, %437 : vector<24x4xf32>
    %439 = vector.broadcast %5 : vector<1x4xf32> to vector<24x4xf32>
    %440 = arith.addf %438, %439 : vector<24x4xf32>
    %c0_192 = arith.constant 0 : index
    %c0_193 = arith.constant 0 : index
    %c0_194 = arith.constant 0 : index
    %441 = vector.load %arg21[%c0_192, %c0_193, %c0_194] : memref<1x24x4xf32, #tpu.memory_space<vmem>>, vector<1x24x4xf32>
    %442 = vector.shape_cast %441 : vector<1x24x4xf32> to vector<24x4xf32>
    %443 = vector.shape_cast %440 : vector<24x4xf32> to vector<1x24x4xf32>
    tpu.vector_store %arg21[%c0_192, %c0_193, %c0_194], %443 {strides = array<i32>} : memref<1x24x4xf32, #tpu.memory_space<vmem>>, vector<1x24x4xf32>,
    return
  }
  func.func @transform_0(%arg0: i32) -> (i32, i32, i32) {
    %c0_i32 = arith.constant 0 : i32
    %c0_i32_0 = arith.constant 0 : i32
    %c0_i32_1 = arith.constant 0 : i32
    return %arg0, %c0_i32, %c0_i32_0 : i32, i32, i32
  }
  func.func @transform_1(%arg0: i32) -> (i32, i32, i32) {
    %c0_i32 = arith.constant 0 : i32
    %c0_i32_0 = arith.constant 0 : i32
    %c0_i32_1 = arith.constant 0 : i32
    %c0_i32_2 = arith.constant 0 : i32
    return %c0_i32, %c0_i32_0, %c0_i32_1 : i32, i32, i32
  }
  func.func @transform_2(%arg0: i32) -> (i32, i32, i32) {
    %c0_i32 = arith.constant 0 : i32
    %c0_i32_0 = arith.constant 0 : i32
    %c0_i32_1 = arith.constant 0 : i32
    %c0_i32_2 = arith.constant 0 : i32
    return %c0_i32, %c0_i32_0, %c0_i32_1 : i32, i32, i32
  }
  func.func @transform_3(%arg0: i32) -> (i32, i32) {
    %c0_i32 = arith.constant 0 : i32
    %c0_i32_0 = arith.constant 0 : i32
    %c0_i32_1 = arith.constant 0 : i32
    return %c0_i32, %c0_i32_0 : i32, i32
  }
  func.func @transform_4(%arg0: i32) -> (i32, i32, i32) {
    %c0_i32 = arith.constant 0 : i32
    %c0_i32_0 = arith.constant 0 : i32
    %c0_i32_1 = arith.constant 0 : i32
    %c0_i32_2 = arith.constant 0 : i32
    return %c0_i32, %c0_i32_0, %c0_i32_1 : i32, i32, i32
  }
  func.func @transform_5(%arg0: i32) -> (i32, i32, i32) {
    %c0_i32 = arith.constant 0 : i32
    %c0_i32_0 = arith.constant 0 : i32
    %c0_i32_1 = arith.constant 0 : i32
    %c0_i32_2 = arith.constant 0 : i32
    return %c0_i32, %c0_i32_0, %c0_i32_1 : i32, i32, i32
  }
  func.func @transform_6(%arg0: i32) -> (i32, i32, i32) {
    %c0_i32 = arith.constant 0 : i32
    %c0_i32_0 = arith.constant 0 : i32
    %c0_i32_1 = arith.constant 0 : i32
    %c0_i32_2 = arith.constant 0 : i32
    return %c0_i32, %c0_i32_0, %c0_i32_1 : i32, i32, i32
  }
  func.func @transform_7(%arg0: i32) -> (i32, i32, i32) {
    %c0_i32 = arith.constant 0 : i32
    %c0_i32_0 = arith.constant 0 : i32
    %c0_i32_1 = arith.constant 0 : i32
    %c0_i32_2 = arith.constant 0 : i32
    return %c0_i32, %c0_i32_0, %c0_i32_1 : i32, i32, i32
  }
  func.func @transform_8(%arg0: i32) -> (i32, i32, i32) {
    %c0_i32 = arith.constant 0 : i32
    %c0_i32_0 = arith.constant 0 : i32
    %c0_i32_1 = arith.constant 0 : i32
    %c0_i32_2 = arith.constant 0 : i32
    return %c0_i32, %c0_i32_0, %c0_i32_1 : i32, i32, i32
  }
  func.func @transform_9(%arg0: i32) -> (i32, i32, i32) {
    %c0_i32 = arith.constant 0 : i32
    %c0_i32_0 = arith.constant 0 : i32
    %c0_i32_1 = arith.constant 0 : i32
    %c0_i32_2 = arith.constant 0 : i32
    return %c0_i32, %c0_i32_0, %c0_i32_1 : i32, i32, i32
  }
  func.func @transform_10(%arg0: i32) -> (i32, i32, i32) {
    %c0_i32 = arith.constant 0 : i32
    %c0_i32_0 = arith.constant 0 : i32
    %c0_i32_1 = arith.constant 0 : i32
    %c0_i32_2 = arith.constant 0 : i32
    return %c0_i32, %c0_i32_0, %c0_i32_1 : i32, i32, i32
  }
  func.func @transform_11(%arg0: i32) -> (i32, i32, i32) {
    %c0_i32 = arith.constant 0 : i32
    %c0_i32_0 = arith.constant 0 : i32
    %c0_i32_1 = arith.constant 0 : i32
    %c0_i32_2 = arith.constant 0 : i32
    return %c0_i32, %c0_i32_0, %c0_i32_1 : i32, i32, i32
  }
  func.func @transform_12(%arg0: i32) -> (i32, i32, i32) {
    %c0_i32 = arith.constant 0 : i32
    %c0_i32_0 = arith.constant 0 : i32
    %c0_i32_1 = arith.constant 0 : i32
    %c0_i32_2 = arith.constant 0 : i32
    return %c0_i32, %c0_i32_0, %c0_i32_1 : i32, i32, i32
  }
  func.func @transform_13(%arg0: i32) -> (i32, i32, i32) {
    %c0_i32 = arith.constant 0 : i32
    %c0_i32_0 = arith.constant 0 : i32
    %c0_i32_1 = arith.constant 0 : i32
    %c0_i32_2 = arith.constant 0 : i32
    return %c0_i32, %c0_i32_0, %c0_i32_1 : i32, i32, i32
  }
  func.func @transform_14(%arg0: i32) -> (i32, i32, i32) {
    %c0_i32 = arith.constant 0 : i32
    %c0_i32_0 = arith.constant 0 : i32
    %c0_i32_1 = arith.constant 0 : i32
    %c0_i32_2 = arith.constant 0 : i32
    return %c0_i32, %c0_i32_0, %c0_i32_1 : i32, i32, i32
  }
  func.func @transform_15(%arg0: i32) -> (i32, i32, i32) {
    %c0_i32 = arith.constant 0 : i32
    %c0_i32_0 = arith.constant 0 : i32
    %c0_i32_1 = arith.constant 0 : i32
    %c0_i32_2 = arith.constant 0 : i32
    return %c0_i32, %c0_i32_0, %c0_i32_1 : i32, i32, i32
  }
  func.func @transform_16(%arg0: i32) -> (i32, i32) {
    %c0_i32 = arith.constant 0 : i32
    %c0_i32_0 = arith.constant 0 : i32
    %c0_i32_1 = arith.constant 0 : i32
    return %c0_i32, %c0_i32_0 : i32, i32
  }
  func.func @transform_17(%arg0: i32) -> (i32, i32) {
    %c0_i32 = arith.constant 0 : i32
    %c0_i32_0 = arith.constant 0 : i32
    %c0_i32_1 = arith.constant 0 : i32
    return %c0_i32, %c0_i32_0 : i32, i32
  }
  func.func @transform_18(%arg0: i32) -> (i32, i32) {
    %c0_i32 = arith.constant 0 : i32
    %c0_i32_0 = arith.constant 0 : i32
    %c0_i32_1 = arith.constant 0 : i32
    return %c0_i32, %c0_i32_0 : i32, i32
  }
  func.func @transform_19(%arg0: i32) -> (i32, i32) {
    %c0_i32 = arith.constant 0 : i32
    %c0_i32_0 = arith.constant 0 : i32
    %c0_i32_1 = arith.constant 0 : i32
    return %c0_i32, %c0_i32_0 : i32, i32
  }
  func.func @transform_20(%arg0: i32) -> (i32, i32, i32) {
    %c0_i32 = arith.constant 0 : i32
    %c0_i32_0 = arith.constant 0 : i32
    %c0_i32_1 = arith.constant 0 : i32
    return %arg0, %c0_i32, %c0_i32_0 : i32, i32, i32
  }
  func.func @transform_21(%arg0: i32) -> (i32, i32, i32) {
    %c0_i32 = arith.constant 0 : i32
    %c0_i32_0 = arith.constant 0 : i32
    %c0_i32_1 = arith.constant 0 : i32
    return %arg0, %c0_i32, %c0_i32_0 : i32, i32, i32
  }
}

</mosaic_0001>

<llo_original>
// kernel: _lambda_.1
$region0: #{_lambda_.1}
  #allocation0 [shape = 'u32[]', space=smem, size = 0x4, offset = 0x4, fixed_abs, tag = 'smem constant byte address 0x4 - core index']
  #allocation1 [shape = 'u32[144,128]{1,0:T(1,128)}', space=vmem, size = 0x12000, scoped, tag = 'internal scratch']
  %s0 = inlined_call_operand.vmem [shape: f32[2,16,4], index: 0, kind: input, shape index: {}]
  %s1 = inlined_call_operand.vmem [shape: f32[3,24,16], index: 1, kind: input, shape index: {}]
  %s2 = inlined_call_operand.vmem [shape: f32[3,4,64], index: 2, kind: input, shape index: {}]
  %s3 = inlined_call_operand.vmem [shape: f32[24,64], index: 3, kind: input, shape index: {}]
  %s4 = inlined_call_operand.vmem [shape: f32[2,1,64], index: 4, kind: input, shape index: {}]
  %s5 = inlined_call_operand.vmem [shape: f32[2,1,64], index: 5, kind: input, shape index: {}]
  %s6 = inlined_call_operand.vmem [shape: f32[2,64,192], index: 6, kind: input, shape index: {}]
  %s7 = inlined_call_operand.vmem [shape: f32[2,1,192], index: 7, kind: input, shape index: {}]
  %s8 = inlined_call_operand.vmem [shape: f32[2,64,64], index: 8, kind: input, shape index: {}]
  %s9 = inlined_call_operand.vmem [shape: f32[2,1,64], index: 9, kind: input, shape index: {}]
  %s10 = inlined_call_operand.vmem [shape: f32[2,1,64], index: 10, kind: input, shape index: {}]
  %s11 = inlined_call_operand.vmem [shape: f32[2,1,64], index: 11, kind: input, shape index: {}]
  %s12 = inlined_call_operand.vmem [shape: f32[2,64,256], index: 12, kind: input, shape index: {}]
  %s13 = inlined_call_operand.vmem [shape: f32[2,1,256], index: 13, kind: input, shape index: {}]
  %s14 = inlined_call_operand.vmem [shape: f32[2,256,64], index: 14, kind: input, shape index: {}]
  %s15 = inlined_call_operand.vmem [shape: f32[2,1,64], index: 15, kind: input, shape index: {}]
  %s16 = inlined_call_operand.vmem [shape: f32[1,64], index: 16, kind: input, shape index: {}]
  %s17 = inlined_call_operand.vmem [shape: f32[1,64], index: 17, kind: input, shape index: {}]
  %s18 = inlined_call_operand.vmem [shape: f32[32,4], index: 18, kind: input, shape index: {}]
  %s19 = inlined_call_operand.vmem [shape: f32[1,4], index: 19, kind: input, shape index: {}]
  %s20 = inlined_call_operand.vmem [shape: f32[2,24,4], index: 20, kind: output, shape index: {0}]
  %s21 = inlined_call_operand.vmem [shape: f32[2,16,4], index: 21, kind: output, shape index: {1}]
  %22 = xla_tuple %s20, %s21
  %s23 = sld [smem:[#allocation0]]
  $region121: #{_lambda_.1} parent=0
    _
  %s25 = ssub.s32 1, %s23
  %s26 = scalar_select 0, %s25, %s23
  loop: start=0, step=1, limit=4
  $region2: #{_lambda_.1} parent=0 // loop_pre_header
    _
  $region3: #{_lambda_.1} parent=0 // loop_header
    %s28 = sphi 0, %s32
    %p29 = scmp.ge.s32.totalorder %s28, 4
    %s38 = sphi 0, %s40
    %s41 = sphi 0, %s38
    %s42 = sphi 0, %s41
    %s58 = sphi 0, %s42
    %s62 = sphi 0, %s62
    %s64 = sphi 0, %s62
    %s65 = sphi 0, %s64
    %s79 = sphi 0, %s65
    %s83 = sphi 0, %s83
    %s85 = sphi 0, %s83
    %s86 = sphi 0, %s85
    %s100 = sphi 0, %s86
    %s104 = sphi 0, %s104
    %s106 = sphi 0, %s104
    %s107 = sphi 0, %s106
    %s121 = sphi 0, %s107
    %s125 = sphi 0, %s125
    %s127 = sphi 0, %s125
    %s128 = sphi 0, %s127
    %s142 = sphi 0, %s128
    %s146 = sphi 0, %s146
    %s148 = sphi 0, %s146
    %s149 = sphi 0, %s148
    %s163 = sphi 0, %s149
    %s167 = sphi 0, %s167
    %s169 = sphi 0, %s167
    %s170 = sphi 0, %s169
    %s184 = sphi 0, %s170
    %s188 = sphi 0, %s188
    %s190 = sphi 0, %s188
    %s191 = sphi 0, %s190
    %s205 = sphi 0, %s191
    %s209 = sphi 0, %s209
    %s211 = sphi 0, %s209
    %s212 = sphi 0, %s211
    %s226 = sphi 0, %s212
    %s230 = sphi 0, %s230
    %s232 = sphi 0, %s230
    %s233 = sphi 0, %s232
    %s247 = sphi 0, %s233
    %s251 = sphi 0, %s251
    %s253 = sphi 0, %s251
    %s254 = sphi 0, %s253
    %s268 = sphi 0, %s254
    %s272 = sphi 0, %s272
    %s274 = sphi 0, %s272
    %s275 = sphi 0, %s274
    %s289 = sphi 0, %s275
    %s293 = sphi 0, %s293
    %s295 = sphi 0, %s293
    %s296 = sphi 0, %s295
    %s310 = sphi 0, %s296
    %s314 = sphi 0, %s314
    %s316 = sphi 0, %s314
    %s317 = sphi 0, %s316
    %s331 = sphi 0, %s317
    %s335 = sphi 0, %s335
    %s337 = sphi 0, %s335
    %s338 = sphi 0, %s337
    %s352 = sphi 0, %s338
    %s356 = sphi 0, %s356
    %s358 = sphi 0, %s356
    %s359 = sphi 0, %s358
    %s373 = sphi 0, %s359
    %s377 = sphi 0, %s377
    %s379 = sphi 0, %s377
    %s380 = sphi 0, %s379
    %s394 = sphi 0, %s380
    %s398 = sphi 0, %s398
    %s400 = sphi 0, %s398
    %s401 = sphi 0, %s400
    %s415 = sphi 0, %s401
    %s419 = sphi 0, %s419
    %s421 = sphi 0, %s419
    %s422 = sphi 0, %s421
    %s436 = sphi 0, %s422
    %s440 = sphi 0, %s440
    %s442 = sphi 0, %s440
    %s443 = sphi 0, %s442
    %s457 = sphi 0, %s443
    %s463 = sphi 0, %s465
    %s466 = sphi 0, %s463
    %s467 = sphi 0, %s466
    %s483 = sphi 0, %s467
    %s489 = sphi 0, %s491
    %s492 = sphi 0, %s489
    %s493 = sphi 0, %s492
    %s509 = sphi 0, %s493
  $region4: #{_lambda_.1} parent=0 // loop_header_branch
    %31 = sbr.rel (%p29) target = $region8
  $region5: #{_lambda_.1} parent=0 // loop_body
    %s33 = ssub.s32 %s28, 1
    %s34 = ssub.s32 %s28, 2
    %s35 = sadd.s32 %s28, 1
    %s36 = ssub.s32 %s28, %s35
    %p37 = scmp.eq.s32.totalorder %s36, 0
    %s39 = sadd.s32 %s38, 1
    %s40 = scalar_select %p37, %s38, %s39
    %p43 = pneg %p37
    %p44 = scmp.eq.s32.totalorder %s28, 1
    %p45 = por %p43, %p44
    %p46 = scmp.ne.s32.totalorder %s38, %s41
    %p47 = scmp.eq.s32.totalorder %s28, 0
    %p48 = por %p46, %p47
    %p49 = scmp.ne.s32.totalorder %s38, %s41
    %p50 = scmp.eq.s32.totalorder %s33, 1
    %p51 = por %p49, %p50
    %p52 = scmp.ne.s32.totalorder %s41, %s42
    %p53 = scmp.eq.s32.totalorder %s33, 0
    %p54 = por %p52, %p53
    %p55 = scmp.ne.s32.totalorder %s41, %s42
    %p56 = scmp.eq.s32.totalorder %s34, 1
    %p57 = por %p55, %p56
    %p59 = scmp.ne.s32.totalorder %s42, %s58
    %p60 = scmp.eq.s32.totalorder %s34, 0
    %p61 = por %p59, %p60
    %s63 = sadd.s32 %s62, 1
    %p66 = scmp.eq.s32.totalorder %s28, 1
    %p67 = scmp.ne.s32.totalorder %s62, %s64
    %p68 = scmp.eq.s32.totalorder %s28, 0
    %p69 = por %p67, %p68
    %p70 = scmp.ne.s32.totalorder %s62, %s64
    %p71 = scmp.eq.s32.totalorder %s33, 1
    %p72 = por %p70, %p71
    %p73 = scmp.ne.s32.totalorder %s64, %s65
    %p74 = scmp.eq.s32.totalorder %s33, 0
    %p75 = por %p73, %p74
    %p76 = scmp.ne.s32.totalorder %s64, %s65
    %p77 = scmp.eq.s32.totalorder %s34, 1
    %p78 = por %p76, %p77
    %p80 = scmp.ne.s32.totalorder %s65, %s79
    %p81 = scmp.eq.s32.totalorder %s34, 0
    %p82 = por %p80, %p81
    %s84 = sadd.s32 %s83, 1
    %p87 = scmp.eq.s32.totalorder %s28, 1
    %p88 = scmp.ne.s32.totalorder %s83, %s85
    %p89 = scmp.eq.s32.totalorder %s28, 0
    %p90 = por %p88, %p89
    %p91 = scmp.ne.s32.totalorder %s83, %s85
    %p92 = scmp.eq.s32.totalorder %s33, 1
    %p93 = por %p91, %p92
    %p94 = scmp.ne.s32.totalorder %s85, %s86
    %p95 = scmp.eq.s32.totalorder %s33, 0
    %p96 = por %p94, %p95
    %p97 = scmp.ne.s32.totalorder %s85, %s86
    %p98 = scmp.eq.s32.totalorder %s34, 1
    %p99 = por %p97, %p98
    %p101 = scmp.ne.s32.totalorder %s86, %s100
    %p102 = scmp.eq.s32.totalorder %s34, 0
    %p103 = por %p101, %p102
    %s105 = sadd.s32 %s104, 1
    %p108 = scmp.eq.s32.totalorder %s28, 1
    %p109 = scmp.ne.s32.totalorder %s104, %s106
    %p110 = scmp.eq.s32.totalorder %s28, 0
    %p111 = por %p109, %p110
    %p112 = scmp.ne.s32.totalorder %s104, %s106
    %p113 = scmp.eq.s32.totalorder %s33, 1
    %p114 = por %p112, %p113
    %p115 = scmp.ne.s32.totalorder %s106, %s107
    %p116 = scmp.eq.s32.totalorder %s33, 0
    %p117 = por %p115, %p116
    %p118 = scmp.ne.s32.totalorder %s106, %s107
    %p119 = scmp.eq.s32.totalorder %s34, 1
    %p120 = por %p118, %p119
    %p122 = scmp.ne.s32.totalorder %s107, %s121
    %p123 = scmp.eq.s32.totalorder %s34, 0
    %p124 = por %p122, %p123
    %s126 = sadd.s32 %s125, 1
    %p129 = scmp.eq.s32.totalorder %s28, 1
    %p130 = scmp.ne.s32.totalorder %s125, %s127
    %p131 = scmp.eq.s32.totalorder %s28, 0
    %p132 = por %p130, %p131
    %p133 = scmp.ne.s32.totalorder %s125, %s127
    %p134 = scmp.eq.s32.totalorder %s33, 1
    %p135 = por %p133, %p134
    %p136 = scmp.ne.s32.totalorder %s127, %s128
    %p137 = scmp.eq.s32.totalorder %s33, 0
    %p138 = por %p136, %p137
    %p139 = scmp.ne.s32.totalorder %s127, %s128
    %p140 = scmp.eq.s32.totalorder %s34, 1
    %p141 = por %p139, %p140
    %p143 = scmp.ne.s32.totalorder %s128, %s142
    %p144 = scmp.eq.s32.totalorder %s34, 0
    %p145 = por %p143, %p144
    %s147 = sadd.s32 %s146, 1
    %p150 = scmp.eq.s32.totalorder %s28, 1
    %p151 = scmp.ne.s32.totalorder %s146, %s148
    %p152 = scmp.eq.s32.totalorder %s28, 0
    %p153 = por %p151, %p152
    %p154 = scmp.ne.s32.totalorder %s146, %s148
    %p155 = scmp.eq.s32.totalorder %s33, 1
    %p156 = por %p154, %p155
    %p157 = scmp.ne.s32.totalorder %s148, %s149
    %p158 = scmp.eq.s32.totalorder %s33, 0
    %p159 = por %p157, %p158
    %p160 = scmp.ne.s32.totalorder %s148, %s149
    %p161 = scmp.eq.s32.totalorder %s34, 1
    %p162 = por %p160, %p161
    %p164 = scmp.ne.s32.totalorder %s149, %s163
    %p165 = scmp.eq.s32.totalorder %s34, 0
    %p166 = por %p164, %p165
    %s168 = sadd.s32 %s167, 1
    %p171 = scmp.eq.s32.totalorder %s28, 1
    %p172 = scmp.ne.s32.totalorder %s167, %s169
    %p173 = scmp.eq.s32.totalorder %s28, 0
    %p174 = por %p172, %p173
    %p175 = scmp.ne.s32.totalorder %s167, %s169
    %p176 = scmp.eq.s32.totalorder %s33, 1
    %p177 = por %p175, %p176
    %p178 = scmp.ne.s32.totalorder %s169, %s170
    %p179 = scmp.eq.s32.totalorder %s33, 0
    %p180 = por %p178, %p179
    %p181 = scmp.ne.s32.totalorder %s169, %s170
    %p182 = scmp.eq.s32.totalorder %s34, 1
    %p183 = por %p181, %p182
    %p185 = scmp.ne.s32.totalorder %s170, %s184
    %p186 = scmp.eq.s32.totalorder %s34, 0
    %p187 = por %p185, %p186
    %s189 = sadd.s32 %s188, 1
    %p192 = scmp.eq.s32.totalorder %s28, 1
    %p193 = scmp.ne.s32.totalorder %s188, %s190
    %p194 = scmp.eq.s32.totalorder %s28, 0
    %p195 = por %p193, %p194
    %p196 = scmp.ne.s32.totalorder %s188, %s190
    %p197 = scmp.eq.s32.totalorder %s33, 1
    %p198 = por %p196, %p197
    %p199 = scmp.ne.s32.totalorder %s190, %s191
    %p200 = scmp.eq.s32.totalorder %s33, 0
    %p201 = por %p199, %p200
    %p202 = scmp.ne.s32.totalorder %s190, %s191
    %p203 = scmp.eq.s32.totalorder %s34, 1
    %p204 = por %p202, %p203
    %p206 = scmp.ne.s32.totalorder %s191, %s205
    %p207 = scmp.eq.s32.totalorder %s34, 0
    %p208 = por %p206, %p207
    %s210 = sadd.s32 %s209, 1
    %p213 = scmp.eq.s32.totalorder %s28, 1
    %p214 = scmp.ne.s32.totalorder %s209, %s211
    %p215 = scmp.eq.s32.totalorder %s28, 0
    %p216 = por %p214, %p215
    %p217 = scmp.ne.s32.totalorder %s209, %s211
    %p218 = scmp.eq.s32.totalorder %s33, 1
    %p219 = por %p217, %p218
    %p220 = scmp.ne.s32.totalorder %s211, %s212
    %p221 = scmp.eq.s32.totalorder %s33, 0
    %p222 = por %p220, %p221
    %p223 = scmp.ne.s32.totalorder %s211, %s212
    %p224 = scmp.eq.s32.totalorder %s34, 1
    %p225 = por %p223, %p224
    %p227 = scmp.ne.s32.totalorder %s212, %s226
    %p228 = scmp.eq.s32.totalorder %s34, 0
    %p229 = por %p227, %p228
    %s231 = sadd.s32 %s230, 1
    %p234 = scmp.eq.s32.totalorder %s28, 1
    %p235 = scmp.ne.s32.totalorder %s230, %s232
    %p236 = scmp.eq.s32.totalorder %s28, 0
    %p237 = por %p235, %p236
    %p238 = scmp.ne.s32.totalorder %s230, %s232
    %p239 = scmp.eq.s32.totalorder %s33, 1
    %p240 = por %p238, %p239
    %p241 = scmp.ne.s32.totalorder %s232, %s233
    %p242 = scmp.eq.s32.totalorder %s33, 0
    %p243 = por %p241, %p242
    %p244 = scmp.ne.s32.totalorder %s232, %s233
    %p245 = scmp.eq.s32.totalorder %s34, 1
    %p246 = por %p244, %p245
    %p248 = scmp.ne.s32.totalorder %s233, %s247
    %p249 = scmp.eq.s32.totalorder %s34, 0
    %p250 = por %p248, %p249
    %s252 = sadd.s32 %s251, 1
    %p255 = scmp.eq.s32.totalorder %s28, 1
    %p256 = scmp.ne.s32.totalorder %s251, %s253
    %p257 = scmp.eq.s32.totalorder %s28, 0
    %p258 = por %p256, %p257
    %p259 = scmp.ne.s32.totalorder %s251, %s253
    %p260 = scmp.eq.s32.totalorder %s33, 1
    %p261 = por %p259, %p260
    %p262 = scmp.ne.s32.totalorder %s253, %s254
    %p263 = scmp.eq.s32.totalorder %s33, 0
    %p264 = por %p262, %p263
    %p265 = scmp.ne.s32.totalorder %s253, %s254
    %p266 = scmp.eq.s32.totalorder %s34, 1
    %p267 = por %p265, %p266
    %p269 = scmp.ne.s32.totalorder %s254, %s268
    %p270 = scmp.eq.s32.totalorder %s34, 0
    %p271 = por %p269, %p270
    %s273 = sadd.s32 %s272, 1
    %p276 = scmp.eq.s32.totalorder %s28, 1
    %p277 = scmp.ne.s32.totalorder %s272, %s274
    %p278 = scmp.eq.s32.totalorder %s28, 0
    %p279 = por %p277, %p278
    %p280 = scmp.ne.s32.totalorder %s272, %s274
    %p281 = scmp.eq.s32.totalorder %s33, 1
    %p282 = por %p280, %p281
    %p283 = scmp.ne.s32.totalorder %s274, %s275
    %p284 = scmp.eq.s32.totalorder %s33, 0
    %p285 = por %p283, %p284
    %p286 = scmp.ne.s32.totalorder %s274, %s275
    %p287 = scmp.eq.s32.totalorder %s34, 1
    %p288 = por %p286, %p287
    %p290 = scmp.ne.s32.totalorder %s275, %s289
    %p291 = scmp.eq.s32.totalorder %s34, 0
    %p292 = por %p290, %p291
    %s294 = sadd.s32 %s293, 1
    %p297 = scmp.eq.s32.totalorder %s28, 1
    %p298 = scmp.ne.s32.totalorder %s293, %s295
    %p299 = scmp.eq.s32.totalorder %s28, 0
    %p300 = por %p298, %p299
    %p301 = scmp.ne.s32.totalorder %s293, %s295
    %p302 = scmp.eq.s32.totalorder %s33, 1
    %p303 = por %p301, %p302
    %p304 = scmp.ne.s32.totalorder %s295, %s296
    %p305 = scmp.eq.s32.totalorder %s33, 0
    %p306 = por %p304, %p305
    %p307 = scmp.ne.s32.totalorder %s295, %s296
    %p308 = scmp.eq.s32.totalorder %s34, 1
    %p309 = por %p307, %p308
    %p311 = scmp.ne.s32.totalorder %s296, %s310
    %p312 = scmp.eq.s32.totalorder %s34, 0
    %p313 = por %p311, %p312
    %s315 = sadd.s32 %s314, 1
    %p318 = scmp.eq.s32.totalorder %s28, 1
    %p319 = scmp.ne.s32.totalorder %s314, %s316
    %p320 = scmp.eq.s32.totalorder %s28, 0
    %p321 = por %p319, %p320
    %p322 = scmp.ne.s32.totalorder %s314, %s316
    %p323 = scmp.eq.s32.totalorder %s33, 1
    %p324 = por %p322, %p323
    %p325 = scmp.ne.s32.totalorder %s316, %s317
    %p326 = scmp.eq.s32.totalorder %s33, 0
    %p327 = por %p325, %p326
    %p328 = scmp.ne.s32.totalorder %s316, %s317
    %p329 = scmp.eq.s32.totalorder %s34, 1
    %p330 = por %p328, %p329
    %p332 = scmp.ne.s32.totalorder %s317, %s331
    %p333 = scmp.eq.s32.totalorder %s34, 0
    %p334 = por %p332, %p333
    %s336 = sadd.s32 %s335, 1
    %p339 = scmp.eq.s32.totalorder %s28, 1
    %p340 = scmp.ne.s32.totalorder %s335, %s337
    %p341 = scmp.eq.s32.totalorder %s28, 0
    %p342 = por %p340, %p341
    %p343 = scmp.ne.s32.totalorder %s335, %s337
    %p344 = scmp.eq.s32.totalorder %s33, 1
    %p345 = por %p343, %p344
    %p346 = scmp.ne.s32.totalorder %s337, %s338
    %p347 = scmp.eq.s32.totalorder %s33, 0
    %p348 = por %p346, %p347
    %p349 = scmp.ne.s32.totalorder %s337, %s338
    %p350 = scmp.eq.s32.totalorder %s34, 1
    %p351 = por %p349, %p350
    %p353 = scmp.ne.s32.totalorder %s338, %s352
    %p354 = scmp.eq.s32.totalorder %s34, 0
    %p355 = por %p353, %p354
    %s357 = sadd.s32 %s356, 1
    %p360 = scmp.eq.s32.totalorder %s28, 1
    %p361 = scmp.ne.s32.totalorder %s356, %s358
    %p362 = scmp.eq.s32.totalorder %s28, 0
    %p363 = por %p361, %p362
    %p364 = scmp.ne.s32.totalorder %s356, %s358
    %p365 = scmp.eq.s32.totalorder %s33, 1
    %p366 = por %p364, %p365
    %p367 = scmp.ne.s32.totalorder %s358, %s359
    %p368 = scmp.eq.s32.totalorder %s33, 0
    %p369 = por %p367, %p368
    %p370 = scmp.ne.s32.totalorder %s358, %s359
    %p371 = scmp.eq.s32.totalorder %s34, 1
    %p372 = por %p370, %p371
    %p374 = scmp.ne.s32.totalorder %s359, %s373
    %p375 = scmp.eq.s32.totalorder %s34, 0
    %p376 = por %p374, %p375
    %s378 = sadd.s32 %s377, 1
    %p381 = scmp.eq.s32.totalorder %s28, 1
    %p382 = scmp.ne.s32.totalorder %s377, %s379
    %p383 = scmp.eq.s32.totalorder %s28, 0
    %p384 = por %p382, %p383
    %p385 = scmp.ne.s32.totalorder %s377, %s379
    %p386 = scmp.eq.s32.totalorder %s33, 1
    %p387 = por %p385, %p386
    %p388 = scmp.ne.s32.totalorder %s379, %s380
    %p389 = scmp.eq.s32.totalorder %s33, 0
    %p390 = por %p388, %p389
    %p391 = scmp.ne.s32.totalorder %s379, %s380
    %p392 = scmp.eq.s32.totalorder %s34, 1
    %p393 = por %p391, %p392
    %p395 = scmp.ne.s32.totalorder %s380, %s394
    %p396 = scmp.eq.s32.totalorder %s34, 0
    %p397 = por %p395, %p396
    %s399 = sadd.s32 %s398, 1
    %p402 = scmp.eq.s32.totalorder %s28, 1
    %p403 = scmp.ne.s32.totalorder %s398, %s400
    %p404 = scmp.eq.s32.totalorder %s28, 0
    %p405 = por %p403, %p404
    %p406 = scmp.ne.s32.totalorder %s398, %s400
    %p407 = scmp.eq.s32.totalorder %s33, 1
    %p408 = por %p406, %p407
    %p409 = scmp.ne.s32.totalorder %s400, %s401
    %p410 = scmp.eq.s32.totalorder %s33, 0
    %p411 = por %p409, %p410
    %p412 = scmp.ne.s32.totalorder %s400, %s401
    %p413 = scmp.eq.s32.totalorder %s34, 1
    %p414 = por %p412, %p413
    %p416 = scmp.ne.s32.totalorder %s401, %s415
    %p417 = scmp.eq.s32.totalorder %s34, 0
    %p418 = por %p416, %p417
    %s420 = sadd.s32 %s419, 1
    %p423 = scmp.eq.s32.totalorder %s28, 1
    %p424 = scmp.ne.s32.totalorder %s419, %s421
    %p425 = scmp.eq.s32.totalorder %s28, 0
    %p426 = por %p424, %p425
    %p427 = scmp.ne.s32.totalorder %s419, %s421
    %p428 = scmp.eq.s32.totalorder %s33, 1
    %p429 = por %p427, %p428
    %p430 = scmp.ne.s32.totalorder %s421, %s422
    %p431 = scmp.eq.s32.totalorder %s33, 0
    %p432 = por %p430, %p431
    %p433 = scmp.ne.s32.totalorder %s421, %s422
    %p434 = scmp.eq.s32.totalorder %s34, 1
    %p435 = por %p433, %p434
    %p437 = scmp.ne.s32.totalorder %s422, %s436
    %p438 = scmp.eq.s32.totalorder %s34, 0
    %p439 = por %p437, %p438
    %s441 = sadd.s32 %s440, 1
    %p444 = scmp.eq.s32.totalorder %s28, 1
    %p445 = scmp.ne.s32.totalorder %s440, %s442
    %p446 = scmp.eq.s32.totalorder %s28, 0
    %p447 = por %p445, %p446
    %p448 = scmp.ne.s32.totalorder %s440, %s442
    %p449 = scmp.eq.s32.totalorder %s33, 1
    %p450 = por %p448, %p449
    %p451 = scmp.ne.s32.totalorder %s442, %s443
    %p452 = scmp.eq.s32.totalorder %s33, 0
    %p453 = por %p451, %p452
    %p454 = scmp.ne.s32.totalorder %s442, %s443
    %p455 = scmp.eq.s32.totalorder %s34, 1
    %p456 = por %p454, %p455
    %p458 = scmp.ne.s32.totalorder %s443, %s457
    %p459 = scmp.eq.s32.totalorder %s34, 0
    %p460 = por %p458, %p459
    %s461 = ssub.s32 %s28, %s35
    %p462 = scmp.eq.s32.totalorder %s461, 0
    %s464 = sadd.s32 %s463, 1
    %s465 = scalar_select %p462, %s463, %s464
    %p468 = pneg %p462
    %p469 = scmp.eq.s32.totalorder %s28, 1
    %p470 = por %p468, %p469
    %p471 = scmp.ne.s32.totalorder %s463, %s466
    %p472 = scmp.eq.s32.totalorder %s28, 0
    %p473 = por %p471, %p472
    %p474 = scmp.ne.s32.totalorder %s463, %s466
    %p475 = scmp.eq.s32.totalorder %s33, 1
    %p476 = por %p474, %p475
    %p477 = scmp.ne.s32.totalorder %s466, %s467
    %p478 = scmp.eq.s32.totalorder %s33, 0
    %p479 = por %p477, %p478
    %p480 = scmp.ne.s32.totalorder %s466, %s467
    %p481 = scmp.eq.s32.totalorder %s34, 1
    %p482 = por %p480, %p481
    %p484 = scmp.ne.s32.totalorder %s467, %s483
    %p485 = scmp.eq.s32.totalorder %s34, 0
    %p486 = por %p484, %p485
    %s487 = ssub.s32 %s28, %s35
    %p488 = scmp.eq.s32.totalorder %s487, 0
    %s490 = sadd.s32 %s489, 1
    %s491 = scalar_select %p488, %s489, %s490
    %p494 = pneg %p488
    %p495 = scmp.eq.s32.totalorder %s28, 1
    %p496 = por %p494, %p495
    %p497 = scmp.ne.s32.totalorder %s489, %s492
    %p498 = scmp.eq.s32.totalorder %s28, 0
    %p499 = por %p497, %p498
    %p500 = scmp.ne.s32.totalorder %s489, %s492
    %p501 = scmp.eq.s32.totalorder %s33, 1
    %p502 = por %p500, %p501
    %p503 = scmp.ne.s32.totalorder %s492, %s493
    %p504 = scmp.eq.s32.totalorder %s33, 0
    %p505 = por %p503, %p504
    %p506 = scmp.ne.s32.totalorder %s492, %s493
    %p507 = scmp.eq.s32.totalorder %s34, 1
    %p508 = por %p506, %p507
    %p510 = scmp.ne.s32.totalorder %s493, %s509
    %p511 = scmp.eq.s32.totalorder %s34, 0
    %p512 = por %p510, %p511
    %p513 = scmp.le.s32.totalorder 1, %s28
    %p514 = scmp.lt.s32.totalorder %s28, 3
    %p515 = pnand %p513, %p514
    %p516 = pneg %p515
    // Predicated region
    $region9: #{_lambda_.1} parent=5 // pred_check
      _
    $region10: #{_lambda_.1} parent=5 // pred_check_branch
      %518 = sbr.rel (%p515) target = $region12
    $region11: #{_lambda_.1} parent=5 // pred_region
      %s519 = ssub.s32 %s28, 1
      // Predicated region
      $region13: #{_lambda_.1} parent=11 // pred_check
        %p520 = pneg %p75
      $region14: #{_lambda_.1} parent=11 // pred_check_branch
        %522 = sbr.rel (%p520) target = $region16
      $region15: #{_lambda_.1} parent=11 // pred_region
        _
      $region16: #{_lambda_.1} parent=11 // pred_fallthru
        _
      // Predicated region
      $region17: #{_lambda_.1} parent=11 // pred_check
        %p523 = pneg %p96
      $region18: #{_lambda_.1} parent=11 // pred_check_branch
        %525 = sbr.rel (%p523) target = $region20
      $region19: #{_lambda_.1} parent=11 // pred_region
        _
      $region20: #{_lambda_.1} parent=11 // pred_fallthru
        _
      // Predicated region
      $region21: #{_lambda_.1} parent=11 // pred_check
        %p526 = pneg %p117
      $region22: #{_lambda_.1} parent=11 // pred_check_branch
        %528 = sbr.rel (%p526) target = $region24
      $region23: #{_lambda_.1} parent=11 // pred_region
        _
      $region24: #{_lambda_.1} parent=11 // pred_fallthru
        _
      // Predicated region
      $region25: #{_lambda_.1} parent=11 // pred_check
        %p529 = pneg %p138
      $region26: #{_lambda_.1} parent=11 // pred_check_branch
        %531 = sbr.rel (%p529) target = $region28
      $region27: #{_lambda_.1} parent=11 // pred_region
        _
      $region28: #{_lambda_.1} parent=11 // pred_fallthru
        _
      // Predicated region
      $region29: #{_lambda_.1} parent=11 // pred_check
        %p532 = pneg %p159
      $region30: #{_lambda_.1} parent=11 // pred_check_branch
        %534 = sbr.rel (%p532) target = $region32
      $region31: #{_lambda_.1} parent=11 // pred_region
        _
      $region32: #{_lambda_.1} parent=11 // pred_fallthru
        _
      // Predicated region
      $region33: #{_lambda_.1} parent=11 // pred_check
        %p535 = pneg %p180
      $region34: #{_lambda_.1} parent=11 // pred_check_branch
        %537 = sbr.rel (%p535) target = $region36
      $region35: #{_lambda_.1} parent=11 // pred_region
        _
      $region36: #{_lambda_.1} parent=11 // pred_fallthru
        _
      // Predicated region
      $region37: #{_lambda_.1} parent=11 // pred_check
        %p538 = pneg %p201
      $region38: #{_lambda_.1} parent=11 // pred_check_branch
        %540 = sbr.rel (%p538) target = $region40
      $region39: #{_lambda_.1} parent=11 // pred_region
        _
      $region40: #{_lambda_.1} parent=11 // pred_fallthru
        _
      // Predicated region
      $region41: #{_lambda_.1} parent=11 // pred_check
        %p541 = pneg %p222
      $region42: #{_lambda_.1} parent=11 // pred_check_branch
        %543 = sbr.rel (%p541) target = $region44
      $region43: #{_lambda_.1} parent=11 // pred_region
        _
      $region44: #{_lambda_.1} parent=11 // pred_fallthru
        _
      // Predicated region
      $region45: #{_lambda_.1} parent=11 // pred_check
        %p544 = pneg %p243
      $region46: #{_lambda_.1} parent=11 // pred_check_branch
        %546 = sbr.rel (%p544) target = $region48
      $region47: #{_lambda_.1} parent=11 // pred_region
        _
      $region48: #{_lambda_.1} parent=11 // pred_fallthru
        _
      // Predicated region
      $region49: #{_lambda_.1} parent=11 // pred_check
        %p547 = pneg %p264
      $region50: #{_lambda_.1} parent=11 // pred_check_branch
        %549 = sbr.rel (%p547) target = $region52
      $region51: #{_lambda_.1} parent=11 // pred_region
        _
      $region52: #{_lambda_.1} parent=11 // pred_fallthru
        _
      // Predicated region
      $region53: #{_lambda_.1} parent=11 // pred_check
        %p550 = pneg %p285
      $region54: #{_lambda_.1} parent=11 // pred_check_branch
        %552 = sbr.rel (%p550) target = $region56
      $region55: #{_lambda_.1} parent=11 // pred_region
        _
      $region56: #{_lambda_.1} parent=11 // pred_fallthru
        _
      // Predicated region
      $region57: #{_lambda_.1} parent=11 // pred_check
        %p553 = pneg %p306
      $region58: #{_lambda_.1} parent=11 // pred_check_branch
        %555 = sbr.rel (%p553) target = $region60
      $region59: #{_lambda_.1} parent=11 // pred_region
        _
      $region60: #{_lambda_.1} parent=11 // pred_fallthru
        _
      // Predicated region
      $region61: #{_lambda_.1} parent=11 // pred_check
        %p556 = pneg %p327
      $region62: #{_lambda_.1} parent=11 // pred_check_branch
        %558 = sbr.rel (%p556) target = $region64
      $region63: #{_lambda_.1} parent=11 // pred_region
        _
      $region64: #{_lambda_.1} parent=11 // pred_fallthru
        _
      // Predicated region
      $region65: #{_lambda_.1} parent=11 // pred_check
        %p559 = pneg %p348
      $region66: #{_lambda_.1} parent=11 // pred_check_branch
        %561 = sbr.rel (%p559) target = $region68
      $region67: #{_lambda_.1} parent=11 // pred_region
        _
      $region68: #{_lambda_.1} parent=11 // pred_fallthru
        _
      // Predicated region
      $region69: #{_lambda_.1} parent=11 // pred_check
        %p562 = pneg %p369
      $region70: #{_lambda_.1} parent=11 // pred_check_branch
        %564 = sbr.rel (%p562) target = $region72
      $region71: #{_lambda_.1} parent=11 // pred_region
        _
      $region72: #{_lambda_.1} parent=11 // pred_fallthru
        _
      // Predicated region
      $region73: #{_lambda_.1} parent=11 // pred_check
        %p565 = pneg %p390
      $region74: #{_lambda_.1} parent=11 // pred_check_branch
        %567 = sbr.rel (%p565) target = $region76
      $region75: #{_lambda_.1} parent=11 // pred_region
        _
      $region76: #{_lambda_.1} parent=11 // pred_fallthru
        _
      // Predicated region
      $region77: #{_lambda_.1} parent=11 // pred_check
        %p568 = pneg %p411
      $region78: #{_lambda_.1} parent=11 // pred_check_branch
        %570 = sbr.rel (%p568) target = $region80
      $region79: #{_lambda_.1} parent=11 // pred_region
        _
      $region80: #{_lambda_.1} parent=11 // pred_fallthru
        _
      // Predicated region
      $region81: #{_lambda_.1} parent=11 // pred_check
        %p571 = pneg %p432
      $region82: #{_lambda_.1} parent=11 // pred_check_branch
        %573 = sbr.rel (%p571) target = $region84
      $region83: #{_lambda_.1} parent=11 // pred_region
        _
      $region84: #{_lambda_.1} parent=11 // pred_fallthru
        _
      // Predicated region
      $region85: #{_lambda_.1} parent=11 // pred_check
        %p574 = pneg %p453
      $region86: #{_lambda_.1} parent=11 // pred_check_branch
        %576 = sbr.rel (%p574) target = $region88
      $region87: #{_lambda_.1} parent=11 // pred_region
        _
      $region88: #{_lambda_.1} parent=11 // pred_fallthru
        _
    $region12: #{_lambda_.1} parent=5 // pred_fallthru
      _
    %p577 = scmp.lt.s32.totalorder %s28, 2
    // Predicated region
    $region89: #{_lambda_.1} parent=5 // pred_check
      %p578 = pneg %p577
    $region90: #{_lambda_.1} parent=5 // pred_check_branch
      %580 = sbr.rel (%p578) target = $region92
    $region91: #{_lambda_.1} parent=5 // pred_region
      // Predicated region
      $region93: #{_lambda_.1} parent=91 // pred_check
        %p581 = pneg %p48
      $region94: #{_lambda_.1} parent=91 // pred_check_branch
        %583 = sbr.rel (%p581) target = $region96
      $region95: #{_lambda_.1} parent=91 // pred_region
        %p584 = scmp.lt.s32.totalorder %s28, 1
        %s585 = scalar_select %p584, %s28, 1
        %s586 = smul.addr %s585, 2
        %s587 = smul.addr %s586, 8
        %s588 = scalar_lea.vmem %s0, %s587
      $region96: #{_lambda_.1} parent=91 // pred_fallthru
        _
    $region92: #{_lambda_.1} parent=5 // pred_fallthru
      _
    %p589 = scmp.le.s32.totalorder 1, %s28
    %p590 = scmp.lt.s32.totalorder %s28, 3
    %p591 = pnand %p589, %p590
    %p592 = pneg %p591
    // Predicated region
    $region97: #{_lambda_.1} parent=5 // pred_check
      _
    $region98: #{_lambda_.1} parent=5 // pred_check_branch
      %594 = sbr.rel (%p591) target = $region100
    $region99: #{_lambda_.1} parent=5 // pred_region
      %s595 = ssub.s32 %s28, 1
      %p596 = scmp.lt.s32.totalorder %s33, 1
      %s597 = scalar_select %p596, %s33, 1
      %s598 = smul.addr %s597, 2
      %s599 = smul.addr %s598, 8
      %s600 = scalar_lea.vmem %s0, %s599
      %p601 = pneg %p54
      %p602 = pneg %p51
      %p603 = pneg %p75
      %p604 = pneg %p72
      %p605 = pneg %p96
      %p606 = pneg %p93
      %p607 = pneg %p117
      %p608 = pneg %p114
      %p609 = pneg %p138
      %p610 = pneg %p135
      %p611 = pneg %p159
      %p612 = pneg %p156
      %p613 = pneg %p180
      %p614 = pneg %p177
      %p615 = pneg %p201
      %p616 = pneg %p198
      %p617 = pneg %p222
      %p618 = pneg %p219
      %p619 = pneg %p243
      %p620 = pneg %p240
      %p621 = pneg %p264
      %p622 = pneg %p261
      %p623 = pneg %p285
      %p624 = pneg %p282
      %p625 = pneg %p306
      %p626 = pneg %p303
      %p627 = pneg %p327
      %p628 = pneg %p324
      %p629 = pneg %p348
      %p630 = pneg %p345
      %p631 = pneg %p369
      %p632 = pneg %p366
      %p633 = pneg %p390
      %p634 = pneg %p387
      %p635 = pneg %p411
      %p636 = pneg %p408
      %p637 = pneg %p432
      %p638 = pneg %p429
      %p639 = pneg %p453
      %p640 = pneg %p450
      %p641 = pneg %p479
      %p642 = pneg %p476
      %p643 = scmp.lt.s32.totalorder %s33, 1
      %s644 = scalar_select %p643, %s33, 1
      %s645 = smul.addr %s644, 3
      %s646 = smul.addr %s645, 8
      %s647 = scalar_lea.vmem %s20, %s646
      %p648 = pneg %p505
      %p649 = pneg %p502
      %p650 = scmp.lt.s32.totalorder %s33, 1
      %s651 = scalar_select %p650, %s33, 1
      %s652 = smul.addr %s651, 2
      %s653 = smul.addr %s652, 8
      %s654 = scalar_lea.vmem %s21, %s653
      %p655 = scmp.lt.s32.totalorder %s33, 1
      %s656 = scalar_select %p655, %s33, 1
      %s657 = smul.addr %s656, 2
      %s658 = smul.addr %s657, 8
      %s659 = scalar_lea.vmem %s0, %s658
      %p660 = scmp.lt.s32.totalorder %s33, 1
      %s661 = scalar_select %p660, %s33, 1
      %s662 = smul.addr %s661, 3
      %s663 = smul.addr %s662, 8
      %s664 = scalar_lea.vmem %s20, %s663
      %p665 = scmp.lt.s32.totalorder %s33, 1
      %s666 = scalar_select %p665, %s33, 1
      %s667 = smul.addr %s666, 2
      %s668 = smul.addr %s667, 8
      %s669 = scalar_lea.vmem %s21, %s668
      %v670 = vld [vmem:[%s659] sm:$0xff]
      %v671 = vld [vmem:[%s659 + $0x8] sm:$0xff]
      %vm672 = vcmask 31744
      %v673 = vsel %vm672, %v670, 0.0
      %v674 = vsel %vm672, %v671, 0.0
      %v675 = vadd.f32 %v673, %v674
      %v676 = vrot.slane %v675, 4
      %v677 = vadd.f32 %v675, %v676
      %v678 = vrot.slane %v677, 2
      %v679 = vadd.f32 %v677, %v678
      %v680 = vrot.slane %v679, 1
      %v681 = vadd.f32 %v679, %v680
      %v682 = vrcp.pop 16.0
      %v683 = vmul.f32 %v681, %v682
      %v684 = vsub.f32 %v670, %v683
      %v685 = vsub.f32 %v671, %v683
      %v686 = vmul.f32 %v684, %v684
      %v687 = vmul.f32 %v685, %v685
      %v688 = vsel %vm672, %v686, 0.0
      %v689 = vsel %vm672, %v687, 0.0
      %v690 = vadd.f32 %v688, %v689
      %v691 = vrot.slane %v690, 4
      %v692 = vadd.f32 %v690, %v691
      %v693 = vrot.slane %v692, 2
      %v694 = vadd.f32 %v692, %v693
      %v695 = vrot.slane %v694, 1
      %v696 = vadd.f32 %v694, %v695
      %v697 = vmul.f32 %v696, %v682
      %v698 = vadd.f32 %v697, 1e-05
      %v699 = vrsqrt.pop %v698
      %v700 = vmul.f32 %v698, %v699
      %vm701 = vcmp.eq.f32.partialorder %v698, inf
      %v702 = vsel %vm701, %v698, %v700
      %vm703 = vcmp.eq.f32.partialorder %v698, 0.0
      %v704 = vand.u32 %v698, 2147483648
      %v705 = vsel %vm703, %v704, %v702
      %v706 = vrcp.pop %v705
      %v707 = vmul.f32 %v684, %v706
      %v708 = vmul.f32 %v685, %v706
      %709 = vst.msk [vmem:[%s669] sm:$0xff] %vm672, %v707
      %710 = vst.msk [vmem:[%s669 + $0x8] sm:$0xff] %vm672, %v708
      %v711 = vld [vmem:[%s1] sm:$0xff]
      %v712 = vld [vmem:[%s1 + $0x8] sm:$0xff]
      %v713 = vld [vmem:[%s1 + $0x10] sm:$0xff]
      %v714 = vld [vmem:[%s1 + $0x18] sm:$0xff]
      %v715 = vld [vmem:[%s1 + $0x20] sm:$0xff]
      %v716 = vld [vmem:[%s1 + $0x28] sm:$0xff]
      %v717 = vld [vmem:[%s1 + $0x30] sm:$0xff]
      %v718 = vld [vmem:[%s1 + $0x38] sm:$0xff]
      %v719 = vld [vmem:[%s1 + $0x40] sm:$0xff]
      %v720 = vld [vmem:[%s2] sm:$0xf]
      %v721 = vld [vmem:[%s2 + $0x4] sm:$0xf]
      %v722 = vld [vmem:[%s2 + $0x8] sm:$0xf]
      %v723 = vld [vmem:[%s3] sm:$0xff]
      %v724 = vld [vmem:[%s3 + $0x8] sm:$0xff]
      %v725 = vld [vmem:[%s3 + $0x10] sm:$0xff]
      %vm726 = vcmask 130048
      %v728 = vsel %vm726, %v711, 0
      %v731 = vsel %vm726, %v712, 0
      %v734 = vsel %vm726, %v713, 0
      %736 = vmatprep.subr.mxu0 0.0
      %737 = vmatpush1.msra.mxu0 0.0
      %738 = vmatprep.subr.mxu0 0.0
      %739 = vmatpush1.msra.mxu0 0.0
      %740 = vmatprep.subr.mxu0 0.0
      %741 = vmatpush1.msra.mxu0 0.0
      %742 = vmatprep.subr.mxu0 0.0
      %743 = vmatpush1.msra.mxu0 0.0
      %744 = vmatprep.subr.mxu0 0.0
      %745 = vmatpush1.msra.mxu0 0.0
      %746 = vmatprep.subr.mxu0 0.0
      %747 = vmatpush1.msra.mxu0 0.0
      %748 = vmatprep.subr.mxu0 0.0
      %749 = vmatpush1.msra.mxu0 0.0
      %750 = vmatprep.subr.mxu0 0.0
      %751 = vmatpush1.msra.mxu0 0.0
      %752 = vmatprep.subr.mxu0 0.0
      %753 = vmatpush1.msra.mxu0 0.0
      %754 = vmatprep.subr.mxu0 0.0
      %755 = vmatpush1.msra.mxu0 0.0
      %756 = vmatprep.subr.mxu0 0.0
      %757 = vmatpush1.msra.mxu0 0.0
      %758 = vmatprep.subr.mxu0 0.0
      %759 = vmatpush1.msra.mxu0 0.0
      %760 = vmatprep.subr.mxu0 0.0
      %761 = vmatpush1.msra.mxu0 0.0
      %762 = vmatprep.subr.mxu0 0.0
      %763 = vmatpush1.msra.mxu0 0.0
      %764 = vmatprep.subr.mxu0 0.0
      %765 = vmatpush1.msra.mxu0 %v708
      %766 = vmatprep.subr.mxu0 0.0
      %767 = vmatpush1.msra.mxu0 %v707
      %768 = vmatprep.subr.mxu0 0.0
      %769 = vmatpush2.msra.mxu0 0.0
      %770 = vmatprep.subr.mxu0 0.0
      %771 = vmatpush2.msra.mxu0 0.0
      %772 = vmatprep.subr.mxu0 0.0
      %773 = vmatpush2.msra.mxu0 0.0
      %774 = vmatprep.subr.mxu0 0.0
      %775 = vmatpush2.msra.mxu0 0.0
      %776 = vmatprep.subr.mxu0 0.0
      %777 = vmatpush2.msra.mxu0 0.0
      %778 = vmatprep.subr.mxu0 0.0
      %779 = vmatpush2.msra.mxu0 0.0
      %780 = vmatprep.subr.mxu0 0.0
      %781 = vmatpush2.msra.mxu0 0.0
      %782 = vmatprep.subr.mxu0 0.0
      %783 = vmatpush2.msra.mxu0 0.0
      %784 = vmatprep.subr.mxu0 0.0
      %785 = vmatpush2.msra.mxu0 0.0
      %786 = vmatprep.subr.mxu0 0.0
      %787 = vmatpush2.msra.mxu0 0.0
      %788 = vmatprep.subr.mxu0 0.0
      %789 = vmatpush2.msra.mxu0 0.0
      %790 = vmatprep.subr.mxu0 0.0
      %791 = vmatpush2.msra.mxu0 0.0
      %792 = vmatprep.subr.mxu0 0.0
      %793 = vmatpush2.msra.mxu0 0.0
      %794 = vmatprep.subr.mxu0 0.0
      %795 = vmatpush2.msra.mxu0 0.0
      %796 = vmatprep.subr.mxu0 0.0
      %797 = vmatpush2.msra.mxu0 0.0
      %798 = vmatprep.subr.mxu0 0.0
      %799 = vmatpush2.msra.mxu0 0.0
      %800 = vmatprep.mubr.f32.mxu0 0.0
      %801 = vmatmul.mubr.f32.gmra.mxu0 %v728
      %v802 = vpop.f32.mrf.mxu0
      %v803 = vadd.f32 0.0, %v802
      %v804 = vpop.f32.mrf.mxu0
      %805 = vmatprep.mubr.f32.mxu0 0.0
      %806 = vmatmul.mubr.f32.gmra.mxu0 %v731
      %v807 = vpop.f32.mrf.mxu0
      %v808 = vadd.f32 0.0, %v807
      %v809 = vpop.f32.mrf.mxu0
      %810 = vmatprep.mubr.f32.mxu0 0.0
      %811 = vmatmul.mubr.f32.gmra.mxu0 %v734
      %v812 = vpop.f32.mrf.mxu0
      %v813 = vadd.f32 0.0, %v812
      %v814 = vpop.f32.mrf.mxu0
      %815 = vdwg.mxu0
      %v817 = vsel %vm672, %v803, 0
      %v820 = vsel %vm672, %v808, 0
      %v823 = vsel %vm672, %v813, 0
      %vm825 = vcmask 1043456
      %v827 = vsel %vm825, %v720, 0
      %829 = vmatprep.subr.mxu0 0.0
      %830 = vmatpush1.msra.mxu0 0.0
      %831 = vmatprep.subr.mxu0 0.0
      %832 = vmatpush1.msra.mxu0 0.0
      %833 = vmatprep.subr.mxu0 0.0
      %834 = vmatpush1.msra.mxu0 0.0
      %835 = vmatprep.subr.mxu0 0.0
      %836 = vmatpush1.msra.mxu0 0.0
      %837 = vmatprep.subr.mxu0 0.0
      %838 = vmatpush1.msra.mxu0 0.0
      %839 = vmatprep.subr.mxu0 0.0
      %840 = vmatpush1.msra.mxu0 0.0
      %841 = vmatprep.subr.mxu0 0.0
      %842 = vmatpush1.msra.mxu0 0.0
      %843 = vmatprep.subr.mxu0 0.0
      %844 = vmatpush1.msra.mxu0 0.0
      %845 = vmatprep.subr.mxu0 0.0
      %846 = vmatpush1.msra.mxu0 0.0
      %847 = vmatprep.subr.mxu0 0.0
      %848 = vmatpush1.msra.mxu0 0.0
      %849 = vmatprep.subr.mxu0 0.0
      %850 = vmatpush1.msra.mxu0 0.0
      %851 = vmatprep.subr.mxu0 0.0
      %852 = vmatpush1.msra.mxu0 0.0
      %853 = vmatprep.subr.mxu0 0.0
      %854 = vmatpush1.msra.mxu0 0.0
      %855 = vmatprep.subr.mxu0 0.0
      %856 = vmatpush1.msra.mxu0 0.0
      %857 = vmatprep.subr.mxu0 0.0
      %858 = vmatpush1.msra.mxu0 0.0
      %859 = vmatprep.subr.mxu0 0.0
      %860 = vmatpush1.msra.mxu0 %v827
      %861 = vmatprep.subr.mxu0 0.0
      %862 = vmatpush2.msra.mxu0 0.0
      %863 = vmatprep.subr.mxu0 0.0
      %864 = vmatpush2.msra.mxu0 0.0
      %865 = vmatprep.subr.mxu0 0.0
      %866 = vmatpush2.msra.mxu0 0.0
      %867 = vmatprep.subr.mxu0 0.0
      %868 = vmatpush2.msra.mxu0 0.0
      %869 = vmatprep.subr.mxu0 0.0
      %870 = vmatpush2.msra.mxu0 0.0
      %871 = vmatprep.subr.mxu0 0.0
      %872 = vmatpush2.msra.mxu0 0.0
      %873 = vmatprep.subr.mxu0 0.0
      %874 = vmatpush2.msra.mxu0 0.0
      %875 = vmatprep.subr.mxu0 0.0
      %876 = vmatpush2.msra.mxu0 0.0
      %877 = vmatprep.subr.mxu0 0.0
      %878 = vmatpush2.msra.mxu0 0.0
      %879 = vmatprep.subr.mxu0 0.0
      %880 = vmatpush2.msra.mxu0 0.0
      %881 = vmatprep.subr.mxu0 0.0
      %882 = vmatpush2.msra.mxu0 0.0
      %883 = vmatprep.subr.mxu0 0.0
      %884 = vmatpush2.msra.mxu0 0.0
      %885 = vmatprep.subr.mxu0 0.0
      %886 = vmatpush2.msra.mxu0 0.0
      %887 = vmatprep.subr.mxu0 0.0
      %888 = vmatpush2.msra.mxu0 0.0
      %889 = vmatprep.subr.mxu0 0.0
      %890 = vmatpush2.msra.mxu0 0.0
      %891 = vmatprep.subr.mxu0 0.0
      %892 = vmatpush2.msra.mxu0 0.0
      %893 = vmatprep.mubr.f32.mxu0 0.0
      %894 = vmatmul.mubr.f32.gmra.mxu0 %v817
      %v895 = vpop.f32.mrf.mxu0
      %v896 = vadd.f32 0.0, %v895
      %v897 = vpop.f32.mrf.mxu0
      %898 = vmatprep.mubr.f32.mxu0 0.0
      %899 = vmatmul.mubr.f32.gmra.mxu0 %v820
      %v900 = vpop.f32.mrf.mxu0
      %v901 = vadd.f32 0.0, %v900
      %v902 = vpop.f32.mrf.mxu0
      %903 = vmatprep.mubr.f32.mxu0 0.0
      %904 = vmatmul.mubr.f32.gmra.mxu0 %v823
      %v905 = vpop.f32.mrf.mxu0
      %v906 = vadd.f32 0.0, %v905
      %v907 = vpop.f32.mrf.mxu0
      %908 = vdwg.mxu0
      %v909 = vadd.f32 %v723, %v896
      %v910 = vadd.f32 %v724, %v901
      %v911 = vadd.f32 %v725, %v906
      %v913 = vsel %vm726, %v714, 0
      %v916 = vsel %vm726, %v715, 0
      %v919 = vsel %vm726, %v716, 0
      %921 = vmatprep.subr.mxu0 0.0
      %922 = vmatpush1.msra.mxu0 0.0
      %923 = vmatprep.subr.mxu0 0.0
      %924 = vmatpush1.msra.mxu0 0.0
      %925 = vmatprep.subr.mxu0 0.0
      %926 = vmatpush1.msra.mxu0 0.0
      %927 = vmatprep.subr.mxu0 0.0
      %928 = vmatpush1.msra.mxu0 0.0
      %929 = vmatprep.subr.mxu0 0.0
      %930 = vmatpush1.msra.mxu0 0.0
      %931 = vmatprep.subr.mxu0 0.0
      %932 = vmatpush1.msra.mxu0 0.0
      %933 = vmatprep.subr.mxu0 0.0
      %934 = vmatpush1.msra.mxu0 0.0
      %935 = vmatprep.subr.mxu0 0.0
      %936 = vmatpush1.msra.mxu0 0.0
      %937 = vmatprep.subr.mxu0 0.0
      %938 = vmatpush1.msra.mxu0 0.0
      %939 = vmatprep.subr.mxu0 0.0
      %940 = vmatpush1.msra.mxu0 0.0
      %941 = vmatprep.subr.mxu0 0.0
      %942 = vmatpush1.msra.mxu0 0.0
      %943 = vmatprep.subr.mxu0 0.0
      %944 = vmatpush1.msra.mxu0 0.0
      %945 = vmatprep.subr.mxu0 0.0
      %946 = vmatpush1.msra.mxu0 0.0
      %947 = vmatprep.subr.mxu0 0.0
      %948 = vmatpush1.msra.mxu0 0.0
      %949 = vmatprep.subr.mxu0 0.0
      %950 = vmatpush1.msra.mxu0 %v708
      %951 = vmatprep.subr.mxu0 0.0
      %952 = vmatpush1.msra.mxu0 %v707
      %953 = vmatprep.subr.mxu0 0.0
      %954 = vmatpush2.msra.mxu0 0.0
      %955 = vmatprep.subr.mxu0 0.0
      %956 = vmatpush2.msra.mxu0 0.0
      %957 = vmatprep.subr.mxu0 0.0
      %958 = vmatpush2.msra.mxu0 0.0
      %959 = vmatprep.subr.mxu0 0.0
      %960 = vmatpush2.msra.mxu0 0.0
      %961 = vmatprep.subr.mxu0 0.0
      %962 = vmatpush2.msra.mxu0 0.0
      %963 = vmatprep.subr.mxu0 0.0
      %964 = vmatpush2.msra.mxu0 0.0
      %965 = vmatprep.subr.mxu0 0.0
      %966 = vmatpush2.msra.mxu0 0.0
      %967 = vmatprep.subr.mxu0 0.0
      %968 = vmatpush2.msra.mxu0 0.0
      %969 = vmatprep.subr.mxu0 0.0
      %970 = vmatpush2.msra.mxu0 0.0
      %971 = vmatprep.subr.mxu0 0.0
      %972 = vmatpush2.msra.mxu0 0.0
      %973 = vmatprep.subr.mxu0 0.0
      %974 = vmatpush2.msra.mxu0 0.0
      %975 = vmatprep.subr.mxu0 0.0
      %976 = vmatpush2.msra.mxu0 0.0
      %977 = vmatprep.subr.mxu0 0.0
      %978 = vmatpush2.msra.mxu0 0.0
      %979 = vmatprep.subr.mxu0 0.0
      %980 = vmatpush2.msra.mxu0 0.0
      %981 = vmatprep.subr.mxu0 0.0
      %982 = vmatpush2.msra.mxu0 0.0
      %983 = vmatprep.subr.mxu0 0.0
      %984 = vmatpush2.msra.mxu0 0.0
      %985 = vmatprep.mubr.f32.mxu0 0.0
      %986 = vmatmul.mubr.f32.gmra.mxu0 %v913
      %v987 = vpop.f32.mrf.mxu0
      %v988 = vadd.f32 0.0, %v987
      %v989 = vpop.f32.mrf.mxu0
      %990 = vmatprep.mubr.f32.mxu0 0.0
      %991 = vmatmul.mubr.f32.gmra.mxu0 %v916
      %v992 = vpop.f32.mrf.mxu0
      %v993 = vadd.f32 0.0, %v992
      %v994 = vpop.f32.mrf.mxu0
      %995 = vmatprep.mubr.f32.mxu0 0.0
      %996 = vmatmul.mubr.f32.gmra.mxu0 %v919
      %v997 = vpop.f32.mrf.mxu0
      %v998 = vadd.f32 0.0, %v997
      %v999 = vpop.f32.mrf.mxu0
      %1000 = vdwg.mxu0
      %v1002 = vsel %vm672, %v988, 0
      %v1005 = vsel %vm672, %v993, 0
      %v1008 = vsel %vm672, %v998, 0
      %v1011 = vsel %vm825, %v721, 0
      %1013 = vmatprep.subr.mxu0 0.0
      %1014 = vmatpush1.msra.mxu0 0.0
      %1015 = vmatprep.subr.mxu0 0.0
      %1016 = vmatpush1.msra.mxu0 0.0
      %1017 = vmatprep.subr.mxu0 0.0
      %1018 = vmatpush1.msra.mxu0 0.0
      %1019 = vmatprep.subr.mxu0 0.0
      %1020 = vmatpush1.msra.mxu0 0.0
      %1021 = vmatprep.subr.mxu0 0.0
      %1022 = vmatpush1.msra.mxu0 0.0
      %1023 = vmatprep.subr.mxu0 0.0
      %1024 = vmatpush1.msra.mxu0 0.0
      %1025 = vmatprep.subr.mxu0 0.0
      %1026 = vmatpush1.msra.mxu0 0.0
      %1027 = vmatprep.subr.mxu0 0.0
      %1028 = vmatpush1.msra.mxu0 0.0
      %1029 = vmatprep.subr.mxu0 0.0
      %1030 = vmatpush1.msra.mxu0 0.0
      %1031 = vmatprep.subr.mxu0 0.0
      %1032 = vmatpush1.msra.mxu0 0.0
      %1033 = vmatprep.subr.mxu0 0.0
      %1034 = vmatpush1.msra.mxu0 0.0
      %1035 = vmatprep.subr.mxu0 0.0
      %1036 = vmatpush1.msra.mxu0 0.0
      %1037 = vmatprep.subr.mxu0 0.0
      %1038 = vmatpush1.msra.mxu0 0.0
      %1039 = vmatprep.subr.mxu0 0.0
      %1040 = vmatpush1.msra.mxu0 0.0
      %1041 = vmatprep.subr.mxu0 0.0
      %1042 = vmatpush1.msra.mxu0 0.0
      %1043 = vmatprep.subr.mxu0 0.0
      %1044 = vmatpush1.msra.mxu0 %v1011
      %1045 = vmatprep.subr.mxu0 0.0
      %1046 = vmatpush2.msra.mxu0 0.0
      %1047 = vmatprep.subr.mxu0 0.0
      %1048 = vmatpush2.msra.mxu0 0.0
      %1049 = vmatprep.subr.mxu0 0.0
      %1050 = vmatpush2.msra.mxu0 0.0
      %1051 = vmatprep.subr.mxu0 0.0
      %1052 = vmatpush2.msra.mxu0 0.0
      %1053 = vmatprep.subr.mxu0 0.0
      %1054 = vmatpush2.msra.mxu0 0.0
      %1055 = vmatprep.subr.mxu0 0.0
      %1056 = vmatpush2.msra.mxu0 0.0
      %1057 = vmatprep.subr.mxu0 0.0
      %1058 = vmatpush2.msra.mxu0 0.0
      %1059 = vmatprep.subr.mxu0 0.0
      %1060 = vmatpush2.msra.mxu0 0.0
      %1061 = vmatprep.subr.mxu0 0.0
      %1062 = vmatpush2.msra.mxu0 0.0
      %1063 = vmatprep.subr.mxu0 0.0
      %1064 = vmatpush2.msra.mxu0 0.0
      %1065 = vmatprep.subr.mxu0 0.0
      %1066 = vmatpush2.msra.mxu0 0.0
      %1067 = vmatprep.subr.mxu0 0.0
      %1068 = vmatpush2.msra.mxu0 0.0
      %1069 = vmatprep.subr.mxu0 0.0
      %1070 = vmatpush2.msra.mxu0 0.0
      %1071 = vmatprep.subr.mxu0 0.0
      %1072 = vmatpush2.msra.mxu0 0.0
      %1073 = vmatprep.subr.mxu0 0.0
      %1074 = vmatpush2.msra.mxu0 0.0
      %1075 = vmatprep.subr.mxu0 0.0
      %1076 = vmatpush2.msra.mxu0 0.0
      %1077 = vmatprep.mubr.f32.mxu0 0.0
      %1078 = vmatmul.mubr.f32.gmra.mxu0 %v1002
      %v1079 = vpop.f32.mrf.mxu0
      %v1080 = vadd.f32 0.0, %v1079
      %v1081 = vpop.f32.mrf.mxu0
      %1082 = vmatprep.mubr.f32.mxu0 0.0
      %1083 = vmatmul.mubr.f32.gmra.mxu0 %v1005
      %v1084 = vpop.f32.mrf.mxu0
      %v1085 = vadd.f32 0.0, %v1084
      %v1086 = vpop.f32.mrf.mxu0
      %1087 = vmatprep.mubr.f32.mxu0 0.0
      %1088 = vmatmul.mubr.f32.gmra.mxu0 %v1008
      %v1089 = vpop.f32.mrf.mxu0
      %v1090 = vadd.f32 0.0, %v1089
      %v1091 = vpop.f32.mrf.mxu0
      %1092 = vdwg.mxu0
      %v1093 = vadd.f32 %v909, %v1080
      %v1094 = vadd.f32 %v910, %v1085
      %v1095 = vadd.f32 %v911, %v1090
      %v1097 = vsel %vm726, %v717, 0
      %v1100 = vsel %vm726, %v718, 0
      %v1103 = vsel %vm726, %v719, 0
      %1105 = vmatprep.subr.mxu0 0.0
      %1106 = vmatpush1.msra.mxu0 0.0
      %1107 = vmatprep.subr.mxu0 0.0
      %1108 = vmatpush1.msra.mxu0 0.0
      %1109 = vmatprep.subr.mxu0 0.0
      %1110 = vmatpush1.msra.mxu0 0.0
      %1111 = vmatprep.subr.mxu0 0.0
      %1112 = vmatpush1.msra.mxu0 0.0
      %1113 = vmatprep.subr.mxu0 0.0
      %1114 = vmatpush1.msra.mxu0 0.0
      %1115 = vmatprep.subr.mxu0 0.0
      %1116 = vmatpush1.msra.mxu0 0.0
      %1117 = vmatprep.subr.mxu0 0.0
      %1118 = vmatpush1.msra.mxu0 0.0
      %1119 = vmatprep.subr.mxu0 0.0
      %1120 = vmatpush1.msra.mxu0 0.0
      %1121 = vmatprep.subr.mxu0 0.0
      %1122 = vmatpush1.msra.mxu0 0.0
      %1123 = vmatprep.subr.mxu0 0.0
      %1124 = vmatpush1.msra.mxu0 0.0
      %1125 = vmatprep.subr.mxu0 0.0
      %1126 = vmatpush1.msra.mxu0 0.0
      %1127 = vmatprep.subr.mxu0 0.0
      %1128 = vmatpush1.msra.mxu0 0.0
      %1129 = vmatprep.subr.mxu0 0.0
      %1130 = vmatpush1.msra.mxu0 0.0
      %1131 = vmatprep.subr.mxu0 0.0
      %1132 = vmatpush1.msra.mxu0 0.0
      %1133 = vmatprep.subr.mxu0 0.0
      %1134 = vmatpush1.msra.mxu0 %v708
      %1135 = vmatprep.subr.mxu0 0.0
      %1136 = vmatpush1.msra.mxu0 %v707
      %1137 = vmatprep.subr.mxu0 0.0
      %1138 = vmatpush2.msra.mxu0 0.0
      %1139 = vmatprep.subr.mxu0 0.0
      %1140 = vmatpush2.msra.mxu0 0.0
      %1141 = vmatprep.subr.mxu0 0.0
      %1142 = vmatpush2.msra.mxu0 0.0
      %1143 = vmatprep.subr.mxu0 0.0
      %1144 = vmatpush2.msra.mxu0 0.0
      %1145 = vmatprep.subr.mxu0 0.0
      %1146 = vmatpush2.msra.mxu0 0.0
      %1147 = vmatprep.subr.mxu0 0.0
      %1148 = vmatpush2.msra.mxu0 0.0
      %1149 = vmatprep.subr.mxu0 0.0
      %1150 = vmatpush2.msra.mxu0 0.0
      %1151 = vmatprep.subr.mxu0 0.0
      %1152 = vmatpush2.msra.mxu0 0.0
      %1153 = vmatprep.subr.mxu0 0.0
      %1154 = vmatpush2.msra.mxu0 0.0
      %1155 = vmatprep.subr.mxu0 0.0
      %1156 = vmatpush2.msra.mxu0 0.0
      %1157 = vmatprep.subr.mxu0 0.0
      %1158 = vmatpush2.msra.mxu0 0.0
      %1159 = vmatprep.subr.mxu0 0.0
      %1160 = vmatpush2.msra.mxu0 0.0
      %1161 = vmatprep.subr.mxu0 0.0
      %1162 = vmatpush2.msra.mxu0 0.0
      %1163 = vmatprep.subr.mxu0 0.0
      %1164 = vmatpush2.msra.mxu0 0.0
      %1165 = vmatprep.subr.mxu0 0.0
      %1166 = vmatpush2.msra.mxu0 0.0
      %1167 = vmatprep.subr.mxu0 0.0
      %1168 = vmatpush2.msra.mxu0 0.0
      %1169 = vmatprep.mubr.f32.mxu0 0.0
      %1170 = vmatmul.mubr.f32.gmra.mxu0 %v1097
      %v1171 = vpop.f32.mrf.mxu0
      %v1172 = vadd.f32 0.0, %v1171
      %v1173 = vpop.f32.mrf.mxu0
      %1174 = vmatprep.mubr.f32.mxu0 0.0
      %1175 = vmatmul.mubr.f32.gmra.mxu0 %v1100
      %v1176 = vpop.f32.mrf.mxu0
      %v1177 = vadd.f32 0.0, %v1176
      %v1178 = vpop.f32.mrf.mxu0
      %1179 = vmatprep.mubr.f32.mxu0 0.0
      %1180 = vmatmul.mubr.f32.gmra.mxu0 %v1103
      %v1181 = vpop.f32.mrf.mxu0
      %v1182 = vadd.f32 0.0, %v1181
      %v1183 = vpop.f32.mrf.mxu0
      %1184 = vdwg.mxu0
      %v1186 = vsel %vm672, %v1172, 0
      %v1189 = vsel %vm672, %v1177, 0
      %v1192 = vsel %vm672, %v1182, 0
      %v1195 = vsel %vm825, %v722, 0
      %1197 = vmatprep.subr.mxu0 0.0
      %1198 = vmatpush1.msra.mxu0 0.0
      %1199 = vmatprep.subr.mxu0 0.0
      %1200 = vmatpush1.msra.mxu0 0.0
      %1201 = vmatprep.subr.mxu0 0.0
      %1202 = vmatpush1.msra.mxu0 0.0
      %1203 = vmatprep.subr.mxu0 0.0
      %1204 = vmatpush1.msra.mxu0 0.0
      %1205 = vmatprep.subr.mxu0 0.0
      %1206 = vmatpush1.msra.mxu0 0.0
      %1207 = vmatprep.subr.mxu0 0.0
      %1208 = vmatpush1.msra.mxu0 0.0
      %1209 = vmatprep.subr.mxu0 0.0
      %1210 = vmatpush1.msra.mxu0 0.0
      %1211 = vmatprep.subr.mxu0 0.0
      %1212 = vmatpush1.msra.mxu0 0.0
      %1213 = vmatprep.subr.mxu0 0.0
      %1214 = vmatpush1.msra.mxu0 0.0
      %1215 = vmatprep.subr.mxu0 0.0
      %1216 = vmatpush1.msra.mxu0 0.0
      %1217 = vmatprep.subr.mxu0 0.0
      %1218 = vmatpush1.msra.mxu0 0.0
      %1219 = vmatprep.subr.mxu0 0.0
      %1220 = vmatpush1.msra.mxu0 0.0
      %1221 = vmatprep.subr.mxu0 0.0
      %1222 = vmatpush1.msra.mxu0 0.0
      %1223 = vmatprep.subr.mxu0 0.0
      %1224 = vmatpush1.msra.mxu0 0.0
      %1225 = vmatprep.subr.mxu0 0.0
      %1226 = vmatpush1.msra.mxu0 0.0
      %1227 = vmatprep.subr.mxu0 0.0
      %1228 = vmatpush1.msra.mxu0 %v1195
      %1229 = vmatprep.subr.mxu0 0.0
      %1230 = vmatpush2.msra.mxu0 0.0
      %1231 = vmatprep.subr.mxu0 0.0
      %1232 = vmatpush2.msra.mxu0 0.0
      %1233 = vmatprep.subr.mxu0 0.0
      %1234 = vmatpush2.msra.mxu0 0.0
      %1235 = vmatprep.subr.mxu0 0.0
      %1236 = vmatpush2.msra.mxu0 0.0
      %1237 = vmatprep.subr.mxu0 0.0
      %1238 = vmatpush2.msra.mxu0 0.0
      %1239 = vmatprep.subr.mxu0 0.0
      %1240 = vmatpush2.msra.mxu0 0.0
      %1241 = vmatprep.subr.mxu0 0.0
      %1242 = vmatpush2.msra.mxu0 0.0
      %1243 = vmatprep.subr.mxu0 0.0
      %1244 = vmatpush2.msra.mxu0 0.0
      %1245 = vmatprep.subr.mxu0 0.0
      %1246 = vmatpush2.msra.mxu0 0.0
      %1247 = vmatprep.subr.mxu0 0.0
      %1248 = vmatpush2.msra.mxu0 0.0
      %1249 = vmatprep.subr.mxu0 0.0
      %1250 = vmatpush2.msra.mxu0 0.0
      %1251 = vmatprep.subr.mxu0 0.0
      %1252 = vmatpush2.msra.mxu0 0.0
      %1253 = vmatprep.subr.mxu0 0.0
      %1254 = vmatpush2.msra.mxu0 0.0
      %1255 = vmatprep.subr.mxu0 0.0
      %1256 = vmatpush2.msra.mxu0 0.0
      %1257 = vmatprep.subr.mxu0 0.0
      %1258 = vmatpush2.msra.mxu0 0.0
      %1259 = vmatprep.subr.mxu0 0.0
      %1260 = vmatpush2.msra.mxu0 0.0
      %1261 = vmatprep.mubr.f32.mxu0 0.0
      %1262 = vmatmul.mubr.f32.gmra.mxu0 %v1186
      %v1263 = vpop.f32.mrf.mxu0
      %v1264 = vadd.f32 0.0, %v1263
      %v1265 = vpop.f32.mrf.mxu0
      %1266 = vmatprep.mubr.f32.mxu0 0.0
      %1267 = vmatmul.mubr.f32.gmra.mxu0 %v1189
      %v1268 = vpop.f32.mrf.mxu0
      %v1269 = vadd.f32 0.0, %v1268
      %v1270 = vpop.f32.mrf.mxu0
      %1271 = vmatprep.mubr.f32.mxu0 0.0
      %1272 = vmatmul.mubr.f32.gmra.mxu0 %v1192
      %v1273 = vpop.f32.mrf.mxu0
      %v1274 = vadd.f32 0.0, %v1273
      %v1275 = vpop.f32.mrf.mxu0
      %1276 = vdwg.mxu0
      %v1277 = vadd.f32 %v1093, %v1264
      %v1278 = vadd.f32 %v1094, %v1269
      %v1279 = vadd.f32 %v1095, %v1274
      %v1280 = vlaneseq
      %v1281 = vshrl.u32 %v1280, 7
      %v1282 = vadd.s32 %v1281, 8
      %v1283 = vadd.s32 %v1281, 16
      %v1284 = vlaneseq
      %v1285 = vand.u32 %v1284, 127
      %vm1286 = vcmp.le.s32.totalorder %v1285, %v1281
      %vm1287 = vcmp.le.s32.totalorder %v1285, %v1282
      %vm1288 = vcmp.le.s32.totalorder %v1285, %v1283
      %v1289 = vsel %vm1286, 0.0, -1e+30
      %v1290 = vsel %vm1287, 0.0, -1e+30
      %v1291 = vsel %vm1288, 0.0, -1e+30
      %v1292 = vld [vmem:[%s4] sm:$0x1]
      %v1293 = vld [vmem:[%s5] sm:$0x1]
      %vm1294 = vcmask 523264
      %v1295 = vsel %vm1294, %v1277, 0.0
      %1296 = vadd.xlane.f32.xlu0 %v1295
      %v1297 = vpop.xlane.xlu0 %1296
      %v1298 = vsel %vm1294, %v1278, 0.0
      %1299 = vadd.xlane.f32.xlu0 %v1298
      %v1300 = vpop.xlane.xlu0 %1299
      %v1301 = vsel %vm1294, %v1279, 0.0
      %1302 = vadd.xlane.f32.xlu0 %v1301
      %v1303 = vpop.xlane.xlu0 %1302
      %v1304 = vrcp.pop 64.0
      %v1305 = vmul.f32 %v1297, %v1304
      %v1306 = vmul.f32 %v1300, %v1304
      %v1307 = vmul.f32 %v1303, %v1304
      %v1308 = vsub.f32 %v1277, %v1305
      %v1309 = vsub.f32 %v1278, %v1306
      %v1310 = vsub.f32 %v1279, %v1307
      %v1311 = vmul.f32 %v1308, %v1308
      %v1312 = vmul.f32 %v1309, %v1309
      %v1313 = vmul.f32 %v1310, %v1310
      %v1314 = vsel %vm1294, %v1311, 0.0
      %1315 = vadd.xlane.f32.xlu0 %v1314
      %v1316 = vpop.xlane.xlu0 %1315
      %v1317 = vsel %vm1294, %v1312, 0.0
      %1318 = vadd.xlane.f32.xlu0 %v1317
      %v1319 = vpop.xlane.xlu0 %1318
      %v1320 = vsel %vm1294, %v1313, 0.0
      %1321 = vadd.xlane.f32.xlu0 %v1320
      %v1322 = vpop.xlane.xlu0 %1321
      %v1323 = vmul.f32 %v1316, %v1304
      %v1324 = vmul.f32 %v1319, %v1304
      %v1325 = vmul.f32 %v1322, %v1304
      %v1326 = vadd.f32 %v1323, 1e-05
      %v1327 = vadd.f32 %v1324, 1e-05
      %v1328 = vadd.f32 %v1325, 1e-05
      %v1329 = vrsqrt.pop %v1326
      %v1330 = vrsqrt.pop %v1327
      %v1331 = vrsqrt.pop %v1328
      %v1332 = vmul.f32 %v1308, %v1329
      %v1333 = vmul.f32 %v1309, %v1330
      %v1334 = vmul.f32 %v1310, %v1331
      %v1336 = vlaneseq
      %v1337 = vshrl.u32 %v1336, 7
      %v1338 = vsub.s32 0, %v1337
      %v1339 = vrot.slane %v1292, %v1338
      %v1341 = vmul.f32 %v1332, %v1339
      %v1342 = vmul.f32 %v1333, %v1339
      %v1343 = vmul.f32 %v1334, %v1339
      %v1345 = vlaneseq
      %v1346 = vshrl.u32 %v1345, 7
      %v1347 = vsub.s32 0, %v1346
      %v1348 = vrot.slane %v1293, %v1347
      %v1350 = vadd.f32 %v1341, %v1348
      %v1351 = vadd.f32 %v1342, %v1348
      %v1352 = vadd.f32 %v1343, %v1348
      %v1353 = vld [vmem:[%s6] sm:$0xff]
      %v1354 = vld [vmem:[%s6 + $0x8] sm:$0xff]
      %v1355 = vld [vmem:[%s6 + $0x10] sm:$0xff]
      %v1356 = vld [vmem:[%s6 + $0x18] sm:$0xff]
      %v1357 = vld [vmem:[%s6 + $0x20] sm:$0xff]
      %v1358 = vld [vmem:[%s6 + $0x28] sm:$0xff]
      %v1359 = vld [vmem:[%s6 + $0x30] sm:$0xff]
      %v1360 = vld [vmem:[%s6 + $0x38] sm:$0xff]
      %v1361 = vld [vmem:[%s6 + $0x40] sm:$0xff]
      %v1362 = vld [vmem:[%s6 + $0x48] sm:$0xff]
      %v1363 = vld [vmem:[%s6 + $0x50] sm:$0xff]
      %v1364 = vld [vmem:[%s6 + $0x58] sm:$0xff]
      %v1365 = vld [vmem:[%s6 + $0x60] sm:$0xff]
      %v1366 = vld [vmem:[%s6 + $0x68] sm:$0xff]
      %v1367 = vld [vmem:[%s6 + $0x70] sm:$0xff]
      %v1368 = vld [vmem:[%s6 + $0x78] sm:$0xff]
      %v1369 = vld [vmem:[%s7] sm:$0x3]
      %v1371 = vlaneseq
      %v1372 = vshrl.u32 %v1371, 7
      %v1373 = vsub.s32 0, %v1372
      %v1374 = vrot.slane %v1369, %v1373
      %v1375 = vlaneseq
      %v1376 = vshrl.u32 %v1375, 7
      %v1377 = vsub.s32 1, %v1376
      %v1378 = vrot.slane %v1369, %v1377
      %v1382 = vsel %vm1294, %v1350, 0
      %v1385 = vsel %vm1294, %v1351, 0
      %v1388 = vsel %vm1294, %v1352, 0
      %1390 = vmatprep.subr.mxu0 0.0
      %1391 = vmatpush1.msra.mxu0 0.0
      %1392 = vmatprep.subr.mxu0 0.0
      %1393 = vmatpush1.msra.mxu0 0.0
      %1394 = vmatprep.subr.mxu0 0.0
      %1395 = vmatpush1.msra.mxu0 0.0
      %1396 = vmatprep.subr.mxu0 0.0
      %1397 = vmatpush1.msra.mxu0 0.0
      %1398 = vmatprep.subr.mxu0 0.0
      %1399 = vmatpush1.msra.mxu0 0.0
      %1400 = vmatprep.subr.mxu0 0.0
      %1401 = vmatpush1.msra.mxu0 0.0
      %1402 = vmatprep.subr.mxu0 0.0
      %1403 = vmatpush1.msra.mxu0 0.0
      %1404 = vmatprep.subr.mxu0 0.0
      %1405 = vmatpush1.msra.mxu0 0.0
      %1406 = vmatprep.subr.mxu0 %v1368
      %1407 = vmatpush1.msra.mxu0 %v1367
      %1408 = vmatprep.subr.mxu0 %v1366
      %1409 = vmatpush1.msra.mxu0 %v1365
      %1410 = vmatprep.subr.mxu0 %v1364
      %1411 = vmatpush1.msra.mxu0 %v1363
      %1412 = vmatprep.subr.mxu0 %v1362
      %1413 = vmatpush1.msra.mxu0 %v1361
      %1414 = vmatprep.subr.mxu0 %v1360
      %1415 = vmatpush1.msra.mxu0 %v1359
      %1416 = vmatprep.subr.mxu0 %v1358
      %1417 = vmatpush1.msra.mxu0 %v1357
      %1418 = vmatprep.subr.mxu0 %v1356
      %1419 = vmatpush1.msra.mxu0 %v1355
      %1420 = vmatprep.subr.mxu0 %v1354
      %1421 = vmatpush1.msra.mxu0 %v1353
      %1422 = vmatprep.subr.mxu0 0.0
      %1423 = vmatpush2.msra.mxu0 0.0
      %1424 = vmatprep.subr.mxu0 0.0
      %1425 = vmatpush2.msra.mxu0 0.0
      %1426 = vmatprep.subr.mxu0 0.0
      %1427 = vmatpush2.msra.mxu0 0.0
      %1428 = vmatprep.subr.mxu0 0.0
      %1429 = vmatpush2.msra.mxu0 0.0
      %1430 = vmatprep.subr.mxu0 0.0
      %1431 = vmatpush2.msra.mxu0 0.0
      %1432 = vmatprep.subr.mxu0 0.0
      %1433 = vmatpush2.msra.mxu0 0.0
      %1434 = vmatprep.subr.mxu0 0.0
      %1435 = vmatpush2.msra.mxu0 0.0
      %1436 = vmatprep.subr.mxu0 0.0
      %1437 = vmatpush2.msra.mxu0 0.0
      %1438 = vmatprep.subr.mxu0 0.0
      %1439 = vmatpush2.msra.mxu0 0.0
      %1440 = vmatprep.subr.mxu0 0.0
      %1441 = vmatpush2.msra.mxu0 0.0
      %1442 = vmatprep.subr.mxu0 0.0
      %1443 = vmatpush2.msra.mxu0 0.0
      %1444 = vmatprep.subr.mxu0 0.0
      %1445 = vmatpush2.msra.mxu0 0.0
      %1446 = vmatprep.subr.mxu0 0.0
      %1447 = vmatpush2.msra.mxu0 0.0
      %1448 = vmatprep.subr.mxu0 0.0
      %1449 = vmatpush2.msra.mxu0 0.0
      %1450 = vmatprep.subr.mxu0 0.0
      %1451 = vmatpush2.msra.mxu0 0.0
      %1452 = vmatprep.subr.mxu0 0.0
      %1453 = vmatpush2.msra.mxu0 0.0
      %1454 = vmatprep.mubr.f32.mxu0 0.0
      %1455 = vmatmul.mubr.f32.gmra.mxu0 %v1382
      %v1456 = vpop.f32.mrf.mxu0
      %v1457 = vadd.f32 %v1374, %v1456
      %v1458 = vpop.f32.mrf.mxu0
      %v1459 = vadd.f32 %v1378, %v1458
      %1460 = vmatprep.mubr.f32.mxu0 0.0
      %1461 = vmatmul.mubr.f32.gmra.mxu0 %v1385
      %v1462 = vpop.f32.mrf.mxu0
      %v1463 = vadd.f32 %v1374, %v1462
      %v1464 = vpop.f32.mrf.mxu0
      %v1465 = vadd.f32 %v1378, %v1464
      %1466 = vmatprep.mubr.f32.mxu0 0.0
      %1467 = vmatmul.mubr.f32.gmra.mxu0 %v1388
      %v1468 = vpop.f32.mrf.mxu0
      %v1469 = vadd.f32 %v1374, %v1468
      %v1470 = vpop.f32.mrf.mxu0
      %v1471 = vadd.f32 %v1378, %v1470
      %1472 = vdwg.mxu0
      %v1473 = vld [vmem:[%s8] sm:$0xff]
      %v1474 = vld [vmem:[%s8 + $0x8] sm:$0xff]
      %v1475 = vld [vmem:[%s8 + $0x10] sm:$0xff]
      %v1476 = vld [vmem:[%s8 + $0x18] sm:$0xff]
      %v1477 = vld [vmem:[%s8 + $0x20] sm:$0xff]
      %v1478 = vld [vmem:[%s8 + $0x28] sm:$0xff]
      %v1479 = vld [vmem:[%s8 + $0x30] sm:$0xff]
      %v1480 = vld [vmem:[%s8 + $0x38] sm:$0xff]
      %1484 = vrot.lane.b32.xlu0 %v1457, 64
      %v1485 = vpop.permute.xlu0 %1484
      %1486 = vrot.lane.b32.xlu0 %v1463, 64
      %v1487 = vpop.permute.xlu0 %1486
      %1488 = vrot.lane.b32.xlu0 %v1469, 64
      %v1489 = vpop.permute.xlu0 %1488
      %v1490 = vsel %vm726, %v1457, 0
      %v1492 = vsel %vm726, %v1463, 0
      %v1494 = vsel %vm726, %v1469, 0
      %v1496 = vsel %vm726, %v1485, 0
      %v1498 = vsel %vm726, %v1487, 0
      %v1500 = vsel %vm726, %v1489, 0
      %1502 = vmatprep.subr.mxu0 0.0
      %1503 = vmatpush1.xpose.msra.mxu0 0.0
      %1504 = vmatprep.subr.mxu0 0.0
      %1505 = vmatpush1.xpose.msra.mxu0 0.0
      %1506 = vmatprep.subr.mxu0 0.0
      %1507 = vmatpush1.xpose.msra.mxu0 0.0
      %1508 = vmatprep.subr.mxu0 0.0
      %1509 = vmatpush1.xpose.msra.mxu0 0.0
      %1510 = vmatprep.subr.mxu0 0.0
      %1511 = vmatpush1.xpose.msra.mxu0 0.0
      %1512 = vmatprep.subr.mxu0 0.0
      %1513 = vmatpush1.xpose.msra.mxu0 0.0
      %1514 = vmatprep.subr.mxu0 0.0
      %1515 = vmatpush1.xpose.msra.mxu0 0.0
      %1516 = vmatprep.subr.mxu0 0.0
      %1517 = vmatpush1.xpose.msra.mxu0 0.0
      %1518 = vmatprep.subr.mxu0 0.0
      %1519 = vmatpush1.xpose.msra.mxu0 0.0
      %1520 = vmatprep.subr.mxu0 0.0
      %1521 = vmatpush1.xpose.msra.mxu0 0.0
      %1522 = vmatprep.subr.mxu0 0.0
      %1523 = vmatpush1.xpose.msra.mxu0 0.0
      %1524 = vmatprep.subr.mxu0 0.0
      %1525 = vmatpush1.xpose.msra.mxu0 0.0
      %1526 = vmatprep.subr.mxu0 0.0
      %1527 = vmatpush1.xpose.msra.mxu0 0.0
      %1528 = vmatprep.subr.mxu0 0.0
      %1529 = vmatpush1.xpose.msra.mxu0 %v1500
      %1530 = vmatprep.subr.mxu0 0.0
      %1531 = vmatpush1.xpose.msra.mxu0 %v1498
      %1532 = vmatprep.subr.mxu0 0.0
      %1533 = vmatpush1.xpose.msra.mxu0 %v1496
      %1534 = vmatprep.subr.mxu0 0.0
      %1535 = vmatpush2.xpose.msra.mxu0 0.0
      %1536 = vmatprep.subr.mxu0 0.0
      %1537 = vmatpush2.xpose.msra.mxu0 0.0
      %1538 = vmatprep.subr.mxu0 0.0
      %1539 = vmatpush2.xpose.msra.mxu0 0.0
      %1540 = vmatprep.subr.mxu0 0.0
      %1541 = vmatpush2.xpose.msra.mxu0 0.0
      %1542 = vmatprep.subr.mxu0 0.0
      %1543 = vmatpush2.xpose.msra.mxu0 0.0
      %1544 = vmatprep.subr.mxu0 0.0
      %1545 = vmatpush2.xpose.msra.mxu0 0.0
      %1546 = vmatprep.subr.mxu0 0.0
      %1547 = vmatpush2.xpose.msra.mxu0 0.0
      %1548 = vmatprep.subr.mxu0 0.0
      %1549 = vmatpush2.xpose.msra.mxu0 0.0
      %1550 = vmatprep.subr.mxu0 0.0
      %1551 = vmatpush2.xpose.msra.mxu0 0.0
      %1552 = vmatprep.subr.mxu0 0.0
      %1553 = vmatpush2.xpose.msra.mxu0 0.0
      %1554 = vmatprep.subr.mxu0 0.0
      %1555 = vmatpush2.xpose.msra.mxu0 0.0
      %1556 = vmatprep.subr.mxu0 0.0
      %1557 = vmatpush2.xpose.msra.mxu0 0.0
      %1558 = vmatprep.subr.mxu0 0.0
      %1559 = vmatpush2.xpose.msra.mxu0 0.0
      %1560 = vmatprep.subr.mxu0 0.0
      %1561 = vmatpush2.xpose.msra.mxu0 0.0
      %1562 = vmatprep.subr.mxu0 0.0
      %1563 = vmatpush2.xpose.msra.mxu0 0.0
      %1564 = vmatprep.subr.mxu0 0.0
      %1565 = vmatpush2.xpose.msra.mxu0 0.0
      %1566 = vmatprep.mubr.f32.mxu0 0.0
      %1567 = vmatmul.mubr.f32.gmra.mxu0 %v1490
      %v1568 = vpop.f32.mrf.mxu0
      %v1569 = vadd.f32 0.0, %v1568
      %v1570 = vpop.f32.mrf.mxu0
      %1571 = vmatprep.mubr.f32.mxu0 0.0
      %1572 = vmatmul.mubr.f32.gmra.mxu0 %v1492
      %v1573 = vpop.f32.mrf.mxu0
      %v1574 = vadd.f32 0.0, %v1573
      %v1575 = vpop.f32.mrf.mxu0
      %1576 = vmatprep.mubr.f32.mxu0 0.0
      %1577 = vmatmul.mubr.f32.gmra.mxu0 %v1494
      %v1578 = vpop.f32.mrf.mxu0
      %v1579 = vadd.f32 0.0, %v1578
      %v1580 = vpop.f32.mrf.mxu0
      %1581 = vdwg.mxu0
      %v1582 = vmul.f32 %v1569, 0.25
      %v1583 = vmul.f32 %v1574, 0.25
      %v1584 = vmul.f32 %v1579, 0.25
      %v1585 = vadd.f32 %v1582, %v1289
      %v1586 = vadd.f32 %v1583, %v1290
      %v1587 = vadd.f32 %v1584, %v1291
      %vm1588 = vcmask 195584
      %v1589 = vsel %vm1588, %v1585, -inf
      %1590 = vmax.xlane.f32.xlu0 %v1589
      %v1591 = vpop.xlane.xlu0 %1590
      %v1592 = vsel %vm1588, %v1586, -inf
      %1593 = vmax.xlane.f32.xlu0 %v1592
      %v1594 = vpop.xlane.xlu0 %1593
      %v1595 = vsel %vm1588, %v1587, -inf
      %1596 = vmax.xlane.f32.xlu0 %v1595
      %v1597 = vpop.xlane.xlu0 %1596
      %v1598 = vsub.f32 %v1585, %v1591
      %v1599 = vsub.f32 %v1586, %v1594
      %v1600 = vsub.f32 %v1587, %v1597
      %v1601 = vmul.f32 %v1598, 1.442695
      %v1602 = vpow.pop %v1601
      %v1603 = vmul.f32 %v1599, 1.442695
      %v1604 = vpow.pop %v1603
      %v1605 = vmul.f32 %v1600, 1.442695
      %v1606 = vpow.pop %v1605
      %v1607 = vsel %vm1588, %v1602, 0.0
      %1608 = vadd.xlane.f32.xlu0 %v1607
      %v1609 = vpop.xlane.xlu0 %1608
      %v1610 = vsel %vm1588, %v1604, 0.0
      %1611 = vadd.xlane.f32.xlu0 %v1610
      %v1612 = vpop.xlane.xlu0 %1611
      %v1613 = vsel %vm1588, %v1606, 0.0
      %1614 = vadd.xlane.f32.xlu0 %v1613
      %v1615 = vpop.xlane.xlu0 %1614
      %v1616 = vrcp.pop %v1609
      %v1617 = vrcp.pop %v1612
      %v1618 = vrcp.pop %v1615
      %v1619 = vmul.f32 %v1602, %v1616
      %v1620 = vmul.f32 %v1604, %v1617
      %v1621 = vmul.f32 %v1606, %v1618
      %v1623 = vsel %vm1588, %v1619, 0
      %v1626 = vsel %vm1588, %v1620, 0
      %v1629 = vsel %vm1588, %v1621, 0
      %1631 = vmatprep.subr.mxu0 0.0
      %1632 = vmatpush1.msra.mxu0 0.0
      %1633 = vmatprep.subr.mxu0 0.0
      %1634 = vmatpush1.msra.mxu0 0.0
      %1635 = vmatprep.subr.mxu0 0.0
      %1636 = vmatpush1.msra.mxu0 0.0
      %1637 = vmatprep.subr.mxu0 0.0
      %1638 = vmatpush1.msra.mxu0 0.0
      %1639 = vmatprep.subr.mxu0 0.0
      %1640 = vmatpush1.msra.mxu0 0.0
      %1641 = vmatprep.subr.mxu0 0.0
      %1642 = vmatpush1.msra.mxu0 0.0
      %1643 = vmatprep.subr.mxu0 0.0
      %1644 = vmatpush1.msra.mxu0 0.0
      %1645 = vmatprep.subr.mxu0 0.0
      %1646 = vmatpush1.msra.mxu0 0.0
      %1647 = vmatprep.subr.mxu0 0.0
      %1648 = vmatpush1.msra.mxu0 0.0
      %1649 = vmatprep.subr.mxu0 0.0
      %1650 = vmatpush1.msra.mxu0 0.0
      %1651 = vmatprep.subr.mxu0 0.0
      %1652 = vmatpush1.msra.mxu0 0.0
      %1653 = vmatprep.subr.mxu0 0.0
      %1654 = vmatpush1.msra.mxu0 0.0
      %1655 = vmatprep.subr.mxu0 0.0
      %1656 = vmatpush1.msra.mxu0 0.0
      %1657 = vmatprep.subr.mxu0 0.0
      %1658 = vmatpush1.msra.mxu0 %v1471
      %1659 = vmatprep.subr.mxu0 0.0
      %1660 = vmatpush1.msra.mxu0 %v1465
      %1661 = vmatprep.subr.mxu0 0.0
      %1662 = vmatpush1.msra.mxu0 %v1459
      %1663 = vmatprep.subr.mxu0 0.0
      %1664 = vmatpush2.msra.mxu0 0.0
      %1665 = vmatprep.subr.mxu0 0.0
      %1666 = vmatpush2.msra.mxu0 0.0
      %1667 = vmatprep.subr.mxu0 0.0
      %1668 = vmatpush2.msra.mxu0 0.0
      %1669 = vmatprep.subr.mxu0 0.0
      %1670 = vmatpush2.msra.mxu0 0.0
      %1671 = vmatprep.subr.mxu0 0.0
      %1672 = vmatpush2.msra.mxu0 0.0
      %1673 = vmatprep.subr.mxu0 0.0
      %1674 = vmatpush2.msra.mxu0 0.0
      %1675 = vmatprep.subr.mxu0 0.0
      %1676 = vmatpush2.msra.mxu0 0.0
      %1677 = vmatprep.subr.mxu0 0.0
      %1678 = vmatpush2.msra.mxu0 0.0
      %1679 = vmatprep.subr.mxu0 0.0
      %1680 = vmatpush2.msra.mxu0 0.0
      %1681 = vmatprep.subr.mxu0 0.0
      %1682 = vmatpush2.msra.mxu0 0.0
      %1683 = vmatprep.subr.mxu0 0.0
      %1684 = vmatpush2.msra.mxu0 0.0
      %1685 = vmatprep.subr.mxu0 0.0
      %1686 = vmatpush2.msra.mxu0 0.0
      %1687 = vmatprep.subr.mxu0 0.0
      %1688 = vmatpush2.msra.mxu0 0.0
      %1689 = vmatprep.subr.mxu0 0.0
      %1690 = vmatpush2.msra.mxu0 0.0
      %1691 = vmatprep.subr.mxu0 0.0
      %1692 = vmatpush2.msra.mxu0 0.0
      %1693 = vmatprep.subr.mxu0 0.0
      %1694 = vmatpush2.msra.mxu0 0.0
      %1695 = vmatprep.mubr.f32.mxu0 0.0
      %1696 = vmatmul.mubr.f32.gmra.mxu0 %v1623
      %v1697 = vpop.f32.mrf.mxu0
      %v1698 = vadd.f32 0.0, %v1697
      %v1699 = vpop.f32.mrf.mxu0
      %1700 = vmatprep.mubr.f32.mxu0 0.0
      %1701 = vmatmul.mubr.f32.gmra.mxu0 %v1626
      %v1702 = vpop.f32.mrf.mxu0
      %v1703 = vadd.f32 0.0, %v1702
      %v1704 = vpop.f32.mrf.mxu0
      %1705 = vmatprep.mubr.f32.mxu0 0.0
      %1706 = vmatmul.mubr.f32.gmra.mxu0 %v1629
      %v1707 = vpop.f32.mrf.mxu0
      %v1708 = vadd.f32 0.0, %v1707
      %v1709 = vpop.f32.mrf.mxu0
      %1710 = vdwg.mxu0
      %1711 = vrot.lane.b32.xlu0 %v1457, 112
      %v1712 = vpop.permute.xlu0 %1711
      %1713 = vrot.lane.b32.xlu0 %v1463, 112
      %v1714 = vpop.permute.xlu0 %1713
      %1715 = vrot.lane.b32.xlu0 %v1469, 112
      %v1716 = vpop.permute.xlu0 %1715
      %1717 = vrot.lane.b32.xlu0 %v1457, 48
      %v1718 = vpop.permute.xlu0 %1717
      %1719 = vrot.lane.b32.xlu0 %v1463, 48
      %v1720 = vpop.permute.xlu0 %1719
      %1721 = vrot.lane.b32.xlu0 %v1469, 48
      %v1722 = vpop.permute.xlu0 %1721
      %v1723 = vsel %vm726, %v1712, 0
      %v1725 = vsel %vm726, %v1714, 0
      %v1727 = vsel %vm726, %v1716, 0
      %v1729 = vsel %vm726, %v1718, 0
      %v1731 = vsel %vm726, %v1720, 0
      %v1733 = vsel %vm726, %v1722, 0
      %1735 = vmatprep.subr.mxu0 0.0
      %1736 = vmatpush1.xpose.msra.mxu0 0.0
      %1737 = vmatprep.subr.mxu0 0.0
      %1738 = vmatpush1.xpose.msra.mxu0 0.0
      %1739 = vmatprep.subr.mxu0 0.0
      %1740 = vmatpush1.xpose.msra.mxu0 0.0
      %1741 = vmatprep.subr.mxu0 0.0
      %1742 = vmatpush1.xpose.msra.mxu0 0.0
      %1743 = vmatprep.subr.mxu0 0.0
      %1744 = vmatpush1.xpose.msra.mxu0 0.0
      %1745 = vmatprep.subr.mxu0 0.0
      %1746 = vmatpush1.xpose.msra.mxu0 0.0
      %1747 = vmatprep.subr.mxu0 0.0
      %1748 = vmatpush1.xpose.msra.mxu0 0.0
      %1749 = vmatprep.subr.mxu0 0.0
      %1750 = vmatpush1.xpose.msra.mxu0 0.0
      %1751 = vmatprep.subr.mxu0 0.0
      %1752 = vmatpush1.xpose.msra.mxu0 0.0
      %1753 = vmatprep.subr.mxu0 0.0
      %1754 = vmatpush1.xpose.msra.mxu0 0.0
      %1755 = vmatprep.subr.mxu0 0.0
      %1756 = vmatpush1.xpose.msra.mxu0 0.0
      %1757 = vmatprep.subr.mxu0 0.0
      %1758 = vmatpush1.xpose.msra.mxu0 0.0
      %1759 = vmatprep.subr.mxu0 0.0
      %1760 = vmatpush1.xpose.msra.mxu0 0.0
      %1761 = vmatprep.subr.mxu0 0.0
      %1762 = vmatpush1.xpose.msra.mxu0 %v1733
      %1763 = vmatprep.subr.mxu0 0.0
      %1764 = vmatpush1.xpose.msra.mxu0 %v1731
      %1765 = vmatprep.subr.mxu0 0.0
      %1766 = vmatpush1.xpose.msra.mxu0 %v1729
      %1767 = vmatprep.subr.mxu0 0.0
      %1768 = vmatpush2.xpose.msra.mxu0 0.0
      %1769 = vmatprep.subr.mxu0 0.0
      %1770 = vmatpush2.xpose.msra.mxu0 0.0
      %1771 = vmatprep.subr.mxu0 0.0
      %1772 = vmatpush2.xpose.msra.mxu0 0.0
      %1773 = vmatprep.subr.mxu0 0.0
      %1774 = vmatpush2.xpose.msra.mxu0 0.0
      %1775 = vmatprep.subr.mxu0 0.0
      %1776 = vmatpush2.xpose.msra.mxu0 0.0
      %1777 = vmatprep.subr.mxu0 0.0
      %1778 = vmatpush2.xpose.msra.mxu0 0.0
      %1779 = vmatprep.subr.mxu0 0.0
      %1780 = vmatpush2.xpose.msra.mxu0 0.0
      %1781 = vmatprep.subr.mxu0 0.0
      %1782 = vmatpush2.xpose.msra.mxu0 0.0
      %1783 = vmatprep.subr.mxu0 0.0
      %1784 = vmatpush2.xpose.msra.mxu0 0.0
      %1785 = vmatprep.subr.mxu0 0.0
      %1786 = vmatpush2.xpose.msra.mxu0 0.0
      %1787 = vmatprep.subr.mxu0 0.0
      %1788 = vmatpush2.xpose.msra.mxu0 0.0
      %1789 = vmatprep.subr.mxu0 0.0
      %1790 = vmatpush2.xpose.msra.mxu0 0.0
      %1791 = vmatprep.subr.mxu0 0.0
      %1792 = vmatpush2.xpose.msra.mxu0 0.0
      %1793 = vmatprep.subr.mxu0 0.0
      %1794 = vmatpush2.xpose.msra.mxu0 0.0
      %1795 = vmatprep.subr.mxu0 0.0
      %1796 = vmatpush2.xpose.msra.mxu0 0.0
      %1797 = vmatprep.subr.mxu0 0.0
      %1798 = vmatpush2.xpose.msra.mxu0 0.0
      %1799 = vmatprep.mubr.f32.mxu0 0.0
      %1800 = vmatmul.mubr.f32.gmra.mxu0 %v1723
      %v1801 = vpop.f32.mrf.mxu0
      %v1802 = vadd.f32 0.0, %v1801
      %v1803 = vpop.f32.mrf.mxu0
      %1804 = vmatprep.mubr.f32.mxu0 0.0
      %1805 = vmatmul.mubr.f32.gmra.mxu0 %v1725
      %v1806 = vpop.f32.mrf.mxu0
      %v1807 = vadd.f32 0.0, %v1806
      %v1808 = vpop.f32.mrf.mxu0
      %1809 = vmatprep.mubr.f32.mxu0 0.0
      %1810 = vmatmul.mubr.f32.gmra.mxu0 %v1727
      %v1811 = vpop.f32.mrf.mxu0
      %v1812 = vadd.f32 0.0, %v1811
      %v1813 = vpop.f32.mrf.mxu0
      %1814 = vdwg.mxu0
      %v1815 = vmul.f32 %v1802, 0.25
      %v1816 = vmul.f32 %v1807, 0.25
      %v1817 = vmul.f32 %v1812, 0.25
      %v1818 = vadd.f32 %v1815, %v1289
      %v1819 = vadd.f32 %v1816, %v1290
      %v1820 = vadd.f32 %v1817, %v1291
      %v1821 = vsel %vm1588, %v1818, -inf
      %1822 = vmax.xlane.f32.xlu0 %v1821
      %v1823 = vpop.xlane.xlu0 %1822
      %v1824 = vsel %vm1588, %v1819, -inf
      %1825 = vmax.xlane.f32.xlu0 %v1824
      %v1826 = vpop.xlane.xlu0 %1825
      %v1827 = vsel %vm1588, %v1820, -inf
      %1828 = vmax.xlane.f32.xlu0 %v1827
      %v1829 = vpop.xlane.xlu0 %1828
      %v1830 = vsub.f32 %v1818, %v1823
      %v1831 = vsub.f32 %v1819, %v1826
      %v1832 = vsub.f32 %v1820, %v1829
      %v1833 = vmul.f32 %v1830, 1.442695
      %v1834 = vpow.pop %v1833
      %v1835 = vmul.f32 %v1831, 1.442695
      %v1836 = vpow.pop %v1835
      %v1837 = vmul.f32 %v1832, 1.442695
      %v1838 = vpow.pop %v1837
      %v1839 = vsel %vm1588, %v1834, 0.0
      %1840 = vadd.xlane.f32.xlu0 %v1839
      %v1841 = vpop.xlane.xlu0 %1840
      %v1842 = vsel %vm1588, %v1836, 0.0
      %1843 = vadd.xlane.f32.xlu0 %v1842
      %v1844 = vpop.xlane.xlu0 %1843
      %v1845 = vsel %vm1588, %v1838, 0.0
      %1846 = vadd.xlane.f32.xlu0 %v1845
      %v1847 = vpop.xlane.xlu0 %1846
      %v1848 = vrcp.pop %v1841
      %v1849 = vrcp.pop %v1844
      %v1850 = vrcp.pop %v1847
      %v1851 = vmul.f32 %v1834, %v1848
      %v1852 = vmul.f32 %v1836, %v1849
      %v1853 = vmul.f32 %v1838, %v1850
      %1857 = vrot.lane.b32.xlu0 %v1459, 112
      %v1858 = vpop.permute.xlu0 %1857
      %1859 = vrot.lane.b32.xlu0 %v1465, 112
      %v1860 = vpop.permute.xlu0 %1859
      %1861 = vrot.lane.b32.xlu0 %v1471, 112
      %v1862 = vpop.permute.xlu0 %1861
      %v1867 = vsel %vm1588, %v1851, 0
      %v1870 = vsel %vm1588, %v1852, 0
      %v1873 = vsel %vm1588, %v1853, 0
      %1875 = vmatprep.subr.mxu0 0.0
      %1876 = vmatpush1.msra.mxu0 0.0
      %1877 = vmatprep.subr.mxu0 0.0
      %1878 = vmatpush1.msra.mxu0 0.0
      %1879 = vmatprep.subr.mxu0 0.0
      %1880 = vmatpush1.msra.mxu0 0.0
      %1881 = vmatprep.subr.mxu0 0.0
      %1882 = vmatpush1.msra.mxu0 0.0
      %1883 = vmatprep.subr.mxu0 0.0
      %1884 = vmatpush1.msra.mxu0 0.0
      %1885 = vmatprep.subr.mxu0 0.0
      %1886 = vmatpush1.msra.mxu0 0.0
      %1887 = vmatprep.subr.mxu0 0.0
      %1888 = vmatpush1.msra.mxu0 0.0
      %1889 = vmatprep.subr.mxu0 0.0
      %1890 = vmatpush1.msra.mxu0 0.0
      %1891 = vmatprep.subr.mxu0 0.0
      %1892 = vmatpush1.msra.mxu0 0.0
      %1893 = vmatprep.subr.mxu0 0.0
      %1894 = vmatpush1.msra.mxu0 0.0
      %1895 = vmatprep.subr.mxu0 0.0
      %1896 = vmatpush1.msra.mxu0 0.0
      %1897 = vmatprep.subr.mxu0 0.0
      %1898 = vmatpush1.msra.mxu0 0.0
      %1899 = vmatprep.subr.mxu0 0.0
      %1900 = vmatpush1.msra.mxu0 0.0
      %1901 = vmatprep.subr.mxu0 0.0
      %1902 = vmatpush1.msra.mxu0 %v1862
      %1903 = vmatprep.subr.mxu0 0.0
      %1904 = vmatpush1.msra.mxu0 %v1860
      %1905 = vmatprep.subr.mxu0 0.0
      %1906 = vmatpush1.msra.mxu0 %v1858
      %1907 = vmatprep.subr.mxu0 0.0
      %1908 = vmatpush2.msra.mxu0 0.0
      %1909 = vmatprep.subr.mxu0 0.0
      %1910 = vmatpush2.msra.mxu0 0.0
      %1911 = vmatprep.subr.mxu0 0.0
      %1912 = vmatpush2.msra.mxu0 0.0
      %1913 = vmatprep.subr.mxu0 0.0
      %1914 = vmatpush2.msra.mxu0 0.0
      %1915 = vmatprep.subr.mxu0 0.0
      %1916 = vmatpush2.msra.mxu0 0.0
      %1917 = vmatprep.subr.mxu0 0.0
      %1918 = vmatpush2.msra.mxu0 0.0
      %1919 = vmatprep.subr.mxu0 0.0
      %1920 = vmatpush2.msra.mxu0 0.0
      %1921 = vmatprep.subr.mxu0 0.0
      %1922 = vmatpush2.msra.mxu0 0.0
      %1923 = vmatprep.subr.mxu0 0.0
      %1924 = vmatpush2.msra.mxu0 0.0
      %1925 = vmatprep.subr.mxu0 0.0
      %1926 = vmatpush2.msra.mxu0 0.0
      %1927 = vmatprep.subr.mxu0 0.0
      %1928 = vmatpush2.msra.mxu0 0.0
      %1929 = vmatprep.subr.mxu0 0.0
      %1930 = vmatpush2.msra.mxu0 0.0
      %1931 = vmatprep.subr.mxu0 0.0
      %1932 = vmatpush2.msra.mxu0 0.0
      %1933 = vmatprep.subr.mxu0 0.0
      %1934 = vmatpush2.msra.mxu0 0.0
      %1935 = vmatprep.subr.mxu0 0.0
      %1936 = vmatpush2.msra.mxu0 0.0
      %1937 = vmatprep.subr.mxu0 0.0
      %1938 = vmatpush2.msra.mxu0 0.0
      %1939 = vmatprep.mubr.f32.mxu0 0.0
      %1940 = vmatmul.mubr.f32.gmra.mxu0 %v1867
      %v1941 = vpop.f32.mrf.mxu0
      %v1942 = vadd.f32 0.0, %v1941
      %v1943 = vpop.f32.mrf.mxu0
      %1944 = vmatprep.mubr.f32.mxu0 0.0
      %1945 = vmatmul.mubr.f32.gmra.mxu0 %v1870
      %v1946 = vpop.f32.mrf.mxu0
      %v1947 = vadd.f32 0.0, %v1946
      %v1948 = vpop.f32.mrf.mxu0
      %1949 = vmatprep.mubr.f32.mxu0 0.0
      %1950 = vmatmul.mubr.f32.gmra.mxu0 %v1873
      %v1951 = vpop.f32.mrf.mxu0
      %v1952 = vadd.f32 0.0, %v1951
      %v1953 = vpop.f32.mrf.mxu0
      %1954 = vdwg.mxu0
      %v1956 = vsel %vm726, %v1942, 0
      %v1959 = vsel %vm726, %v1947, 0
      %v1962 = vsel %vm726, %v1952, 0
      %1964 = vmatprep.subr.mxu0 0.0
      %1965 = vmatpush1.msra.mxu0 0.0
      %1966 = vmatprep.subr.mxu0 0.0
      %1967 = vmatpush1.msra.mxu0 0.0
      %1968 = vmatprep.subr.mxu0 0.0
      %1969 = vmatpush1.msra.mxu0 0.0
      %1970 = vmatprep.subr.mxu0 0.0
      %1971 = vmatpush1.msra.mxu0 0.0
      %1972 = vmatprep.subr.mxu0 0.0
      %1973 = vmatpush1.msra.mxu0 0.0
      %1974 = vmatprep.subr.mxu0 0.0
      %1975 = vmatpush1.msra.mxu0 0.0
      %1976 = vmatprep.subr.mxu0 0.0
      %1977 = vmatpush1.msra.mxu0 0.0
      %1978 = vmatprep.subr.mxu0 0.0
      %1979 = vmatpush1.msra.mxu0 0.0
      %1980 = vmatprep.subr.mxu0 0.0
      %1981 = vmatpush1.msra.mxu0 0.0
      %1982 = vmatprep.subr.mxu0 0.0
      %1983 = vmatpush1.msra.mxu0 0.0
      %1984 = vmatprep.subr.mxu0 0.0
      %1985 = vmatpush1.msra.mxu0 0.0
      %1986 = vmatprep.subr.mxu0 0.0
      %1987 = vmatpush1.msra.mxu0 0.0
      %1988 = vmatprep.subr.mxu0 0.0
      %1989 = vmatpush1.msra.mxu0 0.0
      %1990 = vmatprep.subr.mxu0 0.0
      %1991 = vmatpush1.msra.mxu0 0.0
      %1992 = vmatprep.subr.mxu0 0.0
      %1993 = vmatpush1.msra.mxu0 %v1476
      %1994 = vmatprep.subr.mxu0 0.0
      %1995 = vmatpush1.msra.mxu0 %v1475
      %1996 = vmatprep.subr.mxu0 0.0
      %1997 = vmatpush2.msra.mxu0 0.0
      %1998 = vmatprep.subr.mxu0 0.0
      %1999 = vmatpush2.msra.mxu0 0.0
      %2000 = vmatprep.subr.mxu0 0.0
      %2001 = vmatpush2.msra.mxu0 0.0
      %2002 = vmatprep.subr.mxu0 0.0
      %2003 = vmatpush2.msra.mxu0 0.0
      %2004 = vmatprep.subr.mxu0 0.0
      %2005 = vmatpush2.msra.mxu0 0.0
      %2006 = vmatprep.subr.mxu0 0.0
      %2007 = vmatpush2.msra.mxu0 0.0
      %2008 = vmatprep.subr.mxu0 0.0
      %2009 = vmatpush2.msra.mxu0 0.0
      %2010 = vmatprep.subr.mxu0 0.0
      %2011 = vmatpush2.msra.mxu0 0.0
      %2012 = vmatprep.subr.mxu0 0.0
      %2013 = vmatpush2.msra.mxu0 0.0
      %2014 = vmatprep.subr.mxu0 0.0
      %2015 = vmatpush2.msra.mxu0 0.0
      %2016 = vmatprep.subr.mxu0 0.0
      %2017 = vmatpush2.msra.mxu0 0.0
      %2018 = vmatprep.subr.mxu0 0.0
      %2019 = vmatpush2.msra.mxu0 0.0
      %2020 = vmatprep.subr.mxu0 0.0
      %2021 = vmatpush2.msra.mxu0 0.0
      %2022 = vmatprep.subr.mxu0 0.0
      %2023 = vmatpush2.msra.mxu0 0.0
      %2024 = vmatprep.subr.mxu0 0.0
      %2025 = vmatpush2.msra.mxu0 0.0
      %2026 = vmatprep.subr.mxu0 0.0
      %2027 = vmatpush2.msra.mxu0 0.0
      %2028 = vmatprep.mubr.f32.mxu0 0.0
      %2029 = vmatmul.mubr.f32.gmra.mxu0 %v1956
      %v2030 = vpop.f32.mrf.mxu0
      %v2031 = vadd.f32 0.0, %v2030
      %v2032 = vpop.f32.mrf.mxu0
      %2033 = vmatprep.mubr.f32.mxu0 0.0
      %2034 = vmatmul.mubr.f32.gmra.mxu0 %v1959
      %v2035 = vpop.f32.mrf.mxu0
      %v2036 = vadd.f32 0.0, %v2035
      %v2037 = vpop.f32.mrf.mxu0
      %2038 = vmatprep.mubr.f32.mxu0 0.0
      %2039 = vmatmul.mubr.f32.gmra.mxu0 %v1962
      %v2040 = vpop.f32.mrf.mxu0
      %v2041 = vadd.f32 0.0, %v2040
      %v2042 = vpop.f32.mrf.mxu0
      %2043 = vdwg.mxu0
      %v2045 = vsel %vm726, %v1698, 0
      %v2048 = vsel %vm726, %v1703, 0
      %v2051 = vsel %vm726, %v1708, 0
      %2053 = vmatprep.subr.mxu0 0.0
      %2054 = vmatpush1.msra.mxu0 0.0
      %2055 = vmatprep.subr.mxu0 0.0
      %2056 = vmatpush1.msra.mxu0 0.0
      %2057 = vmatprep.subr.mxu0 0.0
      %2058 = vmatpush1.msra.mxu0 0.0
      %2059 = vmatprep.subr.mxu0 0.0
      %2060 = vmatpush1.msra.mxu0 0.0
      %2061 = vmatprep.subr.mxu0 0.0
      %2062 = vmatpush1.msra.mxu0 0.0
      %2063 = vmatprep.subr.mxu0 0.0
      %2064 = vmatpush1.msra.mxu0 0.0
      %2065 = vmatprep.subr.mxu0 0.0
      %2066 = vmatpush1.msra.mxu0 0.0
      %2067 = vmatprep.subr.mxu0 0.0
      %2068 = vmatpush1.msra.mxu0 0.0
      %2069 = vmatprep.subr.mxu0 0.0
      %2070 = vmatpush1.msra.mxu0 0.0
      %2071 = vmatprep.subr.mxu0 0.0
      %2072 = vmatpush1.msra.mxu0 0.0
      %2073 = vmatprep.subr.mxu0 0.0
      %2074 = vmatpush1.msra.mxu0 0.0
      %2075 = vmatprep.subr.mxu0 0.0
      %2076 = vmatpush1.msra.mxu0 0.0
      %2077 = vmatprep.subr.mxu0 0.0
      %2078 = vmatpush1.msra.mxu0 0.0
      %2079 = vmatprep.subr.mxu0 0.0
      %2080 = vmatpush1.msra.mxu0 0.0
      %2081 = vmatprep.subr.mxu0 0.0
      %2082 = vmatpush1.msra.mxu0 %v1474
      %2083 = vmatprep.subr.mxu0 0.0
      %2084 = vmatpush1.msra.mxu0 %v1473
      %2085 = vmatprep.subr.mxu0 0.0
      %2086 = vmatpush2.msra.mxu0 0.0
      %2087 = vmatprep.subr.mxu0 0.0
      %2088 = vmatpush2.msra.mxu0 0.0
      %2089 = vmatprep.subr.mxu0 0.0
      %2090 = vmatpush2.msra.mxu0 0.0
      %2091 = vmatprep.subr.mxu0 0.0
      %2092 = vmatpush2.msra.mxu0 0.0
      %2093 = vmatprep.subr.mxu0 0.0
      %2094 = vmatpush2.msra.mxu0 0.0
      %2095 = vmatprep.subr.mxu0 0.0
      %2096 = vmatpush2.msra.mxu0 0.0
      %2097 = vmatprep.subr.mxu0 0.0
      %2098 = vmatpush2.msra.mxu0 0.0
      %2099 = vmatprep.subr.mxu0 0.0
      %2100 = vmatpush2.msra.mxu0 0.0
      %2101 = vmatprep.subr.mxu0 0.0
      %2102 = vmatpush2.msra.mxu0 0.0
      %2103 = vmatprep.subr.mxu0 0.0
      %2104 = vmatpush2.msra.mxu0 0.0
      %2105 = vmatprep.subr.mxu0 0.0
      %2106 = vmatpush2.msra.mxu0 0.0
      %2107 = vmatprep.subr.mxu0 0.0
      %2108 = vmatpush2.msra.mxu0 0.0
      %2109 = vmatprep.subr.mxu0 0.0
      %2110 = vmatpush2.msra.mxu0 0.0
      %2111 = vmatprep.subr.mxu0 0.0
      %2112 = vmatpush2.msra.mxu0 0.0
      %2113 = vmatprep.subr.mxu0 0.0
      %2114 = vmatpush2.msra.mxu0 0.0
      %2115 = vmatprep.subr.mxu0 0.0
      %2116 = vmatpush2.msra.mxu0 0.0
      %2117 = vmatprep.mubr.f32.mxu0 0.0
      %2118 = vmatmul.mubr.f32.gmra.mxu0 %v2045
      %v2119 = vpop.f32.mrf.mxu0
      %v2120 = vadd.f32 %v2031, %v2119
      %v2121 = vpop.f32.mrf.mxu0
      %2122 = vmatprep.mubr.f32.mxu0 0.0
      %2123 = vmatmul.mubr.f32.gmra.mxu0 %v2048
      %v2124 = vpop.f32.mrf.mxu0
      %v2125 = vadd.f32 %v2036, %v2124
      %v2126 = vpop.f32.mrf.mxu0
      %2127 = vmatprep.mubr.f32.mxu0 0.0
      %2128 = vmatmul.mubr.f32.gmra.mxu0 %v2051
      %v2129 = vpop.f32.mrf.mxu0
      %v2130 = vadd.f32 %v2041, %v2129
      %v2131 = vpop.f32.mrf.mxu0
      %2132 = vdwg.mxu0
      %2133 = vrot.lane.b32.xlu0 %v1457, 96
      %v2134 = vpop.permute.xlu0 %2133
      %2135 = vrot.lane.b32.xlu0 %v1463, 96
      %v2136 = vpop.permute.xlu0 %2135
      %2137 = vrot.lane.b32.xlu0 %v1469, 96
      %v2138 = vpop.permute.xlu0 %2137
      %2139 = vrot.lane.b32.xlu0 %v1457, 32
      %v2140 = vpop.permute.xlu0 %2139
      %2141 = vrot.lane.b32.xlu0 %v1463, 32
      %v2142 = vpop.permute.xlu0 %2141
      %2143 = vrot.lane.b32.xlu0 %v1469, 32
      %v2144 = vpop.permute.xlu0 %2143
      %v2145 = vsel %vm726, %v2134, 0
      %v2147 = vsel %vm726, %v2136, 0
      %v2149 = vsel %vm726, %v2138, 0
      %v2151 = vsel %vm726, %v2140, 0
      %v2153 = vsel %vm726, %v2142, 0
      %v2155 = vsel %vm726, %v2144, 0
      %2157 = vmatprep.subr.mxu0 0.0
      %2158 = vmatpush1.xpose.msra.mxu0 0.0
      %2159 = vmatprep.subr.mxu0 0.0
      %2160 = vmatpush1.xpose.msra.mxu0 0.0
      %2161 = vmatprep.subr.mxu0 0.0
      %2162 = vmatpush1.xpose.msra.mxu0 0.0
      %2163 = vmatprep.subr.mxu0 0.0
      %2164 = vmatpush1.xpose.msra.mxu0 0.0
      %2165 = vmatprep.subr.mxu0 0.0
      %2166 = vmatpush1.xpose.msra.mxu0 0.0
      %2167 = vmatprep.subr.mxu0 0.0
      %2168 = vmatpush1.xpose.msra.mxu0 0.0
      %2169 = vmatprep.subr.mxu0 0.0
      %2170 = vmatpush1.xpose.msra.mxu0 0.0
      %2171 = vmatprep.subr.mxu0 0.0
      %2172 = vmatpush1.xpose.msra.mxu0 0.0
      %2173 = vmatprep.subr.mxu0 0.0
      %2174 = vmatpush1.xpose.msra.mxu0 0.0
      %2175 = vmatprep.subr.mxu0 0.0
      %2176 = vmatpush1.xpose.msra.mxu0 0.0
      %2177 = vmatprep.subr.mxu0 0.0
      %2178 = vmatpush1.xpose.msra.mxu0 0.0
      %2179 = vmatprep.subr.mxu0 0.0
      %2180 = vmatpush1.xpose.msra.mxu0 0.0
      %2181 = vmatprep.subr.mxu0 0.0
      %2182 = vmatpush1.xpose.msra.mxu0 0.0
      %2183 = vmatprep.subr.mxu0 0.0
      %2184 = vmatpush1.xpose.msra.mxu0 %v2155
      %2185 = vmatprep.subr.mxu0 0.0
      %2186 = vmatpush1.xpose.msra.mxu0 %v2153
      %2187 = vmatprep.subr.mxu0 0.0
      %2188 = vmatpush1.xpose.msra.mxu0 %v2151
      %2189 = vmatprep.subr.mxu0 0.0
      %2190 = vmatpush2.xpose.msra.mxu0 0.0
      %2191 = vmatprep.subr.mxu0 0.0
      %2192 = vmatpush2.xpose.msra.mxu0 0.0
      %2193 = vmatprep.subr.mxu0 0.0
      %2194 = vmatpush2.xpose.msra.mxu0 0.0
      %2195 = vmatprep.subr.mxu0 0.0
      %2196 = vmatpush2.xpose.msra.mxu0 0.0
      %2197 = vmatprep.subr.mxu0 0.0
      %2198 = vmatpush2.xpose.msra.mxu0 0.0
      %2199 = vmatprep.subr.mxu0 0.0
      %2200 = vmatpush2.xpose.msra.mxu0 0.0
      %2201 = vmatprep.subr.mxu0 0.0
      %2202 = vmatpush2.xpose.msra.mxu0 0.0
      %2203 = vmatprep.subr.mxu0 0.0
      %2204 = vmatpush2.xpose.msra.mxu0 0.0
      %2205 = vmatprep.subr.mxu0 0.0
      %2206 = vmatpush2.xpose.msra.mxu0 0.0
      %2207 = vmatprep.subr.mxu0 0.0
      %2208 = vmatpush2.xpose.msra.mxu0 0.0
      %2209 = vmatprep.subr.mxu0 0.0
      %2210 = vmatpush2.xpose.msra.mxu0 0.0
      %2211 = vmatprep.subr.mxu0 0.0
      %2212 = vmatpush2.xpose.msra.mxu0 0.0
      %2213 = vmatprep.subr.mxu0 0.0
      %2214 = vmatpush2.xpose.msra.mxu0 0.0
      %2215 = vmatprep.subr.mxu0 0.0
      %2216 = vmatpush2.xpose.msra.mxu0 0.0
      %2217 = vmatprep.subr.mxu0 0.0
      %2218 = vmatpush2.xpose.msra.mxu0 0.0
      %2219 = vmatprep.subr.mxu0 0.0
      %2220 = vmatpush2.xpose.msra.mxu0 0.0
      %2221 = vmatprep.mubr.f32.mxu0 0.0
      %2222 = vmatmul.mubr.f32.gmra.mxu0 %v2145
      %v2223 = vpop.f32.mrf.mxu0
      %v2224 = vadd.f32 0.0, %v2223
      %v2225 = vpop.f32.mrf.mxu0
      %2226 = vmatprep.mubr.f32.mxu0 0.0
      %2227 = vmatmul.mubr.f32.gmra.mxu0 %v2147
      %v2228 = vpop.f32.mrf.mxu0
      %v2229 = vadd.f32 0.0, %v2228
      %v2230 = vpop.f32.mrf.mxu0
      %2231 = vmatprep.mubr.f32.mxu0 0.0
      %2232 = vmatmul.mubr.f32.gmra.mxu0 %v2149
      %v2233 = vpop.f32.mrf.mxu0
      %v2234 = vadd.f32 0.0, %v2233
      %v2235 = vpop.f32.mrf.mxu0
      %2236 = vdwg.mxu0
      %v2237 = vmul.f32 %v2224, 0.25
      %v2238 = vmul.f32 %v2229, 0.25
      %v2239 = vmul.f32 %v2234, 0.25
      %v2240 = vadd.f32 %v2237, %v1289
      %v2241 = vadd.f32 %v2238, %v1290
      %v2242 = vadd.f32 %v2239, %v1291
      %v2243 = vsel %vm1588, %v2240, -inf
      %2244 = vmax.xlane.f32.xlu0 %v2243
      %v2245 = vpop.xlane.xlu0 %2244
      %v2246 = vsel %vm1588, %v2241, -inf
      %2247 = vmax.xlane.f32.xlu0 %v2246
      %v2248 = vpop.xlane.xlu0 %2247
      %v2249 = vsel %vm1588, %v2242, -inf
      %2250 = vmax.xlane.f32.xlu0 %v2249
      %v2251 = vpop.xlane.xlu0 %2250
      %v2252 = vsub.f32 %v2240, %v2245
      %v2253 = vsub.f32 %v2241, %v2248
      %v2254 = vsub.f32 %v2242, %v2251
      %v2255 = vmul.f32 %v2252, 1.442695
      %v2256 = vpow.pop %v2255
      %v2257 = vmul.f32 %v2253, 1.442695
      %v2258 = vpow.pop %v2257
      %v2259 = vmul.f32 %v2254, 1.442695
      %v2260 = vpow.pop %v2259
      %v2261 = vsel %vm1588, %v2256, 0.0
      %2262 = vadd.xlane.f32.xlu0 %v2261
      %v2263 = vpop.xlane.xlu0 %2262
      %v2264 = vsel %vm1588, %v2258, 0.0
      %2265 = vadd.xlane.f32.xlu0 %v2264
      %v2266 = vpop.xlane.xlu0 %2265
      %v2267 = vsel %vm1588, %v2260, 0.0
      %2268 = vadd.xlane.f32.xlu0 %v2267
      %v2269 = vpop.xlane.xlu0 %2268
      %v2270 = vrcp.pop %v2263
      %v2271 = vrcp.pop %v2266
      %v2272 = vrcp.pop %v2269
      %v2273 = vmul.f32 %v2256, %v2270
      %v2274 = vmul.f32 %v2258, %v2271
      %v2275 = vmul.f32 %v2260, %v2272
      %2276 = vrot.lane.b32.xlu0 %v1459, 96
      %v2277 = vpop.permute.xlu0 %2276
      %2278 = vrot.lane.b32.xlu0 %v1465, 96
      %v2279 = vpop.permute.xlu0 %2278
      %2280 = vrot.lane.b32.xlu0 %v1471, 96
      %v2281 = vpop.permute.xlu0 %2280
      %v2286 = vsel %vm1588, %v2273, 0
      %v2289 = vsel %vm1588, %v2274, 0
      %v2292 = vsel %vm1588, %v2275, 0
      %2294 = vmatprep.subr.mxu0 0.0
      %2295 = vmatpush1.msra.mxu0 0.0
      %2296 = vmatprep.subr.mxu0 0.0
      %2297 = vmatpush1.msra.mxu0 0.0
      %2298 = vmatprep.subr.mxu0 0.0
      %2299 = vmatpush1.msra.mxu0 0.0
      %2300 = vmatprep.subr.mxu0 0.0
      %2301 = vmatpush1.msra.mxu0 0.0
      %2302 = vmatprep.subr.mxu0 0.0
      %2303 = vmatpush1.msra.mxu0 0.0
      %2304 = vmatprep.subr.mxu0 0.0
      %2305 = vmatpush1.msra.mxu0 0.0
      %2306 = vmatprep.subr.mxu0 0.0
      %2307 = vmatpush1.msra.mxu0 0.0
      %2308 = vmatprep.subr.mxu0 0.0
      %2309 = vmatpush1.msra.mxu0 0.0
      %2310 = vmatprep.subr.mxu0 0.0
      %2311 = vmatpush1.msra.mxu0 0.0
      %2312 = vmatprep.subr.mxu0 0.0
      %2313 = vmatpush1.msra.mxu0 0.0
      %2314 = vmatprep.subr.mxu0 0.0
      %2315 = vmatpush1.msra.mxu0 0.0
      %2316 = vmatprep.subr.mxu0 0.0
      %2317 = vmatpush1.msra.mxu0 0.0
      %2318 = vmatprep.subr.mxu0 0.0
      %2319 = vmatpush1.msra.mxu0 0.0
      %2320 = vmatprep.subr.mxu0 0.0
      %2321 = vmatpush1.msra.mxu0 %v2281
      %2322 = vmatprep.subr.mxu0 0.0
      %2323 = vmatpush1.msra.mxu0 %v2279
      %2324 = vmatprep.subr.mxu0 0.0
      %2325 = vmatpush1.msra.mxu0 %v2277
      %2326 = vmatprep.subr.mxu0 0.0
      %2327 = vmatpush2.msra.mxu0 0.0
      %2328 = vmatprep.subr.mxu0 0.0
      %2329 = vmatpush2.msra.mxu0 0.0
      %2330 = vmatprep.subr.mxu0 0.0
      %2331 = vmatpush2.msra.mxu0 0.0
      %2332 = vmatprep.subr.mxu0 0.0
      %2333 = vmatpush2.msra.mxu0 0.0
      %2334 = vmatprep.subr.mxu0 0.0
      %2335 = vmatpush2.msra.mxu0 0.0
      %2336 = vmatprep.subr.mxu0 0.0
      %2337 = vmatpush2.msra.mxu0 0.0
      %2338 = vmatprep.subr.mxu0 0.0
      %2339 = vmatpush2.msra.mxu0 0.0
      %2340 = vmatprep.subr.mxu0 0.0
      %2341 = vmatpush2.msra.mxu0 0.0
      %2342 = vmatprep.subr.mxu0 0.0
      %2343 = vmatpush2.msra.mxu0 0.0
      %2344 = vmatprep.subr.mxu0 0.0
      %2345 = vmatpush2.msra.mxu0 0.0
      %2346 = vmatprep.subr.mxu0 0.0
      %2347 = vmatpush2.msra.mxu0 0.0
      %2348 = vmatprep.subr.mxu0 0.0
      %2349 = vmatpush2.msra.mxu0 0.0
      %2350 = vmatprep.subr.mxu0 0.0
      %2351 = vmatpush2.msra.mxu0 0.0
      %2352 = vmatprep.subr.mxu0 0.0
      %2353 = vmatpush2.msra.mxu0 0.0
      %2354 = vmatprep.subr.mxu0 0.0
      %2355 = vmatpush2.msra.mxu0 0.0
      %2356 = vmatprep.subr.mxu0 0.0
      %2357 = vmatpush2.msra.mxu0 0.0
      %2358 = vmatprep.mubr.f32.mxu0 0.0
      %2359 = vmatmul.mubr.f32.gmra.mxu0 %v2286
      %v2360 = vpop.f32.mrf.mxu0
      %v2361 = vadd.f32 0.0, %v2360
      %v2362 = vpop.f32.mrf.mxu0
      %2363 = vmatprep.mubr.f32.mxu0 0.0
      %2364 = vmatmul.mubr.f32.gmra.mxu0 %v2289
      %v2365 = vpop.f32.mrf.mxu0
      %v2366 = vadd.f32 0.0, %v2365
      %v2367 = vpop.f32.mrf.mxu0
      %2368 = vmatprep.mubr.f32.mxu0 0.0
      %2369 = vmatmul.mubr.f32.gmra.mxu0 %v2292
      %v2370 = vpop.f32.mrf.mxu0
      %v2371 = vadd.f32 0.0, %v2370
      %v2372 = vpop.f32.mrf.mxu0
      %2373 = vdwg.mxu0
      %v2375 = vsel %vm726, %v2361, 0
      %v2378 = vsel %vm726, %v2366, 0
      %v2381 = vsel %vm726, %v2371, 0
      %2383 = vmatprep.subr.mxu0 0.0
      %2384 = vmatpush1.msra.mxu0 0.0
      %2385 = vmatprep.subr.mxu0 0.0
      %2386 = vmatpush1.msra.mxu0 0.0
      %2387 = vmatprep.subr.mxu0 0.0
      %2388 = vmatpush1.msra.mxu0 0.0
      %2389 = vmatprep.subr.mxu0 0.0
      %2390 = vmatpush1.msra.mxu0 0.0
      %2391 = vmatprep.subr.mxu0 0.0
      %2392 = vmatpush1.msra.mxu0 0.0
      %2393 = vmatprep.subr.mxu0 0.0
      %2394 = vmatpush1.msra.mxu0 0.0
      %2395 = vmatprep.subr.mxu0 0.0
      %2396 = vmatpush1.msra.mxu0 0.0
      %2397 = vmatprep.subr.mxu0 0.0
      %2398 = vmatpush1.msra.mxu0 0.0
      %2399 = vmatprep.subr.mxu0 0.0
      %2400 = vmatpush1.msra.mxu0 0.0
      %2401 = vmatprep.subr.mxu0 0.0
      %2402 = vmatpush1.msra.mxu0 0.0
      %2403 = vmatprep.subr.mxu0 0.0
      %2404 = vmatpush1.msra.mxu0 0.0
      %2405 = vmatprep.subr.mxu0 0.0
      %2406 = vmatpush1.msra.mxu0 0.0
      %2407 = vmatprep.subr.mxu0 0.0
      %2408 = vmatpush1.msra.mxu0 0.0
      %2409 = vmatprep.subr.mxu0 0.0
      %2410 = vmatpush1.msra.mxu0 0.0
      %2411 = vmatprep.subr.mxu0 0.0
      %2412 = vmatpush1.msra.mxu0 %v1478
      %2413 = vmatprep.subr.mxu0 0.0
      %2414 = vmatpush1.msra.mxu0 %v1477
      %2415 = vmatprep.subr.mxu0 0.0
      %2416 = vmatpush2.msra.mxu0 0.0
      %2417 = vmatprep.subr.mxu0 0.0
      %2418 = vmatpush2.msra.mxu0 0.0
      %2419 = vmatprep.subr.mxu0 0.0
      %2420 = vmatpush2.msra.mxu0 0.0
      %2421 = vmatprep.subr.mxu0 0.0
      %2422 = vmatpush2.msra.mxu0 0.0
      %2423 = vmatprep.subr.mxu0 0.0
      %2424 = vmatpush2.msra.mxu0 0.0
      %2425 = vmatprep.subr.mxu0 0.0
      %2426 = vmatpush2.msra.mxu0 0.0
      %2427 = vmatprep.subr.mxu0 0.0
      %2428 = vmatpush2.msra.mxu0 0.0
      %2429 = vmatprep.subr.mxu0 0.0
      %2430 = vmatpush2.msra.mxu0 0.0
      %2431 = vmatprep.subr.mxu0 0.0
      %2432 = vmatpush2.msra.mxu0 0.0
      %2433 = vmatprep.subr.mxu0 0.0
      %2434 = vmatpush2.msra.mxu0 0.0
      %2435 = vmatprep.subr.mxu0 0.0
      %2436 = vmatpush2.msra.mxu0 0.0
      %2437 = vmatprep.subr.mxu0 0.0
      %2438 = vmatpush2.msra.mxu0 0.0
      %2439 = vmatprep.subr.mxu0 0.0
      %2440 = vmatpush2.msra.mxu0 0.0
      %2441 = vmatprep.subr.mxu0 0.0
      %2442 = vmatpush2.msra.mxu0 0.0
      %2443 = vmatprep.subr.mxu0 0.0
      %2444 = vmatpush2.msra.mxu0 0.0
      %2445 = vmatprep.subr.mxu0 0.0
      %2446 = vmatpush2.msra.mxu0 0.0
      %2447 = vmatprep.mubr.f32.mxu0 0.0
      %2448 = vmatmul.mubr.f32.gmra.mxu0 %v2375
      %v2449 = vpop.f32.mrf.mxu0
      %v2450 = vadd.f32 0.0, %v2449
      %v2451 = vpop.f32.mrf.mxu0
      %2452 = vmatprep.mubr.f32.mxu0 0.0
      %2453 = vmatmul.mubr.f32.gmra.mxu0 %v2378
      %v2454 = vpop.f32.mrf.mxu0
      %v2455 = vadd.f32 0.0, %v2454
      %v2456 = vpop.f32.mrf.mxu0
      %2457 = vmatprep.mubr.f32.mxu0 0.0
      %2458 = vmatmul.mubr.f32.gmra.mxu0 %v2381
      %v2459 = vpop.f32.mrf.mxu0
      %v2460 = vadd.f32 0.0, %v2459
      %v2461 = vpop.f32.mrf.mxu0
      %2462 = vdwg.mxu0
      %v2463 = vadd.f32 %v2120, %v2450
      %v2464 = vadd.f32 %v2125, %v2455
      %v2465 = vadd.f32 %v2130, %v2460
      %2466 = vrot.lane.b32.xlu0 %v1457, 80
      %v2467 = vpop.permute.xlu0 %2466
      %2468 = vrot.lane.b32.xlu0 %v1463, 80
      %v2469 = vpop.permute.xlu0 %2468
      %2470 = vrot.lane.b32.xlu0 %v1469, 80
      %v2471 = vpop.permute.xlu0 %2470
      %2472 = vrot.lane.b32.xlu0 %v1457, 16
      %v2473 = vpop.permute.xlu0 %2472
      %2474 = vrot.lane.b32.xlu0 %v1463, 16
      %v2475 = vpop.permute.xlu0 %2474
      %2476 = vrot.lane.b32.xlu0 %v1469, 16
      %v2477 = vpop.permute.xlu0 %2476
      %v2478 = vsel %vm726, %v2467, 0
      %v2480 = vsel %vm726, %v2469, 0
      %v2482 = vsel %vm726, %v2471, 0
      %v2484 = vsel %vm726, %v2473, 0
      %v2486 = vsel %vm726, %v2475, 0
      %v2488 = vsel %vm726, %v2477, 0
      %2490 = vmatprep.subr.mxu0 0.0
      %2491 = vmatpush1.xpose.msra.mxu0 0.0
      %2492 = vmatprep.subr.mxu0 0.0
      %2493 = vmatpush1.xpose.msra.mxu0 0.0
      %2494 = vmatprep.subr.mxu0 0.0
      %2495 = vmatpush1.xpose.msra.mxu0 0.0
      %2496 = vmatprep.subr.mxu0 0.0
      %2497 = vmatpush1.xpose.msra.mxu0 0.0
      %2498 = vmatprep.subr.mxu0 0.0
      %2499 = vmatpush1.xpose.msra.mxu0 0.0
      %2500 = vmatprep.subr.mxu0 0.0
      %2501 = vmatpush1.xpose.msra.mxu0 0.0
      %2502 = vmatprep.subr.mxu0 0.0
      %2503 = vmatpush1.xpose.msra.mxu0 0.0
      %2504 = vmatprep.subr.mxu0 0.0
      %2505 = vmatpush1.xpose.msra.mxu0 0.0
      %2506 = vmatprep.subr.mxu0 0.0
      %2507 = vmatpush1.xpose.msra.mxu0 0.0
      %2508 = vmatprep.subr.mxu0 0.0
      %2509 = vmatpush1.xpose.msra.mxu0 0.0
      %2510 = vmatprep.subr.mxu0 0.0
      %2511 = vmatpush1.xpose.msra.mxu0 0.0
      %2512 = vmatprep.subr.mxu0 0.0
      %2513 = vmatpush1.xpose.msra.mxu0 0.0
      %2514 = vmatprep.subr.mxu0 0.0
      %2515 = vmatpush1.xpose.msra.mxu0 0.0
      %2516 = vmatprep.subr.mxu0 0.0
      %2517 = vmatpush1.xpose.msra.mxu0 %v2488
      %2518 = vmatprep.subr.mxu0 0.0
      %2519 = vmatpush1.xpose.msra.mxu0 %v2486
      %2520 = vmatprep.subr.mxu0 0.0
      %2521 = vmatpush1.xpose.msra.mxu0 %v2484
      %2522 = vmatprep.subr.mxu0 0.0
      %2523 = vmatpush2.xpose.msra.mxu0 0.0
      %2524 = vmatprep.subr.mxu0 0.0
      %2525 = vmatpush2.xpose.msra.mxu0 0.0
      %2526 = vmatprep.subr.mxu0 0.0
      %2527 = vmatpush2.xpose.msra.mxu0 0.0
      %2528 = vmatprep.subr.mxu0 0.0
      %2529 = vmatpush2.xpose.msra.mxu0 0.0
      %2530 = vmatprep.subr.mxu0 0.0
      %2531 = vmatpush2.xpose.msra.mxu0 0.0
      %2532 = vmatprep.subr.mxu0 0.0
      %2533 = vmatpush2.xpose.msra.mxu0 0.0
      %2534 = vmatprep.subr.mxu0 0.0
      %2535 = vmatpush2.xpose.msra.mxu0 0.0
      %2536 = vmatprep.subr.mxu0 0.0
      %2537 = vmatpush2.xpose.msra.mxu0 0.0
      %2538 = vmatprep.subr.mxu0 0.0
      %2539 = vmatpush2.xpose.msra.mxu0 0.0
      %2540 = vmatprep.subr.mxu0 0.0
      %2541 = vmatpush2.xpose.msra.mxu0 0.0
      %2542 = vmatprep.subr.mxu0 0.0
      %2543 = vmatpush2.xpose.msra.mxu0 0.0
      %2544 = vmatprep.subr.mxu0 0.0
      %2545 = vmatpush2.xpose.msra.mxu0 0.0
      %2546 = vmatprep.subr.mxu0 0.0
      %2547 = vmatpush2.xpose.msra.mxu0 0.0
      %2548 = vmatprep.subr.mxu0 0.0
      %2549 = vmatpush2.xpose.msra.mxu0 0.0
      %2550 = vmatprep.subr.mxu0 0.0
      %2551 = vmatpush2.xpose.msra.mxu0 0.0
      %2552 = vmatprep.subr.mxu0 0.0
      %2553 = vmatpush2.xpose.msra.mxu0 0.0
      %2554 = vmatprep.mubr.f32.mxu0 0.0
      %2555 = vmatmul.mubr.f32.gmra.mxu0 %v2478
      %v2556 = vpop.f32.mrf.mxu0
      %v2557 = vadd.f32 0.0, %v2556
      %v2558 = vpop.f32.mrf.mxu0
      %2559 = vmatprep.mubr.f32.mxu0 0.0
      %2560 = vmatmul.mubr.f32.gmra.mxu0 %v2480
      %v2561 = vpop.f32.mrf.mxu0
      %v2562 = vadd.f32 0.0, %v2561
      %v2563 = vpop.f32.mrf.mxu0
      %2564 = vmatprep.mubr.f32.mxu0 0.0
      %2565 = vmatmul.mubr.f32.gmra.mxu0 %v2482
      %v2566 = vpop.f32.mrf.mxu0
      %v2567 = vadd.f32 0.0, %v2566
      %v2568 = vpop.f32.mrf.mxu0
      %2569 = vdwg.mxu0
      %v2570 = vmul.f32 %v2557, 0.25
      %v2571 = vmul.f32 %v2562, 0.25
      %v2572 = vmul.f32 %v2567, 0.25
      %v2573 = vadd.f32 %v2570, %v1289
      %v2574 = vadd.f32 %v2571, %v1290
      %v2575 = vadd.f32 %v2572, %v1291
      %v2576 = vsel %vm1588, %v2573, -inf
      %2577 = vmax.xlane.f32.xlu0 %v2576
      %v2578 = vpop.xlane.xlu0 %2577
      %v2579 = vsel %vm1588, %v2574, -inf
      %2580 = vmax.xlane.f32.xlu0 %v2579
      %v2581 = vpop.xlane.xlu0 %2580
      %v2582 = vsel %vm1588, %v2575, -inf
      %2583 = vmax.xlane.f32.xlu0 %v2582
      %v2584 = vpop.xlane.xlu0 %2583
      %v2585 = vsub.f32 %v2573, %v2578
      %v2586 = vsub.f32 %v2574, %v2581
      %v2587 = vsub.f32 %v2575, %v2584
      %v2588 = vmul.f32 %v2585, 1.442695
      %v2589 = vpow.pop %v2588
      %v2590 = vmul.f32 %v2586, 1.442695
      %v2591 = vpow.pop %v2590
      %v2592 = vmul.f32 %v2587, 1.442695
      %v2593 = vpow.pop %v2592
      %v2594 = vsel %vm1588, %v2589, 0.0
      %2595 = vadd.xlane.f32.xlu0 %v2594
      %v2596 = vpop.xlane.xlu0 %2595
      %v2597 = vsel %vm1588, %v2591, 0.0
      %2598 = vadd.xlane.f32.xlu0 %v2597
      %v2599 = vpop.xlane.xlu0 %2598
      %v2600 = vsel %vm1588, %v2593, 0.0
      %2601 = vadd.xlane.f32.xlu0 %v2600
      %v2602 = vpop.xlane.xlu0 %2601
      %v2603 = vrcp.pop %v2596
      %v2604 = vrcp.pop %v2599
      %v2605 = vrcp.pop %v2602
      %v2606 = vmul.f32 %v2589, %v2603
      %v2607 = vmul.f32 %v2591, %v2604
      %v2608 = vmul.f32 %v2593, %v2605
      %2609 = vrot.lane.b32.xlu0 %v1459, 80
      %v2610 = vpop.permute.xlu0 %2609
      %2611 = vrot.lane.b32.xlu0 %v1465, 80
      %v2612 = vpop.permute.xlu0 %2611
      %2613 = vrot.lane.b32.xlu0 %v1471, 80
      %v2614 = vpop.permute.xlu0 %2613
      %v2619 = vsel %vm1588, %v2606, 0
      %v2622 = vsel %vm1588, %v2607, 0
      %v2625 = vsel %vm1588, %v2608, 0
      %2627 = vmatprep.subr.mxu0 0.0
      %2628 = vmatpush1.msra.mxu0 0.0
      %2629 = vmatprep.subr.mxu0 0.0
      %2630 = vmatpush1.msra.mxu0 0.0
      %2631 = vmatprep.subr.mxu0 0.0
      %2632 = vmatpush1.msra.mxu0 0.0
      %2633 = vmatprep.subr.mxu0 0.0
      %2634 = vmatpush1.msra.mxu0 0.0
      %2635 = vmatprep.subr.mxu0 0.0
      %2636 = vmatpush1.msra.mxu0 0.0
      %2637 = vmatprep.subr.mxu0 0.0
      %2638 = vmatpush1.msra.mxu0 0.0
      %2639 = vmatprep.subr.mxu0 0.0
      %2640 = vmatpush1.msra.mxu0 0.0
      %2641 = vmatprep.subr.mxu0 0.0
      %2642 = vmatpush1.msra.mxu0 0.0
      %2643 = vmatprep.subr.mxu0 0.0
      %2644 = vmatpush1.msra.mxu0 0.0
      %2645 = vmatprep.subr.mxu0 0.0
      %2646 = vmatpush1.msra.mxu0 0.0
      %2647 = vmatprep.subr.mxu0 0.0
      %2648 = vmatpush1.msra.mxu0 0.0
      %2649 = vmatprep.subr.mxu0 0.0
      %2650 = vmatpush1.msra.mxu0 0.0
      %2651 = vmatprep.subr.mxu0 0.0
      %2652 = vmatpush1.msra.mxu0 0.0
      %2653 = vmatprep.subr.mxu0 0.0
      %2654 = vmatpush1.msra.mxu0 %v2614
      %2655 = vmatprep.subr.mxu0 0.0
      %2656 = vmatpush1.msra.mxu0 %v2612
      %2657 = vmatprep.subr.mxu0 0.0
      %2658 = vmatpush1.msra.mxu0 %v2610
      %2659 = vmatprep.subr.mxu0 0.0
      %2660 = vmatpush2.msra.mxu0 0.0
      %2661 = vmatprep.subr.mxu0 0.0
      %2662 = vmatpush2.msra.mxu0 0.0
      %2663 = vmatprep.subr.mxu0 0.0
      %2664 = vmatpush2.msra.mxu0 0.0
      %2665 = vmatprep.subr.mxu0 0.0
      %2666 = vmatpush2.msra.mxu0 0.0
      %2667 = vmatprep.subr.mxu0 0.0
      %2668 = vmatpush2.msra.mxu0 0.0
      %2669 = vmatprep.subr.mxu0 0.0
      %2670 = vmatpush2.msra.mxu0 0.0
      %2671 = vmatprep.subr.mxu0 0.0
      %2672 = vmatpush2.msra.mxu0 0.0
      %2673 = vmatprep.subr.mxu0 0.0
      %2674 = vmatpush2.msra.mxu0 0.0
      %2675 = vmatprep.subr.mxu0 0.0
      %2676 = vmatpush2.msra.mxu0 0.0
      %2677 = vmatprep.subr.mxu0 0.0
      %2678 = vmatpush2.msra.mxu0 0.0
      %2679 = vmatprep.subr.mxu0 0.0
      %2680 = vmatpush2.msra.mxu0 0.0
      %2681 = vmatprep.subr.mxu0 0.0
      %2682 = vmatpush2.msra.mxu0 0.0
      %2683 = vmatprep.subr.mxu0 0.0
      %2684 = vmatpush2.msra.mxu0 0.0
      %2685 = vmatprep.subr.mxu0 0.0
      %2686 = vmatpush2.msra.mxu0 0.0
      %2687 = vmatprep.subr.mxu0 0.0
      %2688 = vmatpush2.msra.mxu0 0.0
      %2689 = vmatprep.subr.mxu0 0.0
      %2690 = vmatpush2.msra.mxu0 0.0
      %2691 = vmatprep.mubr.f32.mxu0 0.0
      %2692 = vmatmul.mubr.f32.gmra.mxu0 %v2619
      %v2693 = vpop.f32.mrf.mxu0
      %v2694 = vadd.f32 0.0, %v2693
      %v2695 = vpop.f32.mrf.mxu0
      %2696 = vmatprep.mubr.f32.mxu0 0.0
      %2697 = vmatmul.mubr.f32.gmra.mxu0 %v2622
      %v2698 = vpop.f32.mrf.mxu0
      %v2699 = vadd.f32 0.0, %v2698
      %v2700 = vpop.f32.mrf.mxu0
      %2701 = vmatprep.mubr.f32.mxu0 0.0
      %2702 = vmatmul.mubr.f32.gmra.mxu0 %v2625
      %v2703 = vpop.f32.mrf.mxu0
      %v2704 = vadd.f32 0.0, %v2703
      %v2705 = vpop.f32.mrf.mxu0
      %2706 = vdwg.mxu0
      %v2708 = vsel %vm726, %v2694, 0
      %v2711 = vsel %vm726, %v2699, 0
      %v2714 = vsel %vm726, %v2704, 0
      %2716 = vmatprep.subr.mxu0 0.0
      %2717 = vmatpush1.msra.mxu0 0.0
      %2718 = vmatprep.subr.mxu0 0.0
      %2719 = vmatpush1.msra.mxu0 0.0
      %2720 = vmatprep.subr.mxu0 0.0
      %2721 = vmatpush1.msra.mxu0 0.0
      %2722 = vmatprep.subr.mxu0 0.0
      %2723 = vmatpush1.msra.mxu0 0.0
      %2724 = vmatprep.subr.mxu0 0.0
      %2725 = vmatpush1.msra.mxu0 0.0
      %2726 = vmatprep.subr.mxu0 0.0
      %2727 = vmatpush1.msra.mxu0 0.0
      %2728 = vmatprep.subr.mxu0 0.0
      %2729 = vmatpush1.msra.mxu0 0.0
      %2730 = vmatprep.subr.mxu0 0.0
      %2731 = vmatpush1.msra.mxu0 0.0
      %2732 = vmatprep.subr.mxu0 0.0
      %2733 = vmatpush1.msra.mxu0 0.0
      %2734 = vmatprep.subr.mxu0 0.0
      %2735 = vmatpush1.msra.mxu0 0.0
      %2736 = vmatprep.subr.mxu0 0.0
      %2737 = vmatpush1.msra.mxu0 0.0
      %2738 = vmatprep.subr.mxu0 0.0
      %2739 = vmatpush1.msra.mxu0 0.0
      %2740 = vmatprep.subr.mxu0 0.0
      %2741 = vmatpush1.msra.mxu0 0.0
      %2742 = vmatprep.subr.mxu0 0.0
      %2743 = vmatpush1.msra.mxu0 0.0
      %2744 = vmatprep.subr.mxu0 0.0
      %2745 = vmatpush1.msra.mxu0 %v1480
      %2746 = vmatprep.subr.mxu0 0.0
      %2747 = vmatpush1.msra.mxu0 %v1479
      %2748 = vmatprep.subr.mxu0 0.0
      %2749 = vmatpush2.msra.mxu0 0.0
      %2750 = vmatprep.subr.mxu0 0.0
      %2751 = vmatpush2.msra.mxu0 0.0
      %2752 = vmatprep.subr.mxu0 0.0
      %2753 = vmatpush2.msra.mxu0 0.0
      %2754 = vmatprep.subr.mxu0 0.0
      %2755 = vmatpush2.msra.mxu0 0.0
      %2756 = vmatprep.subr.mxu0 0.0
      %2757 = vmatpush2.msra.mxu0 0.0
      %2758 = vmatprep.subr.mxu0 0.0
      %2759 = vmatpush2.msra.mxu0 0.0
      %2760 = vmatprep.subr.mxu0 0.0
      %2761 = vmatpush2.msra.mxu0 0.0
      %2762 = vmatprep.subr.mxu0 0.0
      %2763 = vmatpush2.msra.mxu0 0.0
      %2764 = vmatprep.subr.mxu0 0.0
      %2765 = vmatpush2.msra.mxu0 0.0
      %2766 = vmatprep.subr.mxu0 0.0
      %2767 = vmatpush2.msra.mxu0 0.0
      %2768 = vmatprep.subr.mxu0 0.0
      %2769 = vmatpush2.msra.mxu0 0.0
      %2770 = vmatprep.subr.mxu0 0.0
      %2771 = vmatpush2.msra.mxu0 0.0
      %2772 = vmatprep.subr.mxu0 0.0
      %2773 = vmatpush2.msra.mxu0 0.0
      %2774 = vmatprep.subr.mxu0 0.0
      %2775 = vmatpush2.msra.mxu0 0.0
      %2776 = vmatprep.subr.mxu0 0.0
      %2777 = vmatpush2.msra.mxu0 0.0
      %2778 = vmatprep.subr.mxu0 0.0
      %2779 = vmatpush2.msra.mxu0 0.0
      %2780 = vmatprep.mubr.f32.mxu0 0.0
      %2781 = vmatmul.mubr.f32.gmra.mxu0 %v2708
      %v2782 = vpop.f32.mrf.mxu0
      %v2783 = vadd.f32 0.0, %v2782
      %v2784 = vpop.f32.mrf.mxu0
      %2785 = vmatprep.mubr.f32.mxu0 0.0
      %2786 = vmatmul.mubr.f32.gmra.mxu0 %v2711
      %v2787 = vpop.f32.mrf.mxu0
      %v2788 = vadd.f32 0.0, %v2787
      %v2789 = vpop.f32.mrf.mxu0
      %2790 = vmatprep.mubr.f32.mxu0 0.0
      %2791 = vmatmul.mubr.f32.gmra.mxu0 %v2714
      %v2792 = vpop.f32.mrf.mxu0
      %v2793 = vadd.f32 0.0, %v2792
      %v2794 = vpop.f32.mrf.mxu0
      %2795 = vdwg.mxu0
      %v2796 = vadd.f32 %v2463, %v2783
      %v2797 = vadd.f32 %v2464, %v2788
      %v2798 = vadd.f32 %v2465, %v2793
      %v2799 = vadd.f32 %v1277, %v2796
      %v2800 = vadd.f32 %v1278, %v2797
      %v2801 = vadd.f32 %v1279, %v2798
      %v2802 = vld [vmem:[%s9] sm:$0x1]
      %v2804 = vlaneseq
      %v2805 = vshrl.u32 %v2804, 7
      %v2806 = vsub.s32 0, %v2805
      %v2807 = vrot.slane %v2802, %v2806
      %v2809 = vadd.f32 %v2799, %v2807
      %v2810 = vadd.f32 %v2800, %v2807
      %v2811 = vadd.f32 %v2801, %v2807
      %v2812 = vld [vmem:[%s10] sm:$0x1]
      %v2813 = vld [vmem:[%s11] sm:$0x1]
      %v2814 = vsel %vm1294, %v2809, 0.0
      %2815 = vadd.xlane.f32.xlu0 %v2814
      %v2816 = vpop.xlane.xlu0 %2815
      %v2817 = vsel %vm1294, %v2810, 0.0
      %2818 = vadd.xlane.f32.xlu0 %v2817
      %v2819 = vpop.xlane.xlu0 %2818
      %v2820 = vsel %vm1294, %v2811, 0.0
      %2821 = vadd.xlane.f32.xlu0 %v2820
      %v2822 = vpop.xlane.xlu0 %2821
      %v2823 = vmul.f32 %v2816, %v1304
      %v2824 = vmul.f32 %v2819, %v1304
      %v2825 = vmul.f32 %v2822, %v1304
      %v2826 = vsub.f32 %v2809, %v2823
      %v2827 = vsub.f32 %v2810, %v2824
      %v2828 = vsub.f32 %v2811, %v2825
      %v2829 = vmul.f32 %v2826, %v2826
      %v2830 = vmul.f32 %v2827, %v2827
      %v2831 = vmul.f32 %v2828, %v2828
      %v2832 = vsel %vm1294, %v2829, 0.0
      %2833 = vadd.xlane.f32.xlu0 %v2832
      %v2834 = vpop.xlane.xlu0 %2833
      %v2835 = vsel %vm1294, %v2830, 0.0
      %2836 = vadd.xlane.f32.xlu0 %v2835
      %v2837 = vpop.xlane.xlu0 %2836
      %v2838 = vsel %vm1294, %v2831, 0.0
      %2839 = vadd.xlane.f32.xlu0 %v2838
      %v2840 = vpop.xlane.xlu0 %2839
      %v2841 = vmul.f32 %v2834, %v1304
      %v2842 = vmul.f32 %v2837, %v1304
      %v2843 = vmul.f32 %v2840, %v1304
      %v2844 = vadd.f32 %v2841, 1e-05
      %v2845 = vadd.f32 %v2842, 1e-05
      %v2846 = vadd.f32 %v2843, 1e-05
      %v2847 = vrsqrt.pop %v2844
      %v2848 = vrsqrt.pop %v2845
      %v2849 = vrsqrt.pop %v2846
      %v2850 = vmul.f32 %v2826, %v2847
      %v2851 = vmul.f32 %v2827, %v2848
      %v2852 = vmul.f32 %v2828, %v2849
      %v2854 = vlaneseq
      %v2855 = vshrl.u32 %v2854, 7
      %v2856 = vsub.s32 0, %v2855
      %v2857 = vrot.slane %v2812, %v2856
      %v2859 = vmul.f32 %v2850, %v2857
      %v2860 = vmul.f32 %v2851, %v2857
      %v2861 = vmul.f32 %v2852, %v2857
      %v2863 = vlaneseq
      %v2864 = vshrl.u32 %v2863, 7
      %v2865 = vsub.s32 0, %v2864
      %v2866 = vrot.slane %v2813, %v2865
      %v2868 = vadd.f32 %v2859, %v2866
      %v2869 = vadd.f32 %v2860, %v2866
      %v2870 = vadd.f32 %v2861, %v2866
      %v2871 = vld [vmem:[%s12] sm:$0xff]
      %v2872 = vld [vmem:[%s12 + $0x8] sm:$0xff]
      %v2873 = vld [vmem:[%s12 + $0x10] sm:$0xff]
      %v2874 = vld [vmem:[%s12 + $0x18] sm:$0xff]
      %v2875 = vld [vmem:[%s12 + $0x20] sm:$0xff]
      %v2876 = vld [vmem:[%s12 + $0x28] sm:$0xff]
      %v2877 = vld [vmem:[%s12 + $0x30] sm:$0xff]
      %v2878 = vld [vmem:[%s12 + $0x38] sm:$0xff]
      %v2879 = vld [vmem:[%s12 + $0x40] sm:$0xff]
      %v2880 = vld [vmem:[%s12 + $0x48] sm:$0xff]
      %v2881 = vld [vmem:[%s12 + $0x50] sm:$0xff]
      %v2882 = vld [vmem:[%s12 + $0x58] sm:$0xff]
      %v2883 = vld [vmem:[%s12 + $0x60] sm:$0xff]
      %v2884 = vld [vmem:[%s12 + $0x68] sm:$0xff]
      %v2885 = vld [vmem:[%s12 + $0x70] sm:$0xff]
      %v2886 = vld [vmem:[%s12 + $0x78] sm:$0xff]
      %v2887 = vld [vmem:[%s13] sm:$0x3]
      %v2889 = vlaneseq
      %v2890 = vshrl.u32 %v2889, 7
      %v2891 = vsub.s32 0, %v2890
      %v2892 = vrot.slane %v2887, %v2891
      %v2893 = vlaneseq
      %v2894 = vshrl.u32 %v2893, 7
      %v2895 = vsub.s32 1, %v2894
      %v2896 = vrot.slane %v2887, %v2895
      %v2900 = vsel %vm1294, %v2868, 0
      %v2903 = vsel %vm1294, %v2869, 0
      %v2906 = vsel %vm1294, %v2870, 0
      %2908 = vmatprep.subr.mxu0 0.0
      %2909 = vmatpush1.msra.mxu0 0.0
      %2910 = vmatprep.subr.mxu0 0.0
      %2911 = vmatpush1.msra.mxu0 0.0
      %2912 = vmatprep.subr.mxu0 0.0
      %2913 = vmatpush1.msra.mxu0 0.0
      %2914 = vmatprep.subr.mxu0 0.0
      %2915 = vmatpush1.msra.mxu0 0.0
      %2916 = vmatprep.subr.mxu0 0.0
      %2917 = vmatpush1.msra.mxu0 0.0
      %2918 = vmatprep.subr.mxu0 0.0
      %2919 = vmatpush1.msra.mxu0 0.0
      %2920 = vmatprep.subr.mxu0 0.0
      %2921 = vmatpush1.msra.mxu0 0.0
      %2922 = vmatprep.subr.mxu0 0.0
      %2923 = vmatpush1.msra.mxu0 0.0
      %2924 = vmatprep.subr.mxu0 %v2886
      %2925 = vmatpush1.msra.mxu0 %v2885
      %2926 = vmatprep.subr.mxu0 %v2884
      %2927 = vmatpush1.msra.mxu0 %v2883
      %2928 = vmatprep.subr.mxu0 %v2882
      %2929 = vmatpush1.msra.mxu0 %v2881
      %2930 = vmatprep.subr.mxu0 %v2880
      %2931 = vmatpush1.msra.mxu0 %v2879
      %2932 = vmatprep.subr.mxu0 %v2878
      %2933 = vmatpush1.msra.mxu0 %v2877
      %2934 = vmatprep.subr.mxu0 %v2876
      %2935 = vmatpush1.msra.mxu0 %v2875
      %2936 = vmatprep.subr.mxu0 %v2874
      %2937 = vmatpush1.msra.mxu0 %v2873
      %2938 = vmatprep.subr.mxu0 %v2872
      %2939 = vmatpush1.msra.mxu0 %v2871
      %2940 = vmatprep.subr.mxu0 0.0
      %2941 = vmatpush2.msra.mxu0 0.0
      %2942 = vmatprep.subr.mxu0 0.0
      %2943 = vmatpush2.msra.mxu0 0.0
      %2944 = vmatprep.subr.mxu0 0.0
      %2945 = vmatpush2.msra.mxu0 0.0
      %2946 = vmatprep.subr.mxu0 0.0
      %2947 = vmatpush2.msra.mxu0 0.0
      %2948 = vmatprep.subr.mxu0 0.0
      %2949 = vmatpush2.msra.mxu0 0.0
      %2950 = vmatprep.subr.mxu0 0.0
      %2951 = vmatpush2.msra.mxu0 0.0
      %2952 = vmatprep.subr.mxu0 0.0
      %2953 = vmatpush2.msra.mxu0 0.0
      %2954 = vmatprep.subr.mxu0 0.0
      %2955 = vmatpush2.msra.mxu0 0.0
      %2956 = vmatprep.subr.mxu0 0.0
      %2957 = vmatpush2.msra.mxu0 0.0
      %2958 = vmatprep.subr.mxu0 0.0
      %2959 = vmatpush2.msra.mxu0 0.0
      %2960 = vmatprep.subr.mxu0 0.0
      %2961 = vmatpush2.msra.mxu0 0.0
      %2962 = vmatprep.subr.mxu0 0.0
      %2963 = vmatpush2.msra.mxu0 0.0
      %2964 = vmatprep.subr.mxu0 0.0
      %2965 = vmatpush2.msra.mxu0 0.0
      %2966 = vmatprep.subr.mxu0 0.0
      %2967 = vmatpush2.msra.mxu0 0.0
      %2968 = vmatprep.subr.mxu0 0.0
      %2969 = vmatpush2.msra.mxu0 0.0
      %2970 = vmatprep.subr.mxu0 0.0
      %2971 = vmatpush2.msra.mxu0 0.0
      %2972 = vmatprep.mubr.f32.mxu0 0.0
      %2973 = vmatmul.mubr.f32.gmra.mxu0 %v2900
      %v2974 = vpop.f32.mrf.mxu0
      %v2975 = vadd.f32 %v2892, %v2974
      %v2976 = vpop.f32.mrf.mxu0
      %v2977 = vadd.f32 %v2896, %v2976
      %2978 = vmatprep.mubr.f32.mxu0 0.0
      %2979 = vmatmul.mubr.f32.gmra.mxu0 %v2903
      %v2980 = vpop.f32.mrf.mxu0
      %v2981 = vadd.f32 %v2892, %v2980
      %v2982 = vpop.f32.mrf.mxu0
      %v2983 = vadd.f32 %v2896, %v2982
      %2984 = vmatprep.mubr.f32.mxu0 0.0
      %2985 = vmatmul.mubr.f32.gmra.mxu0 %v2906
      %v2986 = vpop.f32.mrf.mxu0
      %v2987 = vadd.f32 %v2892, %v2986
      %v2988 = vpop.f32.mrf.mxu0
      %v2989 = vadd.f32 %v2896, %v2988
      %2990 = vdwg.mxu0
      %v2991 = vmul.f32 %v2975, %v2975
      %v2992 = vmul.f32 %v2977, %v2977
      %v2993 = vmul.f32 %v2981, %v2981
      %v2994 = vmul.f32 %v2983, %v2983
      %v2995 = vmul.f32 %v2987, %v2987
      %v2996 = vmul.f32 %v2989, %v2989
      %v2997 = vmul.f32 %v2975, %v2991
      %v2998 = vmul.f32 %v2977, %v2992
      %v2999 = vmul.f32 %v2981, %v2993
      %v3000 = vmul.f32 %v2983, %v2994
      %v3001 = vmul.f32 %v2987, %v2995
      %v3002 = vmul.f32 %v2989, %v2996
      %v3003 = vmul.f32 %v2997, 0.044715
      %v3004 = vmul.f32 %v2998, 0.044715
      %v3005 = vmul.f32 %v2999, 0.044715
      %v3006 = vmul.f32 %v3000, 0.044715
      %v3007 = vmul.f32 %v3001, 0.044715
      %v3008 = vmul.f32 %v3002, 0.044715
      %v3009 = vadd.f32 %v2975, %v3003
      %v3010 = vadd.f32 %v2977, %v3004
      %v3011 = vadd.f32 %v2981, %v3005
      %v3012 = vadd.f32 %v2983, %v3006
      %v3013 = vadd.f32 %v2987, %v3007
      %v3014 = vadd.f32 %v2989, %v3008
      %v3015 = vmul.f32 %v3009, 0.7978846
      %v3016 = vmul.f32 %v3010, 0.7978846
      %v3017 = vmul.f32 %v3011, 0.7978846
      %v3018 = vmul.f32 %v3012, 0.7978846
      %v3019 = vmul.f32 %v3013, 0.7978846
      %v3020 = vmul.f32 %v3014, 0.7978846
      %v3021 = vtanh.pop %v3015
      %v3022 = vtanh.pop %v3016
      %v3023 = vtanh.pop %v3017
      %v3024 = vtanh.pop %v3018
      %v3025 = vtanh.pop %v3019
      %v3026 = vtanh.pop %v3020
      %v3027 = vadd.f32 %v3021, 1.0
      %v3028 = vadd.f32 %v3022, 1.0
      %v3029 = vadd.f32 %v3023, 1.0
      %v3030 = vadd.f32 %v3024, 1.0
      %v3031 = vadd.f32 %v3025, 1.0
      %v3032 = vadd.f32 %v3026, 1.0
      %v3033 = vmul.f32 %v3027, 0.5
      %v3034 = vmul.f32 %v3028, 0.5
      %v3035 = vmul.f32 %v3029, 0.5
      %v3036 = vmul.f32 %v3030, 0.5
      %v3037 = vmul.f32 %v3031, 0.5
      %v3038 = vmul.f32 %v3032, 0.5
      %v3039 = vmul.f32 %v2975, %v3033
      %v3040 = vmul.f32 %v2977, %v3034
      %v3041 = vmul.f32 %v2981, %v3035
      %v3042 = vmul.f32 %v2983, %v3036
      %v3043 = vmul.f32 %v2987, %v3037
      %v3044 = vmul.f32 %v2989, %v3038
      %v3045 = vld [vmem:[%s14] sm:$0xff]
      %v3046 = vld [vmem:[%s14 + $0x8] sm:$0xff]
      %v3047 = vld [vmem:[%s14 + $0x10] sm:$0xff]
      %v3048 = vld [vmem:[%s14 + $0x18] sm:$0xff]
      %v3049 = vld [vmem:[%s14 + $0x20] sm:$0xff]
      %v3050 = vld [vmem:[%s14 + $0x28] sm:$0xff]
      %v3051 = vld [vmem:[%s14 + $0x30] sm:$0xff]
      %v3052 = vld [vmem:[%s14 + $0x38] sm:$0xff]
      %v3053 = vld [vmem:[%s14 + $0x40] sm:$0xff]
      %v3054 = vld [vmem:[%s14 + $0x48] sm:$0xff]
      %v3055 = vld [vmem:[%s14 + $0x50] sm:$0xff]
      %v3056 = vld [vmem:[%s14 + $0x58] sm:$0xff]
      %v3057 = vld [vmem:[%s14 + $0x60] sm:$0xff]
      %v3058 = vld [vmem:[%s14 + $0x68] sm:$0xff]
      %v3059 = vld [vmem:[%s14 + $0x70] sm:$0xff]
      %v3060 = vld [vmem:[%s14 + $0x78] sm:$0xff]
      %v3061 = vld [vmem:[%s14 + $0x80] sm:$0xff]
      %v3062 = vld [vmem:[%s14 + $0x88] sm:$0xff]
      %v3063 = vld [vmem:[%s14 + $0x90] sm:$0xff]
      %v3064 = vld [vmem:[%s14 + $0x98] sm:$0xff]
      %v3065 = vld [vmem:[%s14 + $0xa0] sm:$0xff]
      %v3066 = vld [vmem:[%s14 + $0xa8] sm:$0xff]
      %v3067 = vld [vmem:[%s14 + $0xb0] sm:$0xff]
      %v3068 = vld [vmem:[%s14 + $0xb8] sm:$0xff]
      %v3069 = vld [vmem:[%s14 + $0xc0] sm:$0xff]
      %v3070 = vld [vmem:[%s14 + $0xc8] sm:$0xff]
      %v3071 = vld [vmem:[%s14 + $0xd0] sm:$0xff]
      %v3072 = vld [vmem:[%s14 + $0xd8] sm:$0xff]
      %v3073 = vld [vmem:[%s14 + $0xe0] sm:$0xff]
      %v3074 = vld [vmem:[%s14 + $0xe8] sm:$0xff]
      %v3075 = vld [vmem:[%s14 + $0xf0] sm:$0xff]
      %v3076 = vld [vmem:[%s14 + $0xf8] sm:$0xff]
      %3077 = vmatprep.subr.mxu0 0.0
      %3078 = vmatpush1.msra.mxu0 %v3060
      %3079 = vmatprep.subr.mxu0 0.0
      %3080 = vmatpush1.msra.mxu0 %v3059
      %3081 = vmatprep.subr.mxu0 0.0
      %3082 = vmatpush1.msra.mxu0 %v3058
      %3083 = vmatprep.subr.mxu0 0.0
      %3084 = vmatpush1.msra.mxu0 %v3057
      %3085 = vmatprep.subr.mxu0 0.0
      %3086 = vmatpush1.msra.mxu0 %v3056
      %3087 = vmatprep.subr.mxu0 0.0
      %3088 = vmatpush1.msra.mxu0 %v3055
      %3089 = vmatprep.subr.mxu0 0.0
      %3090 = vmatpush1.msra.mxu0 %v3054
      %3091 = vmatprep.subr.mxu0 0.0
      %3092 = vmatpush1.msra.mxu0 %v3053
      %3093 = vmatprep.subr.mxu0 0.0
      %3094 = vmatpush1.msra.mxu0 %v3052
      %3095 = vmatprep.subr.mxu0 0.0
      %3096 = vmatpush1.msra.mxu0 %v3051
      %3097 = vmatprep.subr.mxu0 0.0
      %3098 = vmatpush1.msra.mxu0 %v3050
      %3099 = vmatprep.subr.mxu0 0.0
      %3100 = vmatpush1.msra.mxu0 %v3049
      %3101 = vmatprep.subr.mxu0 0.0
      %3102 = vmatpush1.msra.mxu0 %v3048
      %3103 = vmatprep.subr.mxu0 0.0
      %3104 = vmatpush1.msra.mxu0 %v3047
      %3105 = vmatprep.subr.mxu0 0.0
      %3106 = vmatpush1.msra.mxu0 %v3046
      %3107 = vmatprep.subr.mxu0 0.0
      %3108 = vmatpush1.msra.mxu0 %v3045
      %3109 = vmatprep.subr.mxu0 0.0
      %3110 = vmatpush2.msra.mxu0 %v3076
      %3111 = vmatprep.subr.mxu0 0.0
      %3112 = vmatpush2.msra.mxu0 %v3075
      %3113 = vmatprep.subr.mxu0 0.0
      %3114 = vmatpush2.msra.mxu0 %v3074
      %3115 = vmatprep.subr.mxu0 0.0
      %3116 = vmatpush2.msra.mxu0 %v3073
      %3117 = vmatprep.subr.mxu0 0.0
      %3118 = vmatpush2.msra.mxu0 %v3072
      %3119 = vmatprep.subr.mxu0 0.0
      %3120 = vmatpush2.msra.mxu0 %v3071
      %3121 = vmatprep.subr.mxu0 0.0
      %3122 = vmatpush2.msra.mxu0 %v3070
      %3123 = vmatprep.subr.mxu0 0.0
      %3124 = vmatpush2.msra.mxu0 %v3069
      %3125 = vmatprep.subr.mxu0 0.0
      %3126 = vmatpush2.msra.mxu0 %v3068
      %3127 = vmatprep.subr.mxu0 0.0
      %3128 = vmatpush2.msra.mxu0 %v3067
      %3129 = vmatprep.subr.mxu0 0.0
      %3130 = vmatpush2.msra.mxu0 %v3066
      %3131 = vmatprep.subr.mxu0 0.0
      %3132 = vmatpush2.msra.mxu0 %v3065
      %3133 = vmatprep.subr.mxu0 0.0
      %3134 = vmatpush2.msra.mxu0 %v3064
      %3135 = vmatprep.subr.mxu0 0.0
      %3136 = vmatpush2.msra.mxu0 %v3063
      %3137 = vmatprep.subr.mxu0 0.0
      %3138 = vmatpush2.msra.mxu0 %v3062
      %3139 = vmatprep.subr.mxu0 0.0
      %3140 = vmatpush2.msra.mxu0 %v3061
      %3141 = vmatprep.mubr.f32.mxu0 %v3040
      %3142 = vmatmul.mubr.f32.gmra.mxu0 %v3039
      %v3143 = vpop.f32.mrf.mxu0
      %v3144 = vadd.f32 0.0, %v3143
      %v3145 = vpop.f32.mrf.mxu0
      %3146 = vmatprep.mubr.f32.mxu0 %v3042
      %3147 = vmatmul.mubr.f32.gmra.mxu0 %v3041
      %v3148 = vpop.f32.mrf.mxu0
      %v3149 = vadd.f32 0.0, %v3148
      %v3150 = vpop.f32.mrf.mxu0
      %3151 = vmatprep.mubr.f32.mxu0 %v3044
      %3152 = vmatmul.mubr.f32.gmra.mxu0 %v3043
      %v3153 = vpop.f32.mrf.mxu0
      %v3154 = vadd.f32 0.0, %v3153
      %v3155 = vpop.f32.mrf.mxu0
      %3156 = vdwg.mxu0
      %v3157 = vadd.f32 %v2809, %v3144
      %v3158 = vadd.f32 %v2810, %v3149
      %v3159 = vadd.f32 %v2811, %v3154
      %v3160 = vld [vmem:[%s15] sm:$0x1]
      %v3162 = vlaneseq
      %v3163 = vshrl.u32 %v3162, 7
      %v3164 = vsub.s32 0, %v3163
      %v3165 = vrot.slane %v3160, %v3164
      %v3167 = vadd.f32 %v3157, %v3165
      %v3168 = vadd.f32 %v3158, %v3165
      %v3169 = vadd.f32 %v3159, %v3165
      %s3170 = scalar_lea.vmem %s4, 1
      %v3171 = vld [vmem:[%s3170] sm:$0x1]
      %s3172 = scalar_lea.vmem %s5, 1
      %v3173 = vld [vmem:[%s3172] sm:$0x1]
      %v3174 = vsel %vm1294, %v3167, 0.0
      %3175 = vadd.xlane.f32.xlu0 %v3174
      %v3176 = vpop.xlane.xlu0 %3175
      %v3177 = vsel %vm1294, %v3168, 0.0
      %3178 = vadd.xlane.f32.xlu0 %v3177
      %v3179 = vpop.xlane.xlu0 %3178
      %v3180 = vsel %vm1294, %v3169, 0.0
      %3181 = vadd.xlane.f32.xlu0 %v3180
      %v3182 = vpop.xlane.xlu0 %3181
      %v3183 = vmul.f32 %v3176, %v1304
      %v3184 = vmul.f32 %v3179, %v1304
      %v3185 = vmul.f32 %v3182, %v1304
      %v3186 = vsub.f32 %v3167, %v3183
      %v3187 = vsub.f32 %v3168, %v3184
      %v3188 = vsub.f32 %v3169, %v3185
      %v3189 = vmul.f32 %v3186, %v3186
      %v3190 = vmul.f32 %v3187, %v3187
      %v3191 = vmul.f32 %v3188, %v3188
      %v3192 = vsel %vm1294, %v3189, 0.0
      %3193 = vadd.xlane.f32.xlu0 %v3192
      %v3194 = vpop.xlane.xlu0 %3193
      %v3195 = vsel %vm1294, %v3190, 0.0
      %3196 = vadd.xlane.f32.xlu0 %v3195
      %v3197 = vpop.xlane.xlu0 %3196
      %v3198 = vsel %vm1294, %v3191, 0.0
      %3199 = vadd.xlane.f32.xlu0 %v3198
      %v3200 = vpop.xlane.xlu0 %3199
      %v3201 = vmul.f32 %v3194, %v1304
      %v3202 = vmul.f32 %v3197, %v1304
      %v3203 = vmul.f32 %v3200, %v1304
      %v3204 = vadd.f32 %v3201, 1e-05
      %v3205 = vadd.f32 %v3202, 1e-05
      %v3206 = vadd.f32 %v3203, 1e-05
      %v3207 = vrsqrt.pop %v3204
      %v3208 = vrsqrt.pop %v3205
      %v3209 = vrsqrt.pop %v3206
      %v3210 = vmul.f32 %v3186, %v3207
      %v3211 = vmul.f32 %v3187, %v3208
      %v3212 = vmul.f32 %v3188, %v3209
      %v3214 = vlaneseq
      %v3215 = vshrl.u32 %v3214, 7
      %v3216 = vsub.s32 0, %v3215
      %v3217 = vrot.slane %v3171, %v3216
      %v3219 = vmul.f32 %v3210, %v3217
      %v3220 = vmul.f32 %v3211, %v3217
      %v3221 = vmul.f32 %v3212, %v3217
      %v3223 = vlaneseq
      %v3224 = vshrl.u32 %v3223, 7
      %v3225 = vsub.s32 0, %v3224
      %v3226 = vrot.slane %v3173, %v3225
      %v3228 = vadd.f32 %v3219, %v3226
      %v3229 = vadd.f32 %v3220, %v3226
      %v3230 = vadd.f32 %v3221, %v3226
      %s3231 = scalar_lea.vmem %s6, 128
      %v3232 = vld [vmem:[%s3231] sm:$0xff]
      %v3233 = vld [vmem:[%s3231 + $0x8] sm:$0xff]
      %v3234 = vld [vmem:[%s3231 + $0x10] sm:$0xff]
      %v3235 = vld [vmem:[%s3231 + $0x18] sm:$0xff]
      %v3236 = vld [vmem:[%s3231 + $0x20] sm:$0xff]
      %v3237 = vld [vmem:[%s3231 + $0x28] sm:$0xff]
      %v3238 = vld [vmem:[%s3231 + $0x30] sm:$0xff]
      %v3239 = vld [vmem:[%s3231 + $0x38] sm:$0xff]
      %v3240 = vld [vmem:[%s3231 + $0x40] sm:$0xff]
      %v3241 = vld [vmem:[%s3231 + $0x48] sm:$0xff]
      %v3242 = vld [vmem:[%s3231 + $0x50] sm:$0xff]
      %v3243 = vld [vmem:[%s3231 + $0x58] sm:$0xff]
      %v3244 = vld [vmem:[%s3231 + $0x60] sm:$0xff]
      %v3245 = vld [vmem:[%s3231 + $0x68] sm:$0xff]
      %v3246 = vld [vmem:[%s3231 + $0x70] sm:$0xff]
      %v3247 = vld [vmem:[%s3231 + $0x78] sm:$0xff]
      %s3248 = scalar_lea.vmem %s7, 2
      %v3249 = vld [vmem:[%s3248] sm:$0x3]
      %v3251 = vlaneseq
      %v3252 = vshrl.u32 %v3251, 7
      %v3253 = vsub.s32 0, %v3252
      %v3254 = vrot.slane %v3249, %v3253
      %v3255 = vlaneseq
      %v3256 = vshrl.u32 %v3255, 7
      %v3257 = vsub.s32 1, %v3256
      %v3258 = vrot.slane %v3249, %v3257
      %v3262 = vsel %vm1294, %v3228, 0
      %v3265 = vsel %vm1294, %v3229, 0
      %v3268 = vsel %vm1294, %v3230, 0
      %3270 = vmatprep.subr.mxu0 0.0
      %3271 = vmatpush1.msra.mxu0 0.0
      %3272 = vmatprep.subr.mxu0 0.0
      %3273 = vmatpush1.msra.mxu0 0.0
      %3274 = vmatprep.subr.mxu0 0.0
      %3275 = vmatpush1.msra.mxu0 0.0
      %3276 = vmatprep.subr.mxu0 0.0
      %3277 = vmatpush1.msra.mxu0 0.0
      %3278 = vmatprep.subr.mxu0 0.0
      %3279 = vmatpush1.msra.mxu0 0.0
      %3280 = vmatprep.subr.mxu0 0.0
      %3281 = vmatpush1.msra.mxu0 0.0
      %3282 = vmatprep.subr.mxu0 0.0
      %3283 = vmatpush1.msra.mxu0 0.0
      %3284 = vmatprep.subr.mxu0 0.0
      %3285 = vmatpush1.msra.mxu0 0.0
      %3286 = vmatprep.subr.mxu0 %v3247
      %3287 = vmatpush1.msra.mxu0 %v3246
      %3288 = vmatprep.subr.mxu0 %v3245
      %3289 = vmatpush1.msra.mxu0 %v3244
      %3290 = vmatprep.subr.mxu0 %v3243
      %3291 = vmatpush1.msra.mxu0 %v3242
      %3292 = vmatprep.subr.mxu0 %v3241
      %3293 = vmatpush1.msra.mxu0 %v3240
      %3294 = vmatprep.subr.mxu0 %v3239
      %3295 = vmatpush1.msra.mxu0 %v3238
      %3296 = vmatprep.subr.mxu0 %v3237
      %3297 = vmatpush1.msra.mxu0 %v3236
      %3298 = vmatprep.subr.mxu0 %v3235
      %3299 = vmatpush1.msra.mxu0 %v3234
      %3300 = vmatprep.subr.mxu0 %v3233
      %3301 = vmatpush1.msra.mxu0 %v3232
      %3302 = vmatprep.subr.mxu0 0.0
      %3303 = vmatpush2.msra.mxu0 0.0
      %3304 = vmatprep.subr.mxu0 0.0
      %3305 = vmatpush2.msra.mxu0 0.0
      %3306 = vmatprep.subr.mxu0 0.0
      %3307 = vmatpush2.msra.mxu0 0.0
      %3308 = vmatprep.subr.mxu0 0.0
      %3309 = vmatpush2.msra.mxu0 0.0
      %3310 = vmatprep.subr.mxu0 0.0
      %3311 = vmatpush2.msra.mxu0 0.0
      %3312 = vmatprep.subr.mxu0 0.0
      %3313 = vmatpush2.msra.mxu0 0.0
      %3314 = vmatprep.subr.mxu0 0.0
      %3315 = vmatpush2.msra.mxu0 0.0
      %3316 = vmatprep.subr.mxu0 0.0
      %3317 = vmatpush2.msra.mxu0 0.0
      %3318 = vmatprep.subr.mxu0 0.0
      %3319 = vmatpush2.msra.mxu0 0.0
      %3320 = vmatprep.subr.mxu0 0.0
      %3321 = vmatpush2.msra.mxu0 0.0
      %3322 = vmatprep.subr.mxu0 0.0
      %3323 = vmatpush2.msra.mxu0 0.0
      %3324 = vmatprep.subr.mxu0 0.0
      %3325 = vmatpush2.msra.mxu0 0.0
      %3326 = vmatprep.subr.mxu0 0.0
      %3327 = vmatpush2.msra.mxu0 0.0
      %3328 = vmatprep.subr.mxu0 0.0
      %3329 = vmatpush2.msra.mxu0 0.0
      %3330 = vmatprep.subr.mxu0 0.0
      %3331 = vmatpush2.msra.mxu0 0.0
      %3332 = vmatprep.subr.mxu0 0.0
      %3333 = vmatpush2.msra.mxu0 0.0
      %3334 = vmatprep.mubr.f32.mxu0 0.0
      %3335 = vmatmul.mubr.f32.gmra.mxu0 %v3262
      %v3336 = vpop.f32.mrf.mxu0
      %v3337 = vadd.f32 %v3254, %v3336
      %v3338 = vpop.f32.mrf.mxu0
      %v3339 = vadd.f32 %v3258, %v3338
      %3340 = vmatprep.mubr.f32.mxu0 0.0
      %3341 = vmatmul.mubr.f32.gmra.mxu0 %v3265
      %v3342 = vpop.f32.mrf.mxu0
      %v3343 = vadd.f32 %v3254, %v3342
      %v3344 = vpop.f32.mrf.mxu0
      %v3345 = vadd.f32 %v3258, %v3344
      %3346 = vmatprep.mubr.f32.mxu0 0.0
      %3347 = vmatmul.mubr.f32.gmra.mxu0 %v3268
      %v3348 = vpop.f32.mrf.mxu0
      %v3349 = vadd.f32 %v3254, %v3348
      %v3350 = vpop.f32.mrf.mxu0
      %v3351 = vadd.f32 %v3258, %v3350
      %3352 = vdwg.mxu0
      %s3353 = scalar_lea.vmem %s8, 64
      %v3354 = vld [vmem:[%s3353] sm:$0xff]
      %v3355 = vld [vmem:[%s3353 + $0x8] sm:$0xff]
      %v3356 = vld [vmem:[%s3353 + $0x10] sm:$0xff]
      %v3357 = vld [vmem:[%s3353 + $0x18] sm:$0xff]
      %v3358 = vld [vmem:[%s3353 + $0x20] sm:$0xff]
      %v3359 = vld [vmem:[%s3353 + $0x28] sm:$0xff]
      %v3360 = vld [vmem:[%s3353 + $0x30] sm:$0xff]
      %v3361 = vld [vmem:[%s3353 + $0x38] sm:$0xff]
      %3365 = vrot.lane.b32.xlu0 %v3337, 64
      %v3366 = vpop.permute.xlu0 %3365
      %3367 = vrot.lane.b32.xlu0 %v3343, 64
      %v3368 = vpop.permute.xlu0 %3367
      %3369 = vrot.lane.b32.xlu0 %v3349, 64
      %v3370 = vpop.permute.xlu0 %3369
      %v3371 = vsel %vm726, %v3337, 0
      %v3373 = vsel %vm726, %v3343, 0
      %v3375 = vsel %vm726, %v3349, 0
      %v3377 = vsel %vm726, %v3366, 0
      %v3379 = vsel %vm726, %v3368, 0
      %v3381 = vsel %vm726, %v3370, 0
      %3383 = vmatprep.subr.mxu0 0.0
      %3384 = vmatpush1.xpose.msra.mxu0 0.0
      %3385 = vmatprep.subr.mxu0 0.0
      %3386 = vmatpush1.xpose.msra.mxu0 0.0
      %3387 = vmatprep.subr.mxu0 0.0
      %3388 = vmatpush1.xpose.msra.mxu0 0.0
      %3389 = vmatprep.subr.mxu0 0.0
      %3390 = vmatpush1.xpose.msra.mxu0 0.0
      %3391 = vmatprep.subr.mxu0 0.0
      %3392 = vmatpush1.xpose.msra.mxu0 0.0
      %3393 = vmatprep.subr.mxu0 0.0
      %3394 = vmatpush1.xpose.msra.mxu0 0.0
      %3395 = vmatprep.subr.mxu0 0.0
      %3396 = vmatpush1.xpose.msra.mxu0 0.0
      %3397 = vmatprep.subr.mxu0 0.0
      %3398 = vmatpush1.xpose.msra.mxu0 0.0
      %3399 = vmatprep.subr.mxu0 0.0
      %3400 = vmatpush1.xpose.msra.mxu0 0.0
      %3401 = vmatprep.subr.mxu0 0.0
      %3402 = vmatpush1.xpose.msra.mxu0 0.0
      %3403 = vmatprep.subr.mxu0 0.0
      %3404 = vmatpush1.xpose.msra.mxu0 0.0
      %3405 = vmatprep.subr.mxu0 0.0
      %3406 = vmatpush1.xpose.msra.mxu0 0.0
      %3407 = vmatprep.subr.mxu0 0.0
      %3408 = vmatpush1.xpose.msra.mxu0 0.0
      %3409 = vmatprep.subr.mxu0 0.0
      %3410 = vmatpush1.xpose.msra.mxu0 %v3381
      %3411 = vmatprep.subr.mxu0 0.0
      %3412 = vmatpush1.xpose.msra.mxu0 %v3379
      %3413 = vmatprep.subr.mxu0 0.0
      %3414 = vmatpush1.xpose.msra.mxu0 %v3377
      %3415 = vmatprep.subr.mxu0 0.0
      %3416 = vmatpush2.xpose.msra.mxu0 0.0
      %3417 = vmatprep.subr.mxu0 0.0
      %3418 = vmatpush2.xpose.msra.mxu0 0.0
      %3419 = vmatprep.subr.mxu0 0.0
      %3420 = vmatpush2.xpose.msra.mxu0 0.0
      %3421 = vmatprep.subr.mxu0 0.0
      %3422 = vmatpush2.xpose.msra.mxu0 0.0
      %3423 = vmatprep.subr.mxu0 0.0
      %3424 = vmatpush2.xpose.msra.mxu0 0.0
      %3425 = vmatprep.subr.mxu0 0.0
      %3426 = vmatpush2.xpose.msra.mxu0 0.0
      %3427 = vmatprep.subr.mxu0 0.0
      %3428 = vmatpush2.xpose.msra.mxu0 0.0
      %3429 = vmatprep.subr.mxu0 0.0
      %3430 = vmatpush2.xpose.msra.mxu0 0.0
      %3431 = vmatprep.subr.mxu0 0.0
      %3432 = vmatpush2.xpose.msra.mxu0 0.0
      %3433 = vmatprep.subr.mxu0 0.0
      %3434 = vmatpush2.xpose.msra.mxu0 0.0
      %3435 = vmatprep.subr.mxu0 0.0
      %3436 = vmatpush2.xpose.msra.mxu0 0.0
      %3437 = vmatprep.subr.mxu0 0.0
      %3438 = vmatpush2.xpose.msra.mxu0 0.0
      %3439 = vmatprep.subr.mxu0 0.0
      %3440 = vmatpush2.xpose.msra.mxu0 0.0
      %3441 = vmatprep.subr.mxu0 0.0
      %3442 = vmatpush2.xpose.msra.mxu0 0.0
      %3443 = vmatprep.subr.mxu0 0.0
      %3444 = vmatpush2.xpose.msra.mxu0 0.0
      %3445 = vmatprep.subr.mxu0 0.0
      %3446 = vmatpush2.xpose.msra.mxu0 0.0
      %3447 = vmatprep.mubr.f32.mxu0 0.0
      %3448 = vmatmul.mubr.f32.gmra.mxu0 %v3371
      %v3449 = vpop.f32.mrf.mxu0
      %v3450 = vadd.f32 0.0, %v3449
      %v3451 = vpop.f32.mrf.mxu0
      %3452 = vmatprep.mubr.f32.mxu0 0.0
      %3453 = vmatmul.mubr.f32.gmra.mxu0 %v3373
      %v3454 = vpop.f32.mrf.mxu0
      %v3455 = vadd.f32 0.0, %v3454
      %v3456 = vpop.f32.mrf.mxu0
      %3457 = vmatprep.mubr.f32.mxu0 0.0
      %3458 = vmatmul.mubr.f32.gmra.mxu0 %v3375
      %v3459 = vpop.f32.mrf.mxu0
      %v3460 = vadd.f32 0.0, %v3459
      %v3461 = vpop.f32.mrf.mxu0
      %3462 = vdwg.mxu0
      %v3463 = vmul.f32 %v3450, 0.25
      %v3464 = vmul.f32 %v3455, 0.25
      %v3465 = vmul.f32 %v3460, 0.25
      %v3466 = vadd.f32 %v3463, %v1289
      %v3467 = vadd.f32 %v3464, %v1290
      %v3468 = vadd.f32 %v3465, %v1291
      %v3469 = vsel %vm1588, %v3466, -inf
      %3470 = vmax.xlane.f32.xlu0 %v3469
      %v3471 = vpop.xlane.xlu0 %3470
      %v3472 = vsel %vm1588, %v3467, -inf
      %3473 = vmax.xlane.f32.xlu0 %v3472
      %v3474 = vpop.xlane.xlu0 %3473
      %v3475 = vsel %vm1588, %v3468, -inf
      %3476 = vmax.xlane.f32.xlu0 %v3475
      %v3477 = vpop.xlane.xlu0 %3476
      %v3478 = vsub.f32 %v3466, %v3471
      %v3479 = vsub.f32 %v3467, %v3474
      %v3480 = vsub.f32 %v3468, %v3477
      %v3481 = vmul.f32 %v3478, 1.442695
      %v3482 = vpow.pop %v3481
      %v3483 = vmul.f32 %v3479, 1.442695
      %v3484 = vpow.pop %v3483
      %v3485 = vmul.f32 %v3480, 1.442695
      %v3486 = vpow.pop %v3485
      %v3487 = vsel %vm1588, %v3482, 0.0
      %3488 = vadd.xlane.f32.xlu0 %v3487
      %v3489 = vpop.xlane.xlu0 %3488
      %v3490 = vsel %vm1588, %v3484, 0.0
      %3491 = vadd.xlane.f32.xlu0 %v3490
      %v3492 = vpop.xlane.xlu0 %3491
      %v3493 = vsel %vm1588, %v3486, 0.0
      %3494 = vadd.xlane.f32.xlu0 %v3493
      %v3495 = vpop.xlane.xlu0 %3494
      %v3496 = vrcp.pop %v3489
      %v3497 = vrcp.pop %v3492
      %v3498 = vrcp.pop %v3495
      %v3499 = vmul.f32 %v3482, %v3496
      %v3500 = vmul.f32 %v3484, %v3497
      %v3501 = vmul.f32 %v3486, %v3498
      %v3503 = vsel %vm1588, %v3499, 0
      %v3506 = vsel %vm1588, %v3500, 0
      %v3509 = vsel %vm1588, %v3501, 0
      %3511 = vmatprep.subr.mxu0 0.0
      %3512 = vmatpush1.msra.mxu0 0.0
      %3513 = vmatprep.subr.mxu0 0.0
      %3514 = vmatpush1.msra.mxu0 0.0
      %3515 = vmatprep.subr.mxu0 0.0
      %3516 = vmatpush1.msra.mxu0 0.0
      %3517 = vmatprep.subr.mxu0 0.0
      %3518 = vmatpush1.msra.mxu0 0.0
      %3519 = vmatprep.subr.mxu0 0.0
      %3520 = vmatpush1.msra.mxu0 0.0
      %3521 = vmatprep.subr.mxu0 0.0
      %3522 = vmatpush1.msra.mxu0 0.0
      %3523 = vmatprep.subr.mxu0 0.0
      %3524 = vmatpush1.msra.mxu0 0.0
      %3525 = vmatprep.subr.mxu0 0.0
      %3526 = vmatpush1.msra.mxu0 0.0
      %3527 = vmatprep.subr.mxu0 0.0
      %3528 = vmatpush1.msra.mxu0 0.0
      %3529 = vmatprep.subr.mxu0 0.0
      %3530 = vmatpush1.msra.mxu0 0.0
      %3531 = vmatprep.subr.mxu0 0.0
      %3532 = vmatpush1.msra.mxu0 0.0
      %3533 = vmatprep.subr.mxu0 0.0
      %3534 = vmatpush1.msra.mxu0 0.0
      %3535 = vmatprep.subr.mxu0 0.0
      %3536 = vmatpush1.msra.mxu0 0.0
      %3537 = vmatprep.subr.mxu0 0.0
      %3538 = vmatpush1.msra.mxu0 %v3351
      %3539 = vmatprep.subr.mxu0 0.0
      %3540 = vmatpush1.msra.mxu0 %v3345
      %3541 = vmatprep.subr.mxu0 0.0
      %3542 = vmatpush1.msra.mxu0 %v3339
      %3543 = vmatprep.subr.mxu0 0.0
      %3544 = vmatpush2.msra.mxu0 0.0
      %3545 = vmatprep.subr.mxu0 0.0
      %3546 = vmatpush2.msra.mxu0 0.0
      %3547 = vmatprep.subr.mxu0 0.0
      %3548 = vmatpush2.msra.mxu0 0.0
      %3549 = vmatprep.subr.mxu0 0.0
      %3550 = vmatpush2.msra.mxu0 0.0
      %3551 = vmatprep.subr.mxu0 0.0
      %3552 = vmatpush2.msra.mxu0 0.0
      %3553 = vmatprep.subr.mxu0 0.0
      %3554 = vmatpush2.msra.mxu0 0.0
      %3555 = vmatprep.subr.mxu0 0.0
      %3556 = vmatpush2.msra.mxu0 0.0
      %3557 = vmatprep.subr.mxu0 0.0
      %3558 = vmatpush2.msra.mxu0 0.0
      %3559 = vmatprep.subr.mxu0 0.0
      %3560 = vmatpush2.msra.mxu0 0.0
      %3561 = vmatprep.subr.mxu0 0.0
      %3562 = vmatpush2.msra.mxu0 0.0
      %3563 = vmatprep.subr.mxu0 0.0
      %3564 = vmatpush2.msra.mxu0 0.0
      %3565 = vmatprep.subr.mxu0 0.0
      %3566 = vmatpush2.msra.mxu0 0.0
      %3567 = vmatprep.subr.mxu0 0.0
      %3568 = vmatpush2.msra.mxu0 0.0
      %3569 = vmatprep.subr.mxu0 0.0
      %3570 = vmatpush2.msra.mxu0 0.0
      %3571 = vmatprep.subr.mxu0 0.0
      %3572 = vmatpush2.msra.mxu0 0.0
      %3573 = vmatprep.subr.mxu0 0.0
      %3574 = vmatpush2.msra.mxu0 0.0
      %3575 = vmatprep.mubr.f32.mxu0 0.0
      %3576 = vmatmul.mubr.f32.gmra.mxu0 %v3503
      %v3577 = vpop.f32.mrf.mxu0
      %v3578 = vadd.f32 0.0, %v3577
      %v3579 = vpop.f32.mrf.mxu0
      %3580 = vmatprep.mubr.f32.mxu0 0.0
      %3581 = vmatmul.mubr.f32.gmra.mxu0 %v3506
      %v3582 = vpop.f32.mrf.mxu0
      %v3583 = vadd.f32 0.0, %v3582
      %v3584 = vpop.f32.mrf.mxu0
      %3585 = vmatprep.mubr.f32.mxu0 0.0
      %3586 = vmatmul.mubr.f32.gmra.mxu0 %v3509
      %v3587 = vpop.f32.mrf.mxu0
      %v3588 = vadd.f32 0.0, %v3587
      %v3589 = vpop.f32.mrf.mxu0
      %3590 = vdwg.mxu0
      %3591 = vrot.lane.b32.xlu0 %v3337, 112
      %v3592 = vpop.permute.xlu0 %3591
      %3593 = vrot.lane.b32.xlu0 %v3343, 112
      %v3594 = vpop.permute.xlu0 %3593
      %3595 = vrot.lane.b32.xlu0 %v3349, 112
      %v3596 = vpop.permute.xlu0 %3595
      %3597 = vrot.lane.b32.xlu0 %v3337, 48
      %v3598 = vpop.permute.xlu0 %3597
      %3599 = vrot.lane.b32.xlu0 %v3343, 48
      %v3600 = vpop.permute.xlu0 %3599
      %3601 = vrot.lane.b32.xlu0 %v3349, 48
      %v3602 = vpop.permute.xlu0 %3601
      %v3603 = vsel %vm726, %v3592, 0
      %v3605 = vsel %vm726, %v3594, 0
      %v3607 = vsel %vm726, %v3596, 0
      %v3609 = vsel %vm726, %v3598, 0
      %v3611 = vsel %vm726, %v3600, 0
      %v3613 = vsel %vm726, %v3602, 0
      %3615 = vmatprep.subr.mxu0 0.0
      %3616 = vmatpush1.xpose.msra.mxu0 0.0
      %3617 = vmatprep.subr.mxu0 0.0
      %3618 = vmatpush1.xpose.msra.mxu0 0.0
      %3619 = vmatprep.subr.mxu0 0.0
      %3620 = vmatpush1.xpose.msra.mxu0 0.0
      %3621 = vmatprep.subr.mxu0 0.0
      %3622 = vmatpush1.xpose.msra.mxu0 0.0
      %3623 = vmatprep.subr.mxu0 0.0
      %3624 = vmatpush1.xpose.msra.mxu0 0.0
      %3625 = vmatprep.subr.mxu0 0.0
      %3626 = vmatpush1.xpose.msra.mxu0 0.0
      %3627 = vmatprep.subr.mxu0 0.0
      %3628 = vmatpush1.xpose.msra.mxu0 0.0
      %3629 = vmatprep.subr.mxu0 0.0
      %3630 = vmatpush1.xpose.msra.mxu0 0.0
      %3631 = vmatprep.subr.mxu0 0.0
      %3632 = vmatpush1.xpose.msra.mxu0 0.0
      %3633 = vmatprep.subr.mxu0 0.0
      %3634 = vmatpush1.xpose.msra.mxu0 0.0
      %3635 = vmatprep.subr.mxu0 0.0
      %3636 = vmatpush1.xpose.msra.mxu0 0.0
      %3637 = vmatprep.subr.mxu0 0.0
      %3638 = vmatpush1.xpose.msra.mxu0 0.0
      %3639 = vmatprep.subr.mxu0 0.0
      %3640 = vmatpush1.xpose.msra.mxu0 0.0
      %3641 = vmatprep.subr.mxu0 0.0
      %3642 = vmatpush1.xpose.msra.mxu0 %v3613
      %3643 = vmatprep.subr.mxu0 0.0
      %3644 = vmatpush1.xpose.msra.mxu0 %v3611
      %3645 = vmatprep.subr.mxu0 0.0
      %3646 = vmatpush1.xpose.msra.mxu0 %v3609
      %3647 = vmatprep.subr.mxu0 0.0
      %3648 = vmatpush2.xpose.msra.mxu0 0.0
      %3649 = vmatprep.subr.mxu0 0.0
      %3650 = vmatpush2.xpose.msra.mxu0 0.0
      %3651 = vmatprep.subr.mxu0 0.0
      %3652 = vmatpush2.xpose.msra.mxu0 0.0
      %3653 = vmatprep.subr.mxu0 0.0
      %3654 = vmatpush2.xpose.msra.mxu0 0.0
      %3655 = vmatprep.subr.mxu0 0.0
      %3656 = vmatpush2.xpose.msra.mxu0 0.0
      %3657 = vmatprep.subr.mxu0 0.0
      %3658 = vmatpush2.xpose.msra.mxu0 0.0
      %3659 = vmatprep.subr.mxu0 0.0
      %3660 = vmatpush2.xpose.msra.mxu0 0.0
      %3661 = vmatprep.subr.mxu0 0.0
      %3662 = vmatpush2.xpose.msra.mxu0 0.0
      %3663 = vmatprep.subr.mxu0 0.0
      %3664 = vmatpush2.xpose.msra.mxu0 0.0
      %3665 = vmatprep.subr.mxu0 0.0
      %3666 = vmatpush2.xpose.msra.mxu0 0.0
      %3667 = vmatprep.subr.mxu0 0.0
      %3668 = vmatpush2.xpose.msra.mxu0 0.0
      %3669 = vmatprep.subr.mxu0 0.0
      %3670 = vmatpush2.xpose.msra.mxu0 0.0
      %3671 = vmatprep.subr.mxu0 0.0
      %3672 = vmatpush2.xpose.msra.mxu0 0.0
      %3673 = vmatprep.subr.mxu0 0.0
      %3674 = vmatpush2.xpose.msra.mxu0 0.0
      %3675 = vmatprep.subr.mxu0 0.0
      %3676 = vmatpush2.xpose.msra.mxu0 0.0
      %3677 = vmatprep.subr.mxu0 0.0
      %3678 = vmatpush2.xpose.msra.mxu0 0.0
      %3679 = vmatprep.mubr.f32.mxu0 0.0
      %3680 = vmatmul.mubr.f32.gmra.mxu0 %v3603
      %v3681 = vpop.f32.mrf.mxu0
      %v3682 = vadd.f32 0.0, %v3681
      %v3683 = vpop.f32.mrf.mxu0
      %3684 = vmatprep.mubr.f32.mxu0 0.0
      %3685 = vmatmul.mubr.f32.gmra.mxu0 %v3605
      %v3686 = vpop.f32.mrf.mxu0
      %v3687 = vadd.f32 0.0, %v3686
      %v3688 = vpop.f32.mrf.mxu0
      %3689 = vmatprep.mubr.f32.mxu0 0.0
      %3690 = vmatmul.mubr.f32.gmra.mxu0 %v3607
      %v3691 = vpop.f32.mrf.mxu0
      %v3692 = vadd.f32 0.0, %v3691
      %v3693 = vpop.f32.mrf.mxu0
      %3694 = vdwg.mxu0
      %v3695 = vmul.f32 %v3682, 0.25
      %v3696 = vmul.f32 %v3687, 0.25
      %v3697 = vmul.f32 %v3692, 0.25
      %v3698 = vadd.f32 %v3695, %v1289
      %v3699 = vadd.f32 %v3696, %v1290
      %v3700 = vadd.f32 %v3697, %v1291
      %v3701 = vsel %vm1588, %v3698, -inf
      %3702 = vmax.xlane.f32.xlu0 %v3701
      %v3703 = vpop.xlane.xlu0 %3702
      %v3704 = vsel %vm1588, %v3699, -inf
      %3705 = vmax.xlane.f32.xlu0 %v3704
      %v3706 = vpop.xlane.xlu0 %3705
      %v3707 = vsel %vm1588, %v3700, -inf
      %3708 = vmax.xlane.f32.xlu0 %v3707
      %v3709 = vpop.xlane.xlu0 %3708
      %v3710 = vsub.f32 %v3698, %v3703
      %v3711 = vsub.f32 %v3699, %v3706
      %v3712 = vsub.f32 %v3700, %v3709
      %v3713 = vmul.f32 %v3710, 1.442695
      %v3714 = vpow.pop %v3713
      %v3715 = vmul.f32 %v3711, 1.442695
      %v3716 = vpow.pop %v3715
      %v3717 = vmul.f32 %v3712, 1.442695
      %v3718 = vpow.pop %v3717
      %v3719 = vsel %vm1588, %v3714, 0.0
      %3720 = vadd.xlane.f32.xlu0 %v3719
      %v3721 = vpop.xlane.xlu0 %3720
      %v3722 = vsel %vm1588, %v3716, 0.0
      %3723 = vadd.xlane.f32.xlu0 %v3722
      %v3724 = vpop.xlane.xlu0 %3723
      %v3725 = vsel %vm1588, %v3718, 0.0
      %3726 = vadd.xlane.f32.xlu0 %v3725
      %v3727 = vpop.xlane.xlu0 %3726
      %v3728 = vrcp.pop %v3721
      %v3729 = vrcp.pop %v3724
      %v3730 = vrcp.pop %v3727
      %v3731 = vmul.f32 %v3714, %v3728
      %v3732 = vmul.f32 %v3716, %v3729
      %v3733 = vmul.f32 %v3718, %v3730
      %3737 = vrot.lane.b32.xlu0 %v3339, 112
      %v3738 = vpop.permute.xlu0 %3737
      %3739 = vrot.lane.b32.xlu0 %v3345, 112
      %v3740 = vpop.permute.xlu0 %3739
      %3741 = vrot.lane.b32.xlu0 %v3351, 112
      %v3742 = vpop.permute.xlu0 %3741
      %v3747 = vsel %vm1588, %v3731, 0
      %v3750 = vsel %vm1588, %v3732, 0
      %v3753 = vsel %vm1588, %v3733, 0
      %3755 = vmatprep.subr.mxu0 0.0
      %3756 = vmatpush1.msra.mxu0 0.0
      %3757 = vmatprep.subr.mxu0 0.0
      %3758 = vmatpush1.msra.mxu0 0.0
      %3759 = vmatprep.subr.mxu0 0.0
      %3760 = vmatpush1.msra.mxu0 0.0
      %3761 = vmatprep.subr.mxu0 0.0
      %3762 = vmatpush1.msra.mxu0 0.0
      %3763 = vmatprep.subr.mxu0 0.0
      %3764 = vmatpush1.msra.mxu0 0.0
      %3765 = vmatprep.subr.mxu0 0.0
      %3766 = vmatpush1.msra.mxu0 0.0
      %3767 = vmatprep.subr.mxu0 0.0
      %3768 = vmatpush1.msra.mxu0 0.0
      %3769 = vmatprep.subr.mxu0 0.0
      %3770 = vmatpush1.msra.mxu0 0.0
      %3771 = vmatprep.subr.mxu0 0.0
      %3772 = vmatpush1.msra.mxu0 0.0
      %3773 = vmatprep.subr.mxu0 0.0
      %3774 = vmatpush1.msra.mxu0 0.0
      %3775 = vmatprep.subr.mxu0 0.0
      %3776 = vmatpush1.msra.mxu0 0.0
      %3777 = vmatprep.subr.mxu0 0.0
      %3778 = vmatpush1.msra.mxu0 0.0
      %3779 = vmatprep.subr.mxu0 0.0
      %3780 = vmatpush1.msra.mxu0 0.0
      %3781 = vmatprep.subr.mxu0 0.0
      %3782 = vmatpush1.msra.mxu0 %v3742
      %3783 = vmatprep.subr.mxu0 0.0
      %3784 = vmatpush1.msra.mxu0 %v3740
      %3785 = vmatprep.subr.mxu0 0.0
      %3786 = vmatpush1.msra.mxu0 %v3738
      %3787 = vmatprep.subr.mxu0 0.0
      %3788 = vmatpush2.msra.mxu0 0.0
      %3789 = vmatprep.subr.mxu0 0.0
      %3790 = vmatpush2.msra.mxu0 0.0
      %3791 = vmatprep.subr.mxu0 0.0
      %3792 = vmatpush2.msra.mxu0 0.0
      %3793 = vmatprep.subr.mxu0 0.0
      %3794 = vmatpush2.msra.mxu0 0.0
      %3795 = vmatprep.subr.mxu0 0.0
      %3796 = vmatpush2.msra.mxu0 0.0
      %3797 = vmatprep.subr.mxu0 0.0
      %3798 = vmatpush2.msra.mxu0 0.0
      %3799 = vmatprep.subr.mxu0 0.0
      %3800 = vmatpush2.msra.mxu0 0.0
      %3801 = vmatprep.subr.mxu0 0.0
      %3802 = vmatpush2.msra.mxu0 0.0
      %3803 = vmatprep.subr.mxu0 0.0
      %3804 = vmatpush2.msra.mxu0 0.0
      %3805 = vmatprep.subr.mxu0 0.0
      %3806 = vmatpush2.msra.mxu0 0.0
      %3807 = vmatprep.subr.mxu0 0.0
      %3808 = vmatpush2.msra.mxu0 0.0
      %3809 = vmatprep.subr.mxu0 0.0
      %3810 = vmatpush2.msra.mxu0 0.0
      %3811 = vmatprep.subr.mxu0 0.0
      %3812 = vmatpush2.msra.mxu0 0.0
      %3813 = vmatprep.subr.mxu0 0.0
      %3814 = vmatpush2.msra.mxu0 0.0
      %3815 = vmatprep.subr.mxu0 0.0
      %3816 = vmatpush2.msra.mxu0 0.0
      %3817 = vmatprep.subr.mxu0 0.0
      %3818 = vmatpush2.msra.mxu0 0.0
      %3819 = vmatprep.mubr.f32.mxu0 0.0
      %3820 = vmatmul.mubr.f32.gmra.mxu0 %v3747
      %v3821 = vpop.f32.mrf.mxu0
      %v3822 = vadd.f32 0.0, %v3821
      %v3823 = vpop.f32.mrf.mxu0
      %3824 = vmatprep.mubr.f32.mxu0 0.0
      %3825 = vmatmul.mubr.f32.gmra.mxu0 %v3750
      %v3826 = vpop.f32.mrf.mxu0
      %v3827 = vadd.f32 0.0, %v3826
      %v3828 = vpop.f32.mrf.mxu0
      %3829 = vmatprep.mubr.f32.mxu0 0.0
      %3830 = vmatmul.mubr.f32.gmra.mxu0 %v3753
      %v3831 = vpop.f32.mrf.mxu0
      %v3832 = vadd.f32 0.0, %v3831
      %v3833 = vpop.f32.mrf.mxu0
      %3834 = vdwg.mxu0
      %v3836 = vsel %vm726, %v3822, 0
      %v3839 = vsel %vm726, %v3827, 0
      %v3842 = vsel %vm726, %v3832, 0
      %3844 = vmatprep.subr.mxu0 0.0
      %3845 = vmatpush1.msra.mxu0 0.0
      %3846 = vmatprep.subr.mxu0 0.0
      %3847 = vmatpush1.msra.mxu0 0.0
      %3848 = vmatprep.subr.mxu0 0.0
      %3849 = vmatpush1.msra.mxu0 0.0
      %3850 = vmatprep.subr.mxu0 0.0
      %3851 = vmatpush1.msra.mxu0 0.0
      %3852 = vmatprep.subr.mxu0 0.0
      %3853 = vmatpush1.msra.mxu0 0.0
      %3854 = vmatprep.subr.mxu0 0.0
      %3855 = vmatpush1.msra.mxu0 0.0
      %3856 = vmatprep.subr.mxu0 0.0
      %3857 = vmatpush1.msra.mxu0 0.0
      %3858 = vmatprep.subr.mxu0 0.0
      %3859 = vmatpush1.msra.mxu0 0.0
      %3860 = vmatprep.subr.mxu0 0.0
      %3861 = vmatpush1.msra.mxu0 0.0
      %3862 = vmatprep.subr.mxu0 0.0
      %3863 = vmatpush1.msra.mxu0 0.0
      %3864 = vmatprep.subr.mxu0 0.0
      %3865 = vmatpush1.msra.mxu0 0.0
      %3866 = vmatprep.subr.mxu0 0.0
      %3867 = vmatpush1.msra.mxu0 0.0
      %3868 = vmatprep.subr.mxu0 0.0
      %3869 = vmatpush1.msra.mxu0 0.0
      %3870 = vmatprep.subr.mxu0 0.0
      %3871 = vmatpush1.msra.mxu0 0.0
      %3872 = vmatprep.subr.mxu0 0.0
      %3873 = vmatpush1.msra.mxu0 %v3357
      %3874 = vmatprep.subr.mxu0 0.0
      %3875 = vmatpush1.msra.mxu0 %v3356
      %3876 = vmatprep.subr.mxu0 0.0
      %3877 = vmatpush2.msra.mxu0 0.0
      %3878 = vmatprep.subr.mxu0 0.0
      %3879 = vmatpush2.msra.mxu0 0.0
      %3880 = vmatprep.subr.mxu0 0.0
      %3881 = vmatpush2.msra.mxu0 0.0
      %3882 = vmatprep.subr.mxu0 0.0
      %3883 = vmatpush2.msra.mxu0 0.0
      %3884 = vmatprep.subr.mxu0 0.0
      %3885 = vmatpush2.msra.mxu0 0.0
      %3886 = vmatprep.subr.mxu0 0.0
      %3887 = vmatpush2.msra.mxu0 0.0
      %3888 = vmatprep.subr.mxu0 0.0
      %3889 = vmatpush2.msra.mxu0 0.0
      %3890 = vmatprep.subr.mxu0 0.0
      %3891 = vmatpush2.msra.mxu0 0.0
      %3892 = vmatprep.subr.mxu0 0.0
      %3893 = vmatpush2.msra.mxu0 0.0
      %3894 = vmatprep.subr.mxu0 0.0
      %3895 = vmatpush2.msra.mxu0 0.0
      %3896 = vmatprep.subr.mxu0 0.0
      %3897 = vmatpush2.msra.mxu0 0.0
      %3898 = vmatprep.subr.mxu0 0.0
      %3899 = vmatpush2.msra.mxu0 0.0
      %3900 = vmatprep.subr.mxu0 0.0
      %3901 = vmatpush2.msra.mxu0 0.0
      %3902 = vmatprep.subr.mxu0 0.0
      %3903 = vmatpush2.msra.mxu0 0.0
      %3904 = vmatprep.subr.mxu0 0.0
      %3905 = vmatpush2.msra.mxu0 0.0
      %3906 = vmatprep.subr.mxu0 0.0
      %3907 = vmatpush2.msra.mxu0 0.0
      %3908 = vmatprep.mubr.f32.mxu0 0.0
      %3909 = vmatmul.mubr.f32.gmra.mxu0 %v3836
      %v3910 = vpop.f32.mrf.mxu0
      %v3911 = vadd.f32 0.0, %v3910
      %v3912 = vpop.f32.mrf.mxu0
      %3913 = vmatprep.mubr.f32.mxu0 0.0
      %3914 = vmatmul.mubr.f32.gmra.mxu0 %v3839
      %v3915 = vpop.f32.mrf.mxu0
      %v3916 = vadd.f32 0.0, %v3915
      %v3917 = vpop.f32.mrf.mxu0
      %3918 = vmatprep.mubr.f32.mxu0 0.0
      %3919 = vmatmul.mubr.f32.gmra.mxu0 %v3842
      %v3920 = vpop.f32.mrf.mxu0
      %v3921 = vadd.f32 0.0, %v3920
      %v3922 = vpop.f32.mrf.mxu0
      %3923 = vdwg.mxu0
      %v3925 = vsel %vm726, %v3578, 0
      %v3928 = vsel %vm726, %v3583, 0
      %v3931 = vsel %vm726, %v3588, 0
      %3933 = vmatprep.subr.mxu0 0.0
      %3934 = vmatpush1.msra.mxu0 0.0
      %3935 = vmatprep.subr.mxu0 0.0
      %3936 = vmatpush1.msra.mxu0 0.0
      %3937 = vmatprep.subr.mxu0 0.0
      %3938 = vmatpush1.msra.mxu0 0.0
      %3939 = vmatprep.subr.mxu0 0.0
      %3940 = vmatpush1.msra.mxu0 0.0
      %3941 = vmatprep.subr.mxu0 0.0
      %3942 = vmatpush1.msra.mxu0 0.0
      %3943 = vmatprep.subr.mxu0 0.0
      %3944 = vmatpush1.msra.mxu0 0.0
      %3945 = vmatprep.subr.mxu0 0.0
      %3946 = vmatpush1.msra.mxu0 0.0
      %3947 = vmatprep.subr.mxu0 0.0
      %3948 = vmatpush1.msra.mxu0 0.0
      %3949 = vmatprep.subr.mxu0 0.0
      %3950 = vmatpush1.msra.mxu0 0.0
      %3951 = vmatprep.subr.mxu0 0.0
      %3952 = vmatpush1.msra.mxu0 0.0
      %3953 = vmatprep.subr.mxu0 0.0
      %3954 = vmatpush1.msra.mxu0 0.0
      %3955 = vmatprep.subr.mxu0 0.0
      %3956 = vmatpush1.msra.mxu0 0.0
      %3957 = vmatprep.subr.mxu0 0.0
      %3958 = vmatpush1.msra.mxu0 0.0
      %3959 = vmatprep.subr.mxu0 0.0
      %3960 = vmatpush1.msra.mxu0 0.0
      %3961 = vmatprep.subr.mxu0 0.0
      %3962 = vmatpush1.msra.mxu0 %v3355
      %3963 = vmatprep.subr.mxu0 0.0
      %3964 = vmatpush1.msra.mxu0 %v3354
      %3965 = vmatprep.subr.mxu0 0.0
      %3966 = vmatpush2.msra.mxu0 0.0
      %3967 = vmatprep.subr.mxu0 0.0
      %3968 = vmatpush2.msra.mxu0 0.0
      %3969 = vmatprep.subr.mxu0 0.0
      %3970 = vmatpush2.msra.mxu0 0.0
      %3971 = vmatprep.subr.mxu0 0.0
      %3972 = vmatpush2.msra.mxu0 0.0
      %3973 = vmatprep.subr.mxu0 0.0
      %3974 = vmatpush2.msra.mxu0 0.0
      %3975 = vmatprep.subr.mxu0 0.0
      %3976 = vmatpush2.msra.mxu0 0.0
      %3977 = vmatprep.subr.mxu0 0.0
      %3978 = vmatpush2.msra.mxu0 0.0
      %3979 = vmatprep.subr.mxu0 0.0
      %3980 = vmatpush2.msra.mxu0 0.0
      %3981 = vmatprep.subr.mxu0 0.0
      %3982 = vmatpush2.msra.mxu0 0.0
      %3983 = vmatprep.subr.mxu0 0.0
      %3984 = vmatpush2.msra.mxu0 0.0
      %3985 = vmatprep.subr.mxu0 0.0
      %3986 = vmatpush2.msra.mxu0 0.0
      %3987 = vmatprep.subr.mxu0 0.0
      %3988 = vmatpush2.msra.mxu0 0.0
      %3989 = vmatprep.subr.mxu0 0.0
      %3990 = vmatpush2.msra.mxu0 0.0
      %3991 = vmatprep.subr.mxu0 0.0
      %3992 = vmatpush2.msra.mxu0 0.0
      %3993 = vmatprep.subr.mxu0 0.0
      %3994 = vmatpush2.msra.mxu0 0.0
      %3995 = vmatprep.subr.mxu0 0.0
      %3996 = vmatpush2.msra.mxu0 0.0
      %3997 = vmatprep.mubr.f32.mxu0 0.0
      %3998 = vmatmul.mubr.f32.gmra.mxu0 %v3925
      %v3999 = vpop.f32.mrf.mxu0
      %v4000 = vadd.f32 %v3911, %v3999
      %v4001 = vpop.f32.mrf.mxu0
      %4002 = vmatprep.mubr.f32.mxu0 0.0
      %4003 = vmatmul.mubr.f32.gmra.mxu0 %v3928
      %v4004 = vpop.f32.mrf.mxu0
      %v4005 = vadd.f32 %v3916, %v4004
      %v4006 = vpop.f32.mrf.mxu0
      %4007 = vmatprep.mubr.f32.mxu0 0.0
      %4008 = vmatmul.mubr.f32.gmra.mxu0 %v3931
      %v4009 = vpop.f32.mrf.mxu0
      %v4010 = vadd.f32 %v3921, %v4009
      %v4011 = vpop.f32.mrf.mxu0
      %4012 = vdwg.mxu0
      %4013 = vrot.lane.b32.xlu0 %v3337, 96
      %v4014 = vpop.permute.xlu0 %4013
      %4015 = vrot.lane.b32.xlu0 %v3343, 96
      %v4016 = vpop.permute.xlu0 %4015
      %4017 = vrot.lane.b32.xlu0 %v3349, 96
      %v4018 = vpop.permute.xlu0 %4017
      %4019 = vrot.lane.b32.xlu0 %v3337, 32
      %v4020 = vpop.permute.xlu0 %4019
      %4021 = vrot.lane.b32.xlu0 %v3343, 32
      %v4022 = vpop.permute.xlu0 %4021
      %4023 = vrot.lane.b32.xlu0 %v3349, 32
      %v4024 = vpop.permute.xlu0 %4023
      %v4025 = vsel %vm726, %v4014, 0
      %v4027 = vsel %vm726, %v4016, 0
      %v4029 = vsel %vm726, %v4018, 0
      %v4031 = vsel %vm726, %v4020, 0
      %v4033 = vsel %vm726, %v4022, 0
      %v4035 = vsel %vm726, %v4024, 0
      %4037 = vmatprep.subr.mxu0 0.0
      %4038 = vmatpush1.xpose.msra.mxu0 0.0
      %4039 = vmatprep.subr.mxu0 0.0
      %4040 = vmatpush1.xpose.msra.mxu0 0.0
      %4041 = vmatprep.subr.mxu0 0.0
      %4042 = vmatpush1.xpose.msra.mxu0 0.0
      %4043 = vmatprep.subr.mxu0 0.0
      %4044 = vmatpush1.xpose.msra.mxu0 0.0
      %4045 = vmatprep.subr.mxu0 0.0
      %4046 = vmatpush1.xpose.msra.mxu0 0.0
      %4047 = vmatprep.subr.mxu0 0.0
      %4048 = vmatpush1.xpose.msra.mxu0 0.0
      %4049 = vmatprep.subr.mxu0 0.0
      %4050 = vmatpush1.xpose.msra.mxu0 0.0
      %4051 = vmatprep.subr.mxu0 0.0
      %4052 = vmatpush1.xpose.msra.mxu0 0.0
      %4053 = vmatprep.subr.mxu0 0.0
      %4054 = vmatpush1.xpose.msra.mxu0 0.0
      %4055 = vmatprep.subr.mxu0 0.0
      %4056 = vmatpush1.xpose.msra.mxu0 0.0
      %4057 = vmatprep.subr.mxu0 0.0
      %4058 = vmatpush1.xpose.msra.mxu0 0.0
      %4059 = vmatprep.subr.mxu0 0.0
      %4060 = vmatpush1.xpose.msra.mxu0 0.0
      %4061 = vmatprep.subr.mxu0 0.0
      %4062 = vmatpush1.xpose.msra.mxu0 0.0
      %4063 = vmatprep.subr.mxu0 0.0
      %4064 = vmatpush1.xpose.msra.mxu0 %v4035
      %4065 = vmatprep.subr.mxu0 0.0
      %4066 = vmatpush1.xpose.msra.mxu0 %v4033
      %4067 = vmatprep.subr.mxu0 0.0
      %4068 = vmatpush1.xpose.msra.mxu0 %v4031
      %4069 = vmatprep.subr.mxu0 0.0
      %4070 = vmatpush2.xpose.msra.mxu0 0.0
      %4071 = vmatprep.subr.mxu0 0.0
      %4072 = vmatpush2.xpose.msra.mxu0 0.0
      %4073 = vmatprep.subr.mxu0 0.0
      %4074 = vmatpush2.xpose.msra.mxu0 0.0
      %4075 = vmatprep.subr.mxu0 0.0
      %4076 = vmatpush2.xpose.msra.mxu0 0.0
      %4077 = vmatprep.subr.mxu0 0.0
      %4078 = vmatpush2.xpose.msra.mxu0 0.0
      %4079 = vmatprep.subr.mxu0 0.0
      %4080 = vmatpush2.xpose.msra.mxu0 0.0
      %4081 = vmatprep.subr.mxu0 0.0
      %4082 = vmatpush2.xpose.msra.mxu0 0.0
      %4083 = vmatprep.subr.mxu0 0.0
      %4084 = vmatpush2.xpose.msra.mxu0 0.0
      %4085 = vmatprep.subr.mxu0 0.0
      %4086 = vmatpush2.xpose.msra.mxu0 0.0
      %4087 = vmatprep.subr.mxu0 0.0
      %4088 = vmatpush2.xpose.msra.mxu0 0.0
      %4089 = vmatprep.subr.mxu0 0.0
      %4090 = vmatpush2.xpose.msra.mxu0 0.0
      %4091 = vmatprep.subr.mxu0 0.0
      %4092 = vmatpush2.xpose.msra.mxu0 0.0
      %4093 = vmatprep.subr.mxu0 0.0
      %4094 = vmatpush2.xpose.msra.mxu0 0.0
      %4095 = vmatprep.subr.mxu0 0.0
      %4096 = vmatpush2.xpose.msra.mxu0 0.0
      %4097 = vmatprep.subr.mxu0 0.0
      %4098 = vmatpush2.xpose.msra.mxu0 0.0
      %4099 = vmatprep.subr.mxu0 0.0
      %4100 = vmatpush2.xpose.msra.mxu0 0.0
      %4101 = vmatprep.mubr.f32.mxu0 0.0
      %4102 = vmatmul.mubr.f32.gmra.mxu0 %v4025
      %v4103 = vpop.f32.mrf.mxu0
      %v4104 = vadd.f32 0.0, %v4103
      %v4105 = vpop.f32.mrf.mxu0
      %4106 = vmatprep.mubr.f32.mxu0 0.0
      %4107 = vmatmul.mubr.f32.gmra.mxu0 %v4027
      %v4108 = vpop.f32.mrf.mxu0
      %v4109 = vadd.f32 0.0, %v4108
      %v4110 = vpop.f32.mrf.mxu0
      %4111 = vmatprep.mubr.f32.mxu0 0.0
      %4112 = vmatmul.mubr.f32.gmra.mxu0 %v4029
      %v4113 = vpop.f32.mrf.mxu0
      %v4114 = vadd.f32 0.0, %v4113
      %v4115 = vpop.f32.mrf.mxu0
      %4116 = vdwg.mxu0
      %v4117 = vmul.f32 %v4104, 0.25
      %v4118 = vmul.f32 %v4109, 0.25
      %v4119 = vmul.f32 %v4114, 0.25
      %v4120 = vadd.f32 %v4117, %v1289
      %v4121 = vadd.f32 %v4118, %v1290
      %v4122 = vadd.f32 %v4119, %v1291
      %v4123 = vsel %vm1588, %v4120, -inf
      %4124 = vmax.xlane.f32.xlu0 %v4123
      %v4125 = vpop.xlane.xlu0 %4124
      %v4126 = vsel %vm1588, %v4121, -inf
      %4127 = vmax.xlane.f32.xlu0 %v4126
      %v4128 = vpop.xlane.xlu0 %4127
      %v4129 = vsel %vm1588, %v4122, -inf
      %4130 = vmax.xlane.f32.xlu0 %v4129
      %v4131 = vpop.xlane.xlu0 %4130
      %v4132 = vsub.f32 %v4120, %v4125
      %v4133 = vsub.f32 %v4121, %v4128
      %v4134 = vsub.f32 %v4122, %v4131
      %v4135 = vmul.f32 %v4132, 1.442695
      %v4136 = vpow.pop %v4135
      %v4137 = vmul.f32 %v4133, 1.442695
      %v4138 = vpow.pop %v4137
      %v4139 = vmul.f32 %v4134, 1.442695
      %v4140 = vpow.pop %v4139
      %v4141 = vsel %vm1588, %v4136, 0.0
      %4142 = vadd.xlane.f32.xlu0 %v4141
      %v4143 = vpop.xlane.xlu0 %4142
      %v4144 = vsel %vm1588, %v4138, 0.0
      %4145 = vadd.xlane.f32.xlu0 %v4144
      %v4146 = vpop.xlane.xlu0 %4145
      %v4147 = vsel %vm1588, %v4140, 0.0
      %4148 = vadd.xlane.f32.xlu0 %v4147
      %v4149 = vpop.xlane.xlu0 %4148
      %v4150 = vrcp.pop %v4143
      %v4151 = vrcp.pop %v4146
      %v4152 = vrcp.pop %v4149
      %v4153 = vmul.f32 %v4136, %v4150
      %v4154 = vmul.f32 %v4138, %v4151
      %v4155 = vmul.f32 %v4140, %v4152
      %4156 = vrot.lane.b32.xlu0 %v3339, 96
      %v4157 = vpop.permute.xlu0 %4156
      %4158 = vrot.lane.b32.xlu0 %v3345, 96
      %v4159 = vpop.permute.xlu0 %4158
      %4160 = vrot.lane.b32.xlu0 %v3351, 96
      %v4161 = vpop.permute.xlu0 %4160
      %v4166 = vsel %vm1588, %v4153, 0
      %v4169 = vsel %vm1588, %v4154, 0
      %v4172 = vsel %vm1588, %v4155, 0
      %4174 = vmatprep.subr.mxu0 0.0
      %4175 = vmatpush1.msra.mxu0 0.0
      %4176 = vmatprep.subr.mxu0 0.0
      %4177 = vmatpush1.msra.mxu0 0.0
      %4178 = vmatprep.subr.mxu0 0.0
      %4179 = vmatpush1.msra.mxu0 0.0
      %4180 = vmatprep.subr.mxu0 0.0
      %4181 = vmatpush1.msra.mxu0 0.0
      %4182 = vmatprep.subr.mxu0 0.0
      %4183 = vmatpush1.msra.mxu0 0.0
      %4184 = vmatprep.subr.mxu0 0.0
      %4185 = vmatpush1.msra.mxu0 0.0
      %4186 = vmatprep.subr.mxu0 0.0
      %4187 = vmatpush1.msra.mxu0 0.0
      %4188 = vmatprep.subr.mxu0 0.0
      %4189 = vmatpush1.msra.mxu0 0.0
      %4190 = vmatprep.subr.mxu0 0.0
      %4191 = vmatpush1.msra.mxu0 0.0
      %4192 = vmatprep.subr.mxu0 0.0
      %4193 = vmatpush1.msra.mxu0 0.0
      %4194 = vmatprep.subr.mxu0 0.0
      %4195 = vmatpush1.msra.mxu0 0.0
      %4196 = vmatprep.subr.mxu0 0.0
      %4197 = vmatpush1.msra.mxu0 0.0
      %4198 = vmatprep.subr.mxu0 0.0
      %4199 = vmatpush1.msra.mxu0 0.0
      %4200 = vmatprep.subr.mxu0 0.0
      %4201 = vmatpush1.msra.mxu0 %v4161
      %4202 = vmatprep.subr.mxu0 0.0
      %4203 = vmatpush1.msra.mxu0 %v4159
      %4204 = vmatprep.subr.mxu0 0.0
      %4205 = vmatpush1.msra.mxu0 %v4157
      %4206 = vmatprep.subr.mxu0 0.0
      %4207 = vmatpush2.msra.mxu0 0.0
      %4208 = vmatprep.subr.mxu0 0.0
      %4209 = vmatpush2.msra.mxu0 0.0
      %4210 = vmatprep.subr.mxu0 0.0
      %4211 = vmatpush2.msra.mxu0 0.0
      %4212 = vmatprep.subr.mxu0 0.0
      %4213 = vmatpush2.msra.mxu0 0.0
      %4214 = vmatprep.subr.mxu0 0.0
      %4215 = vmatpush2.msra.mxu0 0.0
      %4216 = vmatprep.subr.mxu0 0.0
      %4217 = vmatpush2.msra.mxu0 0.0
      %4218 = vmatprep.subr.mxu0 0.0
      %4219 = vmatpush2.msra.mxu0 0.0
      %4220 = vmatprep.subr.mxu0 0.0
      %4221 = vmatpush2.msra.mxu0 0.0
      %4222 = vmatprep.subr.mxu0 0.0
      %4223 = vmatpush2.msra.mxu0 0.0
      %4224 = vmatprep.subr.mxu0 0.0
      %4225 = vmatpush2.msra.mxu0 0.0
      %4226 = vmatprep.subr.mxu0 0.0
      %4227 = vmatpush2.msra.mxu0 0.0
      %4228 = vmatprep.subr.mxu0 0.0
      %4229 = vmatpush2.msra.mxu0 0.0
      %4230 = vmatprep.subr.mxu0 0.0
      %4231 = vmatpush2.msra.mxu0 0.0
      %4232 = vmatprep.subr.mxu0 0.0
      %4233 = vmatpush2.msra.mxu0 0.0
      %4234 = vmatprep.subr.mxu0 0.0
      %4235 = vmatpush2.msra.mxu0 0.0
      %4236 = vmatprep.subr.mxu0 0.0
      %4237 = vmatpush2.msra.mxu0 0.0
      %4238 = vmatprep.mubr.f32.mxu0 0.0
      %4239 = vmatmul.mubr.f32.gmra.mxu0 %v4166
      %v4240 = vpop.f32.mrf.mxu0
      %v4241 = vadd.f32 0.0, %v4240
      %v4242 = vpop.f32.mrf.mxu0
      %4243 = vmatprep.mubr.f32.mxu0 0.0
      %4244 = vmatmul.mubr.f32.gmra.mxu0 %v4169
      %v4245 = vpop.f32.mrf.mxu0
      %v4246 = vadd.f32 0.0, %v4245
      %v4247 = vpop.f32.mrf.mxu0
      %4248 = vmatprep.mubr.f32.mxu0 0.0
      %4249 = vmatmul.mubr.f32.gmra.mxu0 %v4172
      %v4250 = vpop.f32.mrf.mxu0
      %v4251 = vadd.f32 0.0, %v4250
      %v4252 = vpop.f32.mrf.mxu0
      %4253 = vdwg.mxu0
      %v4255 = vsel %vm726, %v4241, 0
      %v4258 = vsel %vm726, %v4246, 0
      %v4261 = vsel %vm726, %v4251, 0
      %4263 = vmatprep.subr.mxu0 0.0
      %4264 = vmatpush1.msra.mxu0 0.0
      %4265 = vmatprep.subr.mxu0 0.0
      %4266 = vmatpush1.msra.mxu0 0.0
      %4267 = vmatprep.subr.mxu0 0.0
      %4268 = vmatpush1.msra.mxu0 0.0
      %4269 = vmatprep.subr.mxu0 0.0
      %4270 = vmatpush1.msra.mxu0 0.0
      %4271 = vmatprep.subr.mxu0 0.0
      %4272 = vmatpush1.msra.mxu0 0.0
      %4273 = vmatprep.subr.mxu0 0.0
      %4274 = vmatpush1.msra.mxu0 0.0
      %4275 = vmatprep.subr.mxu0 0.0
      %4276 = vmatpush1.msra.mxu0 0.0
      %4277 = vmatprep.subr.mxu0 0.0
      %4278 = vmatpush1.msra.mxu0 0.0
      %4279 = vmatprep.subr.mxu0 0.0
      %4280 = vmatpush1.msra.mxu0 0.0
      %4281 = vmatprep.subr.mxu0 0.0
      %4282 = vmatpush1.msra.mxu0 0.0
      %4283 = vmatprep.subr.mxu0 0.0
      %4284 = vmatpush1.msra.mxu0 0.0
      %4285 = vmatprep.subr.mxu0 0.0
      %4286 = vmatpush1.msra.mxu0 0.0
      %4287 = vmatprep.subr.mxu0 0.0
      %4288 = vmatpush1.msra.mxu0 0.0
      %4289 = vmatprep.subr.mxu0 0.0
      %4290 = vmatpush1.msra.mxu0 0.0
      %4291 = vmatprep.subr.mxu0 0.0
      %4292 = vmatpush1.msra.mxu0 %v3359
      %4293 = vmatprep.subr.mxu0 0.0
      %4294 = vmatpush1.msra.mxu0 %v3358
      %4295 = vmatprep.subr.mxu0 0.0
      %4296 = vmatpush2.msra.mxu0 0.0
      %4297 = vmatprep.subr.mxu0 0.0
      %4298 = vmatpush2.msra.mxu0 0.0
      %4299 = vmatprep.subr.mxu0 0.0
      %4300 = vmatpush2.msra.mxu0 0.0
      %4301 = vmatprep.subr.mxu0 0.0
      %4302 = vmatpush2.msra.mxu0 0.0
      %4303 = vmatprep.subr.mxu0 0.0
      %4304 = vmatpush2.msra.mxu0 0.0
      %4305 = vmatprep.subr.mxu0 0.0
      %4306 = vmatpush2.msra.mxu0 0.0
      %4307 = vmatprep.subr.mxu0 0.0
      %4308 = vmatpush2.msra.mxu0 0.0
      %4309 = vmatprep.subr.mxu0 0.0
      %4310 = vmatpush2.msra.mxu0 0.0
      %4311 = vmatprep.subr.mxu0 0.0
      %4312 = vmatpush2.msra.mxu0 0.0
      %4313 = vmatprep.subr.mxu0 0.0
      %4314 = vmatpush2.msra.mxu0 0.0
      %4315 = vmatprep.subr.mxu0 0.0
      %4316 = vmatpush2.msra.mxu0 0.0
      %4317 = vmatprep.subr.mxu0 0.0
      %4318 = vmatpush2.msra.mxu0 0.0
      %4319 = vmatprep.subr.mxu0 0.0
      %4320 = vmatpush2.msra.mxu0 0.0
      %4321 = vmatprep.subr.mxu0 0.0
      %4322 = vmatpush2.msra.mxu0 0.0
      %4323 = vmatprep.subr.mxu0 0.0
      %4324 = vmatpush2.msra.mxu0 0.0
      %4325 = vmatprep.subr.mxu0 0.0
      %4326 = vmatpush2.msra.mxu0 0.0
      %4327 = vmatprep.mubr.f32.mxu0 0.0
      %4328 = vmatmul.mubr.f32.gmra.mxu0 %v4255
      %v4329 = vpop.f32.mrf.mxu0
      %v4330 = vadd.f32 0.0, %v4329
      %v4331 = vpop.f32.mrf.mxu0
      %4332 = vmatprep.mubr.f32.mxu0 0.0
      %4333 = vmatmul.mubr.f32.gmra.mxu0 %v4258
      %v4334 = vpop.f32.mrf.mxu0
      %v4335 = vadd.f32 0.0, %v4334
      %v4336 = vpop.f32.mrf.mxu0
      %4337 = vmatprep.mubr.f32.mxu0 0.0
      %4338 = vmatmul.mubr.f32.gmra.mxu0 %v4261
      %v4339 = vpop.f32.mrf.mxu0
      %v4340 = vadd.f32 0.0, %v4339
      %v4341 = vpop.f32.mrf.mxu0
      %4342 = vdwg.mxu0
      %v4343 = vadd.f32 %v4000, %v4330
      %v4344 = vadd.f32 %v4005, %v4335
      %v4345 = vadd.f32 %v4010, %v4340
      %4346 = vrot.lane.b32.xlu0 %v3337, 80
      %v4347 = vpop.permute.xlu0 %4346
      %4348 = vrot.lane.b32.xlu0 %v3343, 80
      %v4349 = vpop.permute.xlu0 %4348
      %4350 = vrot.lane.b32.xlu0 %v3349, 80
      %v4351 = vpop.permute.xlu0 %4350
      %4352 = vrot.lane.b32.xlu0 %v3337, 16
      %v4353 = vpop.permute.xlu0 %4352
      %4354 = vrot.lane.b32.xlu0 %v3343, 16
      %v4355 = vpop.permute.xlu0 %4354
      %4356 = vrot.lane.b32.xlu0 %v3349, 16
      %v4357 = vpop.permute.xlu0 %4356
      %v4358 = vsel %vm726, %v4347, 0
      %v4360 = vsel %vm726, %v4349, 0
      %v4362 = vsel %vm726, %v4351, 0
      %v4364 = vsel %vm726, %v4353, 0
      %v4366 = vsel %vm726, %v4355, 0
      %v4368 = vsel %vm726, %v4357, 0
      %4370 = vmatprep.subr.mxu0 0.0
      %4371 = vmatpush1.xpose.msra.mxu0 0.0
      %4372 = vmatprep.subr.mxu0 0.0
      %4373 = vmatpush1.xpose.msra.mxu0 0.0
      %4374 = vmatprep.subr.mxu0 0.0
      %4375 = vmatpush1.xpose.msra.mxu0 0.0
      %4376 = vmatprep.subr.mxu0 0.0
      %4377 = vmatpush1.xpose.msra.mxu0 0.0
      %4378 = vmatprep.subr.mxu0 0.0
      %4379 = vmatpush1.xpose.msra.mxu0 0.0
      %4380 = vmatprep.subr.mxu0 0.0
      %4381 = vmatpush1.xpose.msra.mxu0 0.0
      %4382 = vmatprep.subr.mxu0 0.0
      %4383 = vmatpush1.xpose.msra.mxu0 0.0
      %4384 = vmatprep.subr.mxu0 0.0
      %4385 = vmatpush1.xpose.msra.mxu0 0.0
      %4386 = vmatprep.subr.mxu0 0.0
      %4387 = vmatpush1.xpose.msra.mxu0 0.0
      %4388 = vmatprep.subr.mxu0 0.0
      %4389 = vmatpush1.xpose.msra.mxu0 0.0
      %4390 = vmatprep.subr.mxu0 0.0
      %4391 = vmatpush1.xpose.msra.mxu0 0.0
      %4392 = vmatprep.subr.mxu0 0.0
      %4393 = vmatpush1.xpose.msra.mxu0 0.0
      %4394 = vmatprep.subr.mxu0 0.0
      %4395 = vmatpush1.xpose.msra.mxu0 0.0
      %4396 = vmatprep.subr.mxu0 0.0
      %4397 = vmatpush1.xpose.msra.mxu0 %v4368
      %4398 = vmatprep.subr.mxu0 0.0
      %4399 = vmatpush1.xpose.msra.mxu0 %v4366
      %4400 = vmatprep.subr.mxu0 0.0
      %4401 = vmatpush1.xpose.msra.mxu0 %v4364
      %4402 = vmatprep.subr.mxu0 0.0
      %4403 = vmatpush2.xpose.msra.mxu0 0.0
      %4404 = vmatprep.subr.mxu0 0.0
      %4405 = vmatpush2.xpose.msra.mxu0 0.0
      %4406 = vmatprep.subr.mxu0 0.0
      %4407 = vmatpush2.xpose.msra.mxu0 0.0
      %4408 = vmatprep.subr.mxu0 0.0
      %4409 = vmatpush2.xpose.msra.mxu0 0.0
      %4410 = vmatprep.subr.mxu0 0.0
      %4411 = vmatpush2.xpose.msra.mxu0 0.0
      %4412 = vmatprep.subr.mxu0 0.0
      %4413 = vmatpush2.xpose.msra.mxu0 0.0
      %4414 = vmatprep.subr.mxu0 0.0
      %4415 = vmatpush2.xpose.msra.mxu0 0.0
      %4416 = vmatprep.subr.mxu0 0.0
      %4417 = vmatpush2.xpose.msra.mxu0 0.0
      %4418 = vmatprep.subr.mxu0 0.0
      %4419 = vmatpush2.xpose.msra.mxu0 0.0
      %4420 = vmatprep.subr.mxu0 0.0
      %4421 = vmatpush2.xpose.msra.mxu0 0.0
      %4422 = vmatprep.subr.mxu0 0.0
      %4423 = vmatpush2.xpose.msra.mxu0 0.0
      %4424 = vmatprep.subr.mxu0 0.0
      %4425 = vmatpush2.xpose.msra.mxu0 0.0
      %4426 = vmatprep.subr.mxu0 0.0
      %4427 = vmatpush2.xpose.msra.mxu0 0.0
      %4428 = vmatprep.subr.mxu0 0.0
      %4429 = vmatpush2.xpose.msra.mxu0 0.0
      %4430 = vmatprep.subr.mxu0 0.0
      %4431 = vmatpush2.xpose.msra.mxu0 0.0
      %4432 = vmatprep.subr.mxu0 0.0
      %4433 = vmatpush2.xpose.msra.mxu0 0.0
      %4434 = vmatprep.mubr.f32.mxu0 0.0
      %4435 = vmatmul.mubr.f32.gmra.mxu0 %v4358
      %v4436 = vpop.f32.mrf.mxu0
      %v4437 = vadd.f32 0.0, %v4436
      %v4438 = vpop.f32.mrf.mxu0
      %4439 = vmatprep.mubr.f32.mxu0 0.0
      %4440 = vmatmul.mubr.f32.gmra.mxu0 %v4360
      %v4441 = vpop.f32.mrf.mxu0
      %v4442 = vadd.f32 0.0, %v4441
      %v4443 = vpop.f32.mrf.mxu0
      %4444 = vmatprep.mubr.f32.mxu0 0.0
      %4445 = vmatmul.mubr.f32.gmra.mxu0 %v4362
      %v4446 = vpop.f32.mrf.mxu0
      %v4447 = vadd.f32 0.0, %v4446
      %v4448 = vpop.f32.mrf.mxu0
      %4449 = vdwg.mxu0
      %v4450 = vmul.f32 %v4437, 0.25
      %v4451 = vmul.f32 %v4442, 0.25
      %v4452 = vmul.f32 %v4447, 0.25
      %v4453 = vadd.f32 %v4450, %v1289
      %v4454 = vadd.f32 %v4451, %v1290
      %v4455 = vadd.f32 %v4452, %v1291
      %v4456 = vsel %vm1588, %v4453, -inf
      %4457 = vmax.xlane.f32.xlu0 %v4456
      %v4458 = vpop.xlane.xlu0 %4457
      %v4459 = vsel %vm1588, %v4454, -inf
      %4460 = vmax.xlane.f32.xlu0 %v4459
      %v4461 = vpop.xlane.xlu0 %4460
      %v4462 = vsel %vm1588, %v4455, -inf
      %4463 = vmax.xlane.f32.xlu0 %v4462
      %v4464 = vpop.xlane.xlu0 %4463
      %v4465 = vsub.f32 %v4453, %v4458
      %v4466 = vsub.f32 %v4454, %v4461
      %v4467 = vsub.f32 %v4455, %v4464
      %v4468 = vmul.f32 %v4465, 1.442695
      %v4469 = vpow.pop %v4468
      %v4470 = vmul.f32 %v4466, 1.442695
      %v4471 = vpow.pop %v4470
      %v4472 = vmul.f32 %v4467, 1.442695
      %v4473 = vpow.pop %v4472
      %v4474 = vsel %vm1588, %v4469, 0.0
      %4475 = vadd.xlane.f32.xlu0 %v4474
      %v4476 = vpop.xlane.xlu0 %4475
      %v4477 = vsel %vm1588, %v4471, 0.0
      %4478 = vadd.xlane.f32.xlu0 %v4477
      %v4479 = vpop.xlane.xlu0 %4478
      %v4480 = vsel %vm1588, %v4473, 0.0
      %4481 = vadd.xlane.f32.xlu0 %v4480
      %v4482 = vpop.xlane.xlu0 %4481
      %v4483 = vrcp.pop %v4476
      %v4484 = vrcp.pop %v4479
      %v4485 = vrcp.pop %v4482
      %v4486 = vmul.f32 %v4469, %v4483
      %v4487 = vmul.f32 %v4471, %v4484
      %v4488 = vmul.f32 %v4473, %v4485
      %4489 = vrot.lane.b32.xlu0 %v3339, 80
      %v4490 = vpop.permute.xlu0 %4489
      %4491 = vrot.lane.b32.xlu0 %v3345, 80
      %v4492 = vpop.permute.xlu0 %4491
      %4493 = vrot.lane.b32.xlu0 %v3351, 80
      %v4494 = vpop.permute.xlu0 %4493
      %v4499 = vsel %vm1588, %v4486, 0
      %v4502 = vsel %vm1588, %v4487, 0
      %v4505 = vsel %vm1588, %v4488, 0
      %4507 = vmatprep.subr.mxu0 0.0
      %4508 = vmatpush1.msra.mxu0 0.0
      %4509 = vmatprep.subr.mxu0 0.0
      %4510 = vmatpush1.msra.mxu0 0.0
      %4511 = vmatprep.subr.mxu0 0.0
      %4512 = vmatpush1.msra.mxu0 0.0
      %4513 = vmatprep.subr.mxu0 0.0
      %4514 = vmatpush1.msra.mxu0 0.0
      %4515 = vmatprep.subr.mxu0 0.0
      %4516 = vmatpush1.msra.mxu0 0.0
      %4517 = vmatprep.subr.mxu0 0.0
      %4518 = vmatpush1.msra.mxu0 0.0
      %4519 = vmatprep.subr.mxu0 0.0
      %4520 = vmatpush1.msra.mxu0 0.0
      %4521 = vmatprep.subr.mxu0 0.0
      %4522 = vmatpush1.msra.mxu0 0.0
      %4523 = vmatprep.subr.mxu0 0.0
      %4524 = vmatpush1.msra.mxu0 0.0
      %4525 = vmatprep.subr.mxu0 0.0
      %4526 = vmatpush1.msra.mxu0 0.0
      %4527 = vmatprep.subr.mxu0 0.0
      %4528 = vmatpush1.msra.mxu0 0.0
      %4529 = vmatprep.subr.mxu0 0.0
      %4530 = vmatpush1.msra.mxu0 0.0
      %4531 = vmatprep.subr.mxu0 0.0
      %4532 = vmatpush1.msra.mxu0 0.0
      %4533 = vmatprep.subr.mxu0 0.0
      %4534 = vmatpush1.msra.mxu0 %v4494
      %4535 = vmatprep.subr.mxu0 0.0
      %4536 = vmatpush1.msra.mxu0 %v4492
      %4537 = vmatprep.subr.mxu0 0.0
      %4538 = vmatpush1.msra.mxu0 %v4490
      %4539 = vmatprep.subr.mxu0 0.0
      %4540 = vmatpush2.msra.mxu0 0.0
      %4541 = vmatprep.subr.mxu0 0.0
      %4542 = vmatpush2.msra.mxu0 0.0
      %4543 = vmatprep.subr.mxu0 0.0
      %4544 = vmatpush2.msra.mxu0 0.0
      %4545 = vmatprep.subr.mxu0 0.0
      %4546 = vmatpush2.msra.mxu0 0.0
      %4547 = vmatprep.subr.mxu0 0.0
      %4548 = vmatpush2.msra.mxu0 0.0
      %4549 = vmatprep.subr.mxu0 0.0
      %4550 = vmatpush2.msra.mxu0 0.0
      %4551 = vmatprep.subr.mxu0 0.0
      %4552 = vmatpush2.msra.mxu0 0.0
      %4553 = vmatprep.subr.mxu0 0.0
      %4554 = vmatpush2.msra.mxu0 0.0
      %4555 = vmatprep.subr.mxu0 0.0
      %4556 = vmatpush2.msra.mxu0 0.0
      %4557 = vmatprep.subr.mxu0 0.0
      %4558 = vmatpush2.msra.mxu0 0.0
      %4559 = vmatprep.subr.mxu0 0.0
      %4560 = vmatpush2.msra.mxu0 0.0
      %4561 = vmatprep.subr.mxu0 0.0
      %4562 = vmatpush2.msra.mxu0 0.0
      %4563 = vmatprep.subr.mxu0 0.0
      %4564 = vmatpush2.msra.mxu0 0.0
      %4565 = vmatprep.subr.mxu0 0.0
      %4566 = vmatpush2.msra.mxu0 0.0
      %4567 = vmatprep.subr.mxu0 0.0
      %4568 = vmatpush2.msra.mxu0 0.0
      %4569 = vmatprep.subr.mxu0 0.0
      %4570 = vmatpush2.msra.mxu0 0.0
      %4571 = vmatprep.mubr.f32.mxu0 0.0
      %4572 = vmatmul.mubr.f32.gmra.mxu0 %v4499
      %v4573 = vpop.f32.mrf.mxu0
      %v4574 = vadd.f32 0.0, %v4573
      %v4575 = vpop.f32.mrf.mxu0
      %4576 = vmatprep.mubr.f32.mxu0 0.0
      %4577 = vmatmul.mubr.f32.gmra.mxu0 %v4502
      %v4578 = vpop.f32.mrf.mxu0
      %v4579 = vadd.f32 0.0, %v4578
      %v4580 = vpop.f32.mrf.mxu0
      %4581 = vmatprep.mubr.f32.mxu0 0.0
      %4582 = vmatmul.mubr.f32.gmra.mxu0 %v4505
      %v4583 = vpop.f32.mrf.mxu0
      %v4584 = vadd.f32 0.0, %v4583
      %v4585 = vpop.f32.mrf.mxu0
      %4586 = vdwg.mxu0
      %v4588 = vsel %vm726, %v4574, 0
      %v4591 = vsel %vm726, %v4579, 0
      %v4594 = vsel %vm726, %v4584, 0
      %4596 = vmatprep.subr.mxu0 0.0
      %4597 = vmatpush1.msra.mxu0 0.0
      %4598 = vmatprep.subr.mxu0 0.0
      %4599 = vmatpush1.msra.mxu0 0.0
      %4600 = vmatprep.subr.mxu0 0.0
      %4601 = vmatpush1.msra.mxu0 0.0
      %4602 = vmatprep.subr.mxu0 0.0
      %4603 = vmatpush1.msra.mxu0 0.0
      %4604 = vmatprep.subr.mxu0 0.0
      %4605 = vmatpush1.msra.mxu0 0.0
      %4606 = vmatprep.subr.mxu0 0.0
      %4607 = vmatpush1.msra.mxu0 0.0
      %4608 = vmatprep.subr.mxu0 0.0
      %4609 = vmatpush1.msra.mxu0 0.0
      %4610 = vmatprep.subr.mxu0 0.0
      %4611 = vmatpush1.msra.mxu0 0.0
      %4612 = vmatprep.subr.mxu0 0.0
      %4613 = vmatpush1.msra.mxu0 0.0
      %4614 = vmatprep.subr.mxu0 0.0
      %4615 = vmatpush1.msra.mxu0 0.0
      %4616 = vmatprep.subr.mxu0 0.0
      %4617 = vmatpush1.msra.mxu0 0.0
      %4618 = vmatprep.subr.mxu0 0.0
      %4619 = vmatpush1.msra.mxu0 0.0
      %4620 = vmatprep.subr.mxu0 0.0
      %4621 = vmatpush1.msra.mxu0 0.0
      %4622 = vmatprep.subr.mxu0 0.0
      %4623 = vmatpush1.msra.mxu0 0.0
      %4624 = vmatprep.subr.mxu0 0.0
      %4625 = vmatpush1.msra.mxu0 %v3361
      %4626 = vmatprep.subr.mxu0 0.0
      %4627 = vmatpush1.msra.mxu0 %v3360
      %4628 = vmatprep.subr.mxu0 0.0
      %4629 = vmatpush2.msra.mxu0 0.0
      %4630 = vmatprep.subr.mxu0 0.0
      %4631 = vmatpush2.msra.mxu0 0.0
      %4632 = vmatprep.subr.mxu0 0.0
      %4633 = vmatpush2.msra.mxu0 0.0
      %4634 = vmatprep.subr.mxu0 0.0
      %4635 = vmatpush2.msra.mxu0 0.0
      %4636 = vmatprep.subr.mxu0 0.0
      %4637 = vmatpush2.msra.mxu0 0.0
      %4638 = vmatprep.subr.mxu0 0.0
      %4639 = vmatpush2.msra.mxu0 0.0
      %4640 = vmatprep.subr.mxu0 0.0
      %4641 = vmatpush2.msra.mxu0 0.0
      %4642 = vmatprep.subr.mxu0 0.0
      %4643 = vmatpush2.msra.mxu0 0.0
      %4644 = vmatprep.subr.mxu0 0.0
      %4645 = vmatpush2.msra.mxu0 0.0
      %4646 = vmatprep.subr.mxu0 0.0
      %4647 = vmatpush2.msra.mxu0 0.0
      %4648 = vmatprep.subr.mxu0 0.0
      %4649 = vmatpush2.msra.mxu0 0.0
      %4650 = vmatprep.subr.mxu0 0.0
      %4651 = vmatpush2.msra.mxu0 0.0
      %4652 = vmatprep.subr.mxu0 0.0
      %4653 = vmatpush2.msra.mxu0 0.0
      %4654 = vmatprep.subr.mxu0 0.0
      %4655 = vmatpush2.msra.mxu0 0.0
      %4656 = vmatprep.subr.mxu0 0.0
      %4657 = vmatpush2.msra.mxu0 0.0
      %4658 = vmatprep.subr.mxu0 0.0
      %4659 = vmatpush2.msra.mxu0 0.0
      %4660 = vmatprep.mubr.f32.mxu0 0.0
      %4661 = vmatmul.mubr.f32.gmra.mxu0 %v4588
      %v4662 = vpop.f32.mrf.mxu0
      %v4663 = vadd.f32 0.0, %v4662
      %v4664 = vpop.f32.mrf.mxu0
      %4665 = vmatprep.mubr.f32.mxu0 0.0
      %4666 = vmatmul.mubr.f32.gmra.mxu0 %v4591
      %v4667 = vpop.f32.mrf.mxu0
      %v4668 = vadd.f32 0.0, %v4667
      %v4669 = vpop.f32.mrf.mxu0
      %4670 = vmatprep.mubr.f32.mxu0 0.0
      %4671 = vmatmul.mubr.f32.gmra.mxu0 %v4594
      %v4672 = vpop.f32.mrf.mxu0
      %v4673 = vadd.f32 0.0, %v4672
      %v4674 = vpop.f32.mrf.mxu0
      %4675 = vdwg.mxu0
      %v4676 = vadd.f32 %v4343, %v4663
      %v4677 = vadd.f32 %v4344, %v4668
      %v4678 = vadd.f32 %v4345, %v4673
      %v4679 = vadd.f32 %v3167, %v4676
      %v4680 = vadd.f32 %v3168, %v4677
      %v4681 = vadd.f32 %v3169, %v4678
      %s4682 = scalar_lea.vmem %s9, 1
      %v4683 = vld [vmem:[%s4682] sm:$0x1]
      %v4685 = vlaneseq
      %v4686 = vshrl.u32 %v4685, 7
      %v4687 = vsub.s32 0, %v4686
      %v4688 = vrot.slane %v4683, %v4687
      %v4690 = vadd.f32 %v4679, %v4688
      %v4691 = vadd.f32 %v4680, %v4688
      %v4692 = vadd.f32 %v4681, %v4688
      %s4693 = scalar_lea.vmem %s10, 1
      %v4694 = vld [vmem:[%s4693] sm:$0x1]
      %s4695 = scalar_lea.vmem %s11, 1
      %v4696 = vld [vmem:[%s4695] sm:$0x1]
      %v4697 = vsel %vm1294, %v4690, 0.0
      %4698 = vadd.xlane.f32.xlu0 %v4697
      %v4699 = vpop.xlane.xlu0 %4698
      %v4700 = vsel %vm1294, %v4691, 0.0
      %4701 = vadd.xlane.f32.xlu0 %v4700
      %v4702 = vpop.xlane.xlu0 %4701
      %v4703 = vsel %vm1294, %v4692, 0.0
      %4704 = vadd.xlane.f32.xlu0 %v4703
      %v4705 = vpop.xlane.xlu0 %4704
      %v4706 = vmul.f32 %v4699, %v1304
      %v4707 = vmul.f32 %v4702, %v1304
      %v4708 = vmul.f32 %v4705, %v1304
      %v4709 = vsub.f32 %v4690, %v4706
      %v4710 = vsub.f32 %v4691, %v4707
      %v4711 = vsub.f32 %v4692, %v4708
      %v4712 = vmul.f32 %v4709, %v4709
      %v4713 = vmul.f32 %v4710, %v4710
      %v4714 = vmul.f32 %v4711, %v4711
      %v4715 = vsel %vm1294, %v4712, 0.0
      %4716 = vadd.xlane.f32.xlu0 %v4715
      %v4717 = vpop.xlane.xlu0 %4716
      %v4718 = vsel %vm1294, %v4713, 0.0
      %4719 = vadd.xlane.f32.xlu0 %v4718
      %v4720 = vpop.xlane.xlu0 %4719
      %v4721 = vsel %vm1294, %v4714, 0.0
      %4722 = vadd.xlane.f32.xlu0 %v4721
      %v4723 = vpop.xlane.xlu0 %4722
      %v4724 = vmul.f32 %v4717, %v1304
      %v4725 = vmul.f32 %v4720, %v1304
      %v4726 = vmul.f32 %v4723, %v1304
      %v4727 = vadd.f32 %v4724, 1e-05
      %v4728 = vadd.f32 %v4725, 1e-05
      %v4729 = vadd.f32 %v4726, 1e-05
      %v4730 = vrsqrt.pop %v4727
      %v4731 = vrsqrt.pop %v4728
      %v4732 = vrsqrt.pop %v4729
      %v4733 = vmul.f32 %v4709, %v4730
      %v4734 = vmul.f32 %v4710, %v4731
      %v4735 = vmul.f32 %v4711, %v4732
      %v4737 = vlaneseq
      %v4738 = vshrl.u32 %v4737, 7
      %v4739 = vsub.s32 0, %v4738
      %v4740 = vrot.slane %v4694, %v4739
      %v4742 = vmul.f32 %v4733, %v4740
      %v4743 = vmul.f32 %v4734, %v4740
      %v4744 = vmul.f32 %v4735, %v4740
      %v4746 = vlaneseq
      %v4747 = vshrl.u32 %v4746, 7
      %v4748 = vsub.s32 0, %v4747
      %v4749 = vrot.slane %v4696, %v4748
      %v4751 = vadd.f32 %v4742, %v4749
      %v4752 = vadd.f32 %v4743, %v4749
      %v4753 = vadd.f32 %v4744, %v4749
      %s4754 = scalar_lea.vmem %s12, 128
      %v4755 = vld [vmem:[%s4754] sm:$0xff]
      %v4756 = vld [vmem:[%s4754 + $0x8] sm:$0xff]
      %v4757 = vld [vmem:[%s4754 + $0x10] sm:$0xff]
      %v4758 = vld [vmem:[%s4754 + $0x18] sm:$0xff]
      %v4759 = vld [vmem:[%s4754 + $0x20] sm:$0xff]
      %v4760 = vld [vmem:[%s4754 + $0x28] sm:$0xff]
      %v4761 = vld [vmem:[%s4754 + $0x30] sm:$0xff]
      %v4762 = vld [vmem:[%s4754 + $0x38] sm:$0xff]
      %v4763 = vld [vmem:[%s4754 + $0x40] sm:$0xff]
      %v4764 = vld [vmem:[%s4754 + $0x48] sm:$0xff]
      %v4765 = vld [vmem:[%s4754 + $0x50] sm:$0xff]
      %v4766 = vld [vmem:[%s4754 + $0x58] sm:$0xff]
      %v4767 = vld [vmem:[%s4754 + $0x60] sm:$0xff]
      %v4768 = vld [vmem:[%s4754 + $0x68] sm:$0xff]
      %v4769 = vld [vmem:[%s4754 + $0x70] sm:$0xff]
      %v4770 = vld [vmem:[%s4754 + $0x78] sm:$0xff]
      %s4771 = scalar_lea.vmem %s13, 2
      %v4772 = vld [vmem:[%s4771] sm:$0x3]
      %v4774 = vlaneseq
      %v4775 = vshrl.u32 %v4774, 7
      %v4776 = vsub.s32 0, %v4775
      %v4777 = vrot.slane %v4772, %v4776
      %v4778 = vlaneseq
      %v4779 = vshrl.u32 %v4778, 7
      %v4780 = vsub.s32 1, %v4779
      %v4781 = vrot.slane %v4772, %v4780
      %v4785 = vsel %vm1294, %v4751, 0
      %v4788 = vsel %vm1294, %v4752, 0
      %v4791 = vsel %vm1294, %v4753, 0
      %4793 = vmatprep.subr.mxu0 0.0
      %4794 = vmatpush1.msra.mxu0 0.0
      %4795 = vmatprep.subr.mxu0 0.0
      %4796 = vmatpush1.msra.mxu0 0.0
      %4797 = vmatprep.subr.mxu0 0.0
      %4798 = vmatpush1.msra.mxu0 0.0
      %4799 = vmatprep.subr.mxu0 0.0
      %4800 = vmatpush1.msra.mxu0 0.0
      %4801 = vmatprep.subr.mxu0 0.0
      %4802 = vmatpush1.msra.mxu0 0.0
      %4803 = vmatprep.subr.mxu0 0.0
      %4804 = vmatpush1.msra.mxu0 0.0
      %4805 = vmatprep.subr.mxu0 0.0
      %4806 = vmatpush1.msra.mxu0 0.0
      %4807 = vmatprep.subr.mxu0 0.0
      %4808 = vmatpush1.msra.mxu0 0.0
      %4809 = vmatprep.subr.mxu0 %v4770
      %4810 = vmatpush1.msra.mxu0 %v4769
      %4811 = vmatprep.subr.mxu0 %v4768
      %4812 = vmatpush1.msra.mxu0 %v4767
      %4813 = vmatprep.subr.mxu0 %v4766
      %4814 = vmatpush1.msra.mxu0 %v4765
      %4815 = vmatprep.subr.mxu0 %v4764
      %4816 = vmatpush1.msra.mxu0 %v4763
      %4817 = vmatprep.subr.mxu0 %v4762
      %4818 = vmatpush1.msra.mxu0 %v4761
      %4819 = vmatprep.subr.mxu0 %v4760
      %4820 = vmatpush1.msra.mxu0 %v4759
      %4821 = vmatprep.subr.mxu0 %v4758
      %4822 = vmatpush1.msra.mxu0 %v4757
      %4823 = vmatprep.subr.mxu0 %v4756
      %4824 = vmatpush1.msra.mxu0 %v4755
      %4825 = vmatprep.subr.mxu0 0.0
      %4826 = vmatpush2.msra.mxu0 0.0
      %4827 = vmatprep.subr.mxu0 0.0
      %4828 = vmatpush2.msra.mxu0 0.0
      %4829 = vmatprep.subr.mxu0 0.0
      %4830 = vmatpush2.msra.mxu0 0.0
      %4831 = vmatprep.subr.mxu0 0.0
      %4832 = vmatpush2.msra.mxu0 0.0
      %4833 = vmatprep.subr.mxu0 0.0
      %4834 = vmatpush2.msra.mxu0 0.0
      %4835 = vmatprep.subr.mxu0 0.0
      %4836 = vmatpush2.msra.mxu0 0.0
      %4837 = vmatprep.subr.mxu0 0.0
      %4838 = vmatpush2.msra.mxu0 0.0
      %4839 = vmatprep.subr.mxu0 0.0
      %4840 = vmatpush2.msra.mxu0 0.0
      %4841 = vmatprep.subr.mxu0 0.0
      %4842 = vmatpush2.msra.mxu0 0.0
      %4843 = vmatprep.subr.mxu0 0.0
      %4844 = vmatpush2.msra.mxu0 0.0
      %4845 = vmatprep.subr.mxu0 0.0
      %4846 = vmatpush2.msra.mxu0 0.0
      %4847 = vmatprep.subr.mxu0 0.0
      %4848 = vmatpush2.msra.mxu0 0.0
      %4849 = vmatprep.subr.mxu0 0.0
      %4850 = vmatpush2.msra.mxu0 0.0
      %4851 = vmatprep.subr.mxu0 0.0
      %4852 = vmatpush2.msra.mxu0 0.0
      %4853 = vmatprep.subr.mxu0 0.0
      %4854 = vmatpush2.msra.mxu0 0.0
      %4855 = vmatprep.subr.mxu0 0.0
      %4856 = vmatpush2.msra.mxu0 0.0
      %4857 = vmatprep.mubr.f32.mxu0 0.0
      %4858 = vmatmul.mubr.f32.gmra.mxu0 %v4785
      %v4859 = vpop.f32.mrf.mxu0
      %v4860 = vadd.f32 %v4777, %v4859
      %v4861 = vpop.f32.mrf.mxu0
      %v4862 = vadd.f32 %v4781, %v4861
      %4863 = vmatprep.mubr.f32.mxu0 0.0
      %4864 = vmatmul.mubr.f32.gmra.mxu0 %v4788
      %v4865 = vpop.f32.mrf.mxu0
      %v4866 = vadd.f32 %v4777, %v4865
      %v4867 = vpop.f32.mrf.mxu0
      %v4868 = vadd.f32 %v4781, %v4867
      %4869 = vmatprep.mubr.f32.mxu0 0.0
      %4870 = vmatmul.mubr.f32.gmra.mxu0 %v4791
      %v4871 = vpop.f32.mrf.mxu0
      %v4872 = vadd.f32 %v4777, %v4871
      %v4873 = vpop.f32.mrf.mxu0
      %v4874 = vadd.f32 %v4781, %v4873
      %4875 = vdwg.mxu0
      %v4876 = vmul.f32 %v4860, %v4860
      %v4877 = vmul.f32 %v4862, %v4862
      %v4878 = vmul.f32 %v4866, %v4866
      %v4879 = vmul.f32 %v4868, %v4868
      %v4880 = vmul.f32 %v4872, %v4872
      %v4881 = vmul.f32 %v4874, %v4874
      %v4882 = vmul.f32 %v4860, %v4876
      %v4883 = vmul.f32 %v4862, %v4877
      %v4884 = vmul.f32 %v4866, %v4878
      %v4885 = vmul.f32 %v4868, %v4879
      %v4886 = vmul.f32 %v4872, %v4880
      %v4887 = vmul.f32 %v4874, %v4881
      %v4888 = vmul.f32 %v4882, 0.044715
      %v4889 = vmul.f32 %v4883, 0.044715
      %v4890 = vmul.f32 %v4884, 0.044715
      %v4891 = vmul.f32 %v4885, 0.044715
      %v4892 = vmul.f32 %v4886, 0.044715
      %v4893 = vmul.f32 %v4887, 0.044715
      %v4894 = vadd.f32 %v4860, %v4888
      %v4895 = vadd.f32 %v4862, %v4889
      %v4896 = vadd.f32 %v4866, %v4890
      %v4897 = vadd.f32 %v4868, %v4891
      %v4898 = vadd.f32 %v4872, %v4892
      %v4899 = vadd.f32 %v4874, %v4893
      %v4900 = vmul.f32 %v4894, 0.7978846
      %v4901 = vmul.f32 %v4895, 0.7978846
      %v4902 = vmul.f32 %v4896, 0.7978846
      %v4903 = vmul.f32 %v4897, 0.7978846
      %v4904 = vmul.f32 %v4898, 0.7978846
      %v4905 = vmul.f32 %v4899, 0.7978846
      %v4906 = vtanh.pop %v4900
      %v4907 = vtanh.pop %v4901
      %v4908 = vtanh.pop %v4902
      %v4909 = vtanh.pop %v4903
      %v4910 = vtanh.pop %v4904
      %v4911 = vtanh.pop %v4905
      %v4912 = vadd.f32 %v4906, 1.0
      %v4913 = vadd.f32 %v4907, 1.0
      %v4914 = vadd.f32 %v4908, 1.0
      %v4915 = vadd.f32 %v4909, 1.0
      %v4916 = vadd.f32 %v4910, 1.0
      %v4917 = vadd.f32 %v4911, 1.0
      %v4918 = vmul.f32 %v4912, 0.5
      %v4919 = vmul.f32 %v4913, 0.5
      %v4920 = vmul.f32 %v4914, 0.5
      %v4921 = vmul.f32 %v4915, 0.5
      %v4922 = vmul.f32 %v4916, 0.5
      %v4923 = vmul.f32 %v4917, 0.5
      %v4924 = vmul.f32 %v4860, %v4918
      %v4925 = vmul.f32 %v4862, %v4919
      %v4926 = vmul.f32 %v4866, %v4920
      %v4927 = vmul.f32 %v4868, %v4921
      %v4928 = vmul.f32 %v4872, %v4922
      %v4929 = vmul.f32 %v4874, %v4923
      %s4930 = scalar_lea.vmem %s14, 256
      %v4931 = vld [vmem:[%s4930] sm:$0xff]
      %v4932 = vld [vmem:[%s4930 + $0x8] sm:$0xff]
      %v4933 = vld [vmem:[%s4930 + $0x10] sm:$0xff]
      %v4934 = vld [vmem:[%s4930 + $0x18] sm:$0xff]
      %v4935 = vld [vmem:[%s4930 + $0x20] sm:$0xff]
      %v4936 = vld [vmem:[%s4930 + $0x28] sm:$0xff]
      %v4937 = vld [vmem:[%s4930 + $0x30] sm:$0xff]
      %v4938 = vld [vmem:[%s4930 + $0x38] sm:$0xff]
      %v4939 = vld [vmem:[%s4930 + $0x40] sm:$0xff]
      %v4940 = vld [vmem:[%s4930 + $0x48] sm:$0xff]
      %v4941 = vld [vmem:[%s4930 + $0x50] sm:$0xff]
      %v4942 = vld [vmem:[%s4930 + $0x58] sm:$0xff]
      %v4943 = vld [vmem:[%s4930 + $0x60] sm:$0xff]
      %v4944 = vld [vmem:[%s4930 + $0x68] sm:$0xff]
      %v4945 = vld [vmem:[%s4930 + $0x70] sm:$0xff]
      %v4946 = vld [vmem:[%s4930 + $0x78] sm:$0xff]
      %v4947 = vld [vmem:[%s4930 + $0x80] sm:$0xff]
      %v4948 = vld [vmem:[%s4930 + $0x88] sm:$0xff]
      %v4949 = vld [vmem:[%s4930 + $0x90] sm:$0xff]
      %v4950 = vld [vmem:[%s4930 + $0x98] sm:$0xff]
      %v4951 = vld [vmem:[%s4930 + $0xa0] sm:$0xff]
      %v4952 = vld [vmem:[%s4930 + $0xa8] sm:$0xff]
      %v4953 = vld [vmem:[%s4930 + $0xb0] sm:$0xff]
      %v4954 = vld [vmem:[%s4930 + $0xb8] sm:$0xff]
      %v4955 = vld [vmem:[%s4930 + $0xc0] sm:$0xff]
      %v4956 = vld [vmem:[%s4930 + $0xc8] sm:$0xff]
      %v4957 = vld [vmem:[%s4930 + $0xd0] sm:$0xff]
      %v4958 = vld [vmem:[%s4930 + $0xd8] sm:$0xff]
      %v4959 = vld [vmem:[%s4930 + $0xe0] sm:$0xff]
      %v4960 = vld [vmem:[%s4930 + $0xe8] sm:$0xff]
      %v4961 = vld [vmem:[%s4930 + $0xf0] sm:$0xff]
      %v4962 = vld [vmem:[%s4930 + $0xf8] sm:$0xff]
      %4963 = vmatprep.subr.mxu0 0.0
      %4964 = vmatpush1.msra.mxu0 %v4946
      %4965 = vmatprep.subr.mxu0 0.0
      %4966 = vmatpush1.msra.mxu0 %v4945
      %4967 = vmatprep.subr.mxu0 0.0
      %4968 = vmatpush1.msra.mxu0 %v4944
      %4969 = vmatprep.subr.mxu0 0.0
      %4970 = vmatpush1.msra.mxu0 %v4943
      %4971 = vmatprep.subr.mxu0 0.0
      %4972 = vmatpush1.msra.mxu0 %v4942
      %4973 = vmatprep.subr.mxu0 0.0
      %4974 = vmatpush1.msra.mxu0 %v4941
      %4975 = vmatprep.subr.mxu0 0.0
      %4976 = vmatpush1.msra.mxu0 %v4940
      %4977 = vmatprep.subr.mxu0 0.0
      %4978 = vmatpush1.msra.mxu0 %v4939
      %4979 = vmatprep.subr.mxu0 0.0
      %4980 = vmatpush1.msra.mxu0 %v4938
      %4981 = vmatprep.subr.mxu0 0.0
      %4982 = vmatpush1.msra.mxu0 %v4937
      %4983 = vmatprep.subr.mxu0 0.0
      %4984 = vmatpush1.msra.mxu0 %v4936
      %4985 = vmatprep.subr.mxu0 0.0
      %4986 = vmatpush1.msra.mxu0 %v4935
      %4987 = vmatprep.subr.mxu0 0.0
      %4988 = vmatpush1.msra.mxu0 %v4934
      %4989 = vmatprep.subr.mxu0 0.0
      %4990 = vmatpush1.msra.mxu0 %v4933
      %4991 = vmatprep.subr.mxu0 0.0
      %4992 = vmatpush1.msra.mxu0 %v4932
      %4993 = vmatprep.subr.mxu0 0.0
      %4994 = vmatpush1.msra.mxu0 %v4931
      %4995 = vmatprep.subr.mxu0 0.0
      %4996 = vmatpush2.msra.mxu0 %v4962
      %4997 = vmatprep.subr.mxu0 0.0
      %4998 = vmatpush2.msra.mxu0 %v4961
      %4999 = vmatprep.subr.mxu0 0.0
      %5000 = vmatpush2.msra.mxu0 %v4960
      %5001 = vmatprep.subr.mxu0 0.0
      %5002 = vmatpush2.msra.mxu0 %v4959
      %5003 = vmatprep.subr.mxu0 0.0
      %5004 = vmatpush2.msra.mxu0 %v4958
      %5005 = vmatprep.subr.mxu0 0.0
      %5006 = vmatpush2.msra.mxu0 %v4957
      %5007 = vmatprep.subr.mxu0 0.0
      %5008 = vmatpush2.msra.mxu0 %v4956
      %5009 = vmatprep.subr.mxu0 0.0
      %5010 = vmatpush2.msra.mxu0 %v4955
      %5011 = vmatprep.subr.mxu0 0.0
      %5012 = vmatpush2.msra.mxu0 %v4954
      %5013 = vmatprep.subr.mxu0 0.0
      %5014 = vmatpush2.msra.mxu0 %v4953
      %5015 = vmatprep.subr.mxu0 0.0
      %5016 = vmatpush2.msra.mxu0 %v4952
      %5017 = vmatprep.subr.mxu0 0.0
      %5018 = vmatpush2.msra.mxu0 %v4951
      %5019 = vmatprep.subr.mxu0 0.0
      %5020 = vmatpush2.msra.mxu0 %v4950
      %5021 = vmatprep.subr.mxu0 0.0
      %5022 = vmatpush2.msra.mxu0 %v4949
      %5023 = vmatprep.subr.mxu0 0.0
      %5024 = vmatpush2.msra.mxu0 %v4948
      %5025 = vmatprep.subr.mxu0 0.0
      %5026 = vmatpush2.msra.mxu0 %v4947
      %5027 = vmatprep.mubr.f32.mxu0 %v4925
      %5028 = vmatmul.mubr.f32.gmra.mxu0 %v4924
      %v5029 = vpop.f32.mrf.mxu0
      %v5030 = vadd.f32 0.0, %v5029
      %v5031 = vpop.f32.mrf.mxu0
      %5032 = vmatprep.mubr.f32.mxu0 %v4927
      %5033 = vmatmul.mubr.f32.gmra.mxu0 %v4926
      %v5034 = vpop.f32.mrf.mxu0
      %v5035 = vadd.f32 0.0, %v5034
      %v5036 = vpop.f32.mrf.mxu0
      %5037 = vmatprep.mubr.f32.mxu0 %v4929
      %5038 = vmatmul.mubr.f32.gmra.mxu0 %v4928
      %v5039 = vpop.f32.mrf.mxu0
      %v5040 = vadd.f32 0.0, %v5039
      %v5041 = vpop.f32.mrf.mxu0
      %5042 = vdwg.mxu0
      %v5043 = vadd.f32 %v4690, %v5030
      %v5044 = vadd.f32 %v4691, %v5035
      %v5045 = vadd.f32 %v4692, %v5040
      %s5046 = scalar_lea.vmem %s15, 1
      %v5047 = vld [vmem:[%s5046] sm:$0x1]
      %v5049 = vlaneseq
      %v5050 = vshrl.u32 %v5049, 7
      %v5051 = vsub.s32 0, %v5050
      %v5052 = vrot.slane %v5047, %v5051
      %v5054 = vadd.f32 %v5043, %v5052
      %v5055 = vadd.f32 %v5044, %v5052
      %v5056 = vadd.f32 %v5045, %v5052
      %v5057 = vld [vmem:[%s16] sm:$0x1]
      %v5058 = vld [vmem:[%s17] sm:$0x1]
      %v5059 = vsel %vm1294, %v5054, 0.0
      %5060 = vadd.xlane.f32.xlu0 %v5059
      %v5061 = vpop.xlane.xlu0 %5060
      %v5062 = vsel %vm1294, %v5055, 0.0
      %5063 = vadd.xlane.f32.xlu0 %v5062
      %v5064 = vpop.xlane.xlu0 %5063
      %v5065 = vsel %vm1294, %v5056, 0.0
      %5066 = vadd.xlane.f32.xlu0 %v5065
      %v5067 = vpop.xlane.xlu0 %5066
      %v5068 = vmul.f32 %v5061, %v1304
      %v5069 = vmul.f32 %v5064, %v1304
      %v5070 = vmul.f32 %v5067, %v1304
      %v5071 = vsub.f32 %v5054, %v5068
      %v5072 = vsub.f32 %v5055, %v5069
      %v5073 = vsub.f32 %v5056, %v5070
      %v5074 = vmul.f32 %v5071, %v5071
      %v5075 = vmul.f32 %v5072, %v5072
      %v5076 = vmul.f32 %v5073, %v5073
      %v5077 = vsel %vm1294, %v5074, 0.0
      %5078 = vadd.xlane.f32.xlu0 %v5077
      %v5079 = vpop.xlane.xlu0 %5078
      %v5080 = vsel %vm1294, %v5075, 0.0
      %5081 = vadd.xlane.f32.xlu0 %v5080
      %v5082 = vpop.xlane.xlu0 %5081
      %v5083 = vsel %vm1294, %v5076, 0.0
      %5084 = vadd.xlane.f32.xlu0 %v5083
      %v5085 = vpop.xlane.xlu0 %5084
      %v5086 = vmul.f32 %v5079, %v1304
      %v5087 = vmul.f32 %v5082, %v1304
      %v5088 = vmul.f32 %v5085, %v1304
      %v5089 = vadd.f32 %v5086, 1e-05
      %v5090 = vadd.f32 %v5087, 1e-05
      %v5091 = vadd.f32 %v5088, 1e-05
      %v5092 = vrsqrt.pop %v5089
      %v5093 = vrsqrt.pop %v5090
      %v5094 = vrsqrt.pop %v5091
      %v5095 = vmul.f32 %v5071, %v5092
      %v5096 = vmul.f32 %v5072, %v5093
      %v5097 = vmul.f32 %v5073, %v5094
      %v5099 = vlaneseq
      %v5100 = vshrl.u32 %v5099, 7
      %v5101 = vsub.s32 0, %v5100
      %v5102 = vrot.slane %v5057, %v5101
      %v5104 = vmul.f32 %v5095, %v5102
      %v5105 = vmul.f32 %v5096, %v5102
      %v5106 = vmul.f32 %v5097, %v5102
      %v5108 = vlaneseq
      %v5109 = vshrl.u32 %v5108, 7
      %v5110 = vsub.s32 0, %v5109
      %v5111 = vrot.slane %v5058, %v5110
      %v5113 = vadd.f32 %v5104, %v5111
      %v5114 = vadd.f32 %v5105, %v5111
      %v5115 = vadd.f32 %v5106, %v5111
      %v5116 = vld [vmem:[%s18] sm:$0xff]
      %v5117 = vld [vmem:[%s18 + $0x8] sm:$0xff]
      %v5118 = vld [vmem:[%s18 + $0x10] sm:$0xff]
      %v5119 = vld [vmem:[%s18 + $0x18] sm:$0xff]
      %v5120 = vld [vmem:[%s19] sm:$0x1]
      %v5122 = vlaneseq
      %v5123 = vshrl.u32 %v5122, 7
      %v5124 = vsub.s32 0, %v5123
      %v5125 = vrot.slane %v5120, %v5124
      %vm5127 = vcmask 261120
      %v5129 = vsel %vm5127, %v5113, 0
      %v5132 = vsel %vm5127, %v5114, 0
      %v5135 = vsel %vm5127, %v5115, 0
      %5137 = vmatprep.subr.mxu0 0.0
      %5138 = vmatpush1.msra.mxu0 0.0
      %5139 = vmatprep.subr.mxu0 0.0
      %5140 = vmatpush1.msra.mxu0 0.0
      %5141 = vmatprep.subr.mxu0 0.0
      %5142 = vmatpush1.msra.mxu0 0.0
      %5143 = vmatprep.subr.mxu0 0.0
      %5144 = vmatpush1.msra.mxu0 0.0
      %5145 = vmatprep.subr.mxu0 0.0
      %5146 = vmatpush1.msra.mxu0 0.0
      %5147 = vmatprep.subr.mxu0 0.0
      %5148 = vmatpush1.msra.mxu0 0.0
      %5149 = vmatprep.subr.mxu0 0.0
      %5150 = vmatpush1.msra.mxu0 0.0
      %5151 = vmatprep.subr.mxu0 0.0
      %5152 = vmatpush1.msra.mxu0 0.0
      %5153 = vmatprep.subr.mxu0 0.0
      %5154 = vmatpush1.msra.mxu0 0.0
      %5155 = vmatprep.subr.mxu0 0.0
      %5156 = vmatpush1.msra.mxu0 0.0
      %5157 = vmatprep.subr.mxu0 0.0
      %5158 = vmatpush1.msra.mxu0 0.0
      %5159 = vmatprep.subr.mxu0 0.0
      %5160 = vmatpush1.msra.mxu0 0.0
      %5161 = vmatprep.subr.mxu0 0.0
      %5162 = vmatpush1.msra.mxu0 %v5119
      %5163 = vmatprep.subr.mxu0 0.0
      %5164 = vmatpush1.msra.mxu0 %v5118
      %5165 = vmatprep.subr.mxu0 0.0
      %5166 = vmatpush1.msra.mxu0 %v5117
      %5167 = vmatprep.subr.mxu0 0.0
      %5168 = vmatpush1.msra.mxu0 %v5116
      %5169 = vmatprep.subr.mxu0 0.0
      %5170 = vmatpush2.msra.mxu0 0.0
      %5171 = vmatprep.subr.mxu0 0.0
      %5172 = vmatpush2.msra.mxu0 0.0
      %5173 = vmatprep.subr.mxu0 0.0
      %5174 = vmatpush2.msra.mxu0 0.0
      %5175 = vmatprep.subr.mxu0 0.0
      %5176 = vmatpush2.msra.mxu0 0.0
      %5177 = vmatprep.subr.mxu0 0.0
      %5178 = vmatpush2.msra.mxu0 0.0
      %5179 = vmatprep.subr.mxu0 0.0
      %5180 = vmatpush2.msra.mxu0 0.0
      %5181 = vmatprep.subr.mxu0 0.0
      %5182 = vmatpush2.msra.mxu0 0.0
      %5183 = vmatprep.subr.mxu0 0.0
      %5184 = vmatpush2.msra.mxu0 0.0
      %5185 = vmatprep.subr.mxu0 0.0
      %5186 = vmatpush2.msra.mxu0 0.0
      %5187 = vmatprep.subr.mxu0 0.0
      %5188 = vmatpush2.msra.mxu0 0.0
      %5189 = vmatprep.subr.mxu0 0.0
      %5190 = vmatpush2.msra.mxu0 0.0
      %5191 = vmatprep.subr.mxu0 0.0
      %5192 = vmatpush2.msra.mxu0 0.0
      %5193 = vmatprep.subr.mxu0 0.0
      %5194 = vmatpush2.msra.mxu0 0.0
      %5195 = vmatprep.subr.mxu0 0.0
      %5196 = vmatpush2.msra.mxu0 0.0
      %5197 = vmatprep.subr.mxu0 0.0
      %5198 = vmatpush2.msra.mxu0 0.0
      %5199 = vmatprep.subr.mxu0 0.0
      %5200 = vmatpush2.msra.mxu0 0.0
      %5201 = vmatprep.mubr.f32.mxu0 0.0
      %5202 = vmatmul.mubr.f32.gmra.mxu0 %v5129
      %v5203 = vpop.f32.mrf.mxu0
      %v5204 = vadd.f32 %v5125, %v5203
      %v5205 = vpop.f32.mrf.mxu0
      %5206 = vmatprep.mubr.f32.mxu0 0.0
      %5207 = vmatmul.mubr.f32.gmra.mxu0 %v5132
      %v5208 = vpop.f32.mrf.mxu0
      %v5209 = vadd.f32 %v5125, %v5208
      %v5210 = vpop.f32.mrf.mxu0
      %5211 = vmatprep.mubr.f32.mxu0 0.0
      %5212 = vmatmul.mubr.f32.gmra.mxu0 %v5135
      %v5213 = vpop.f32.mrf.mxu0
      %v5214 = vadd.f32 %v5125, %v5213
      %v5215 = vpop.f32.mrf.mxu0
      %5216 = vdwg.mxu0
      %v5217 = vmul.f32 %v5204, %v705
      %v5218 = vmul.f32 %v5209, %v705
      %v5219 = vmul.f32 %v5214, %v705
      %v5220 = vadd.f32 %v5217, %v683
      %v5221 = vadd.f32 %v5218, %v683
      %v5222 = vadd.f32 %v5219, %v683
      %5223 = vst.msk [vmem:[%s664] sm:$0xff] %vm672, %v5220
      %5224 = vst.msk [vmem:[%s664 + $0x8] sm:$0xff] %vm672, %v5221
      %5225 = vst.msk [vmem:[%s664 + $0x10] sm:$0xff] %vm672, %v5222
      %p5226 = scmp.lt.s32.totalorder %s33, 1
      %s5227 = scalar_select %p5226, %s33, 1
      %s5228 = smul.addr %s5227, 3
      %s5229 = smul.addr %s5228, 8
      %s5230 = scalar_lea.vmem %s20, %s5229
      %p5231 = scmp.lt.s32.totalorder %s33, 1
      %s5232 = scalar_select %p5231, %s33, 1
      %s5233 = smul.addr %s5232, 2
      %s5234 = smul.addr %s5233, 8
      %s5235 = scalar_lea.vmem %s21, %s5234
      // Predicated region
      $region101: #{_lambda_.1} parent=99 // pred_check
        %p5236 = pneg %p476
      $region102: #{_lambda_.1} parent=99 // pred_check_branch
        %5238 = sbr.rel (%p5236) target = $region104
      $region103: #{_lambda_.1} parent=99 // pred_region
        _
      $region104: #{_lambda_.1} parent=99 // pred_fallthru
        _
      // Predicated region
      $region105: #{_lambda_.1} parent=99 // pred_check
        %p5239 = pneg %p502
      $region106: #{_lambda_.1} parent=99 // pred_check_branch
        %5241 = sbr.rel (%p5239) target = $region108
      $region107: #{_lambda_.1} parent=99 // pred_region
        _
      $region108: #{_lambda_.1} parent=99 // pred_fallthru
        _
    $region100: #{_lambda_.1} parent=5 // pred_fallthru
      _
    %p5242 = scmp.le.s32.totalorder 2, %s28
    // Predicated region
    $region109: #{_lambda_.1} parent=5 // pred_check
      %p5243 = pneg %p5242
    $region110: #{_lambda_.1} parent=5 // pred_check_branch
      %5245 = sbr.rel (%p5243) target = $region112
    $region111: #{_lambda_.1} parent=5 // pred_region
      %s5246 = ssub.s32 %s28, 2
      // Predicated region
      $region113: #{_lambda_.1} parent=111 // pred_check
        %p5247 = pneg %p482
      $region114: #{_lambda_.1} parent=111 // pred_check_branch
        %5249 = sbr.rel (%p5247) target = $region116
      $region115: #{_lambda_.1} parent=111 // pred_region
        %p5250 = scmp.lt.s32.totalorder %s34, 1
        %s5251 = scalar_select %p5250, %s34, 1
        %s5252 = smul.addr %s5251, 3
        %s5253 = smul.addr %s5252, 8
        %s5254 = scalar_lea.vmem %s20, %s5253
      $region116: #{_lambda_.1} parent=111 // pred_fallthru
        _
      // Predicated region
      $region117: #{_lambda_.1} parent=111 // pred_check
        %p5255 = pneg %p508
      $region118: #{_lambda_.1} parent=111 // pred_check_branch
        %5257 = sbr.rel (%p5255) target = $region120
      $region119: #{_lambda_.1} parent=111 // pred_region
        %p5258 = scmp.lt.s32.totalorder %s34, 1
        %s5259 = scalar_select %p5258, %s34, 1
        %s5260 = smul.addr %s5259, 2
        %s5261 = smul.addr %s5260, 8
        %s5262 = scalar_lea.vmem %s21, %s5261
      $region120: #{_lambda_.1} parent=111 // pred_fallthru
        _
    $region112: #{_lambda_.1} parent=5 // pred_fallthru
      _
  $region6: #{_lambda_.1} parent=0 // loop_footer
    %s32 = sadd.s32 1, %s28
  $region7: #{_lambda_.1} parent=0 // loop_footer_branch
    %27 = sbr.rel target = $region3
  $region8: #{_lambda_.1} parent=0 // loop_exit
    _

</llo_original>
